<compile_context>
chip_gen: v5e
topology: v5e:2x2
jax: 0.10.0
libtpu: 0.0.40
codegen_flags: <defaults>
</compile_context>

<pallas_src>
import functools

import jax
import jax.numpy as jnp
from jax import lax
from jax.experimental import pallas as pl
from jax.experimental.pallas import tpu as pltpu


def _gates_to_hc(gates, c_prev, H):
    """PyTorch nn.LSTMCell gate order (i, f, g, o).

    Transcendentals are applied to the full 4H-lane (one-vreg) gate slab on the
    EUP (otherwise idle) and the cheap lane slices happen afterwards.
    """
    sg = jax.nn.sigmoid(gates)
    tg = jnp.tanh(gates)
    i = sg[:, 0 * H:1 * H]
    f = sg[:, 1 * H:2 * H]
    g = tg[:, 2 * H:3 * H]
    o = sg[:, 3 * H:4 * H]
    c = f * c_prev + i * g
    h = o * jnp.tanh(c)
    return h, c


def sentinel_lstm2_seq_kernel(state0_ref, xpre_ref, wh_ref, wb_ref,
                              y_ref, state_ref):
    # state0: (B, 4H)     packed initial state [h0 | h1 | c0 | c1] (read at g==0)
    # xpre  : (Tc, B, 9H) hoisted x projection  x_t @ [w_ih0|w_ih1|w_x] + bias
    # wh    : (2H, 9H)    packed recurrent weights [[w_hh0,0,0],[0,w_hh1,w_h]]
    # wb    : (H, 5H)     folded h0 weights ([h0|h0]+x identity), resident
    # y     : (Tc, B, 2H) per-step [h_top | s_t], written back once per chunk
    # state : (B, 4H)     resident state carry; DMA'd to HBM after the last step
    H = wb_ref.shape[0]
    Tc = xpre_ref.shape[0]

    @pl.when(pl.program_id(0) == 0)
    def _():
        state_ref[...] = state0_ref[...]

    def step(i, carry):
        st = state_ref[...]                       # (B, 4H) = one vreg
        h_prev = st[:, 0:2 * H]                   # [h0_prev | h1_prev]
        c0_prev = st[:, 2 * H:3 * H]
        c1_prev = st[:, 3 * H:4 * H]

        # Only h-dependent work sits on the serial path: one K=2H dot ...
        pre = xpre_ref[i] + jnp.dot(h_prev, wh_ref[...],
                                    preferred_element_type=jnp.float32)  # (B, 9H)
        # --- cell 0 ---
        h0, c0 = _gates_to_hc(pre[:, 0:4 * H], c0_prev, H)
        # ... plus the folded K=H dot for the [h0|h0]+x input of cell 1 / x_gate.
        fold = jnp.dot(h0, wb_ref[...], preferred_element_type=jnp.float32)  # (B, 5H)
        gates1 = pre[:, 4 * H:8 * H] + fold[:, 0:4 * H]
        sv_pre = pre[:, 8 * H:9 * H] + fold[:, 4 * H:5 * H]
        # --- cell 1 + sentinel gate ---
        h1, c1 = _gates_to_hc(gates1, c1_prev, H)
        s_t = jax.nn.sigmoid(sv_pre) * jnp.tanh(c1)

        y_ref[i] = jnp.concatenate([h1, s_t], axis=-1)                    # (B, 2H)
        state_ref[...] = jnp.concatenate([h0, h1, c0, c1], axis=-1)       # (B, 4H)
        return carry

    lax.fori_loop(0, Tc, step, 0, unroll=True)


def pack_params(p, hidden_size):
    """Host-side weight packing (do once, outside the per-sequence call)."""
    H = hidden_size
    z = lambda r, c: jnp.zeros((r, c), jnp.float32)
    # x projection (hoisted out of the recurrence); cols = [gates0 | gates1 | sv].
    wa_x = jnp.concatenate([p["w_ih0"], p["w_ih1"], p["w_x"]], axis=1)       # (2H, 9H)
    ba = jnp.concatenate([p["b0"], p["b1"], p["b_x"] + p["b_h"]], axis=1)    # (1, 9H)
    # h projection used inside the recurrence; rows = [h0_prev | h1_prev].
    wh = jnp.concatenate([
        jnp.concatenate([p["w_hh0"], z(H, 4 * H), z(H, H)], axis=1),
        jnp.concatenate([z(H, 4 * H), p["w_hh1"], p["w_h"]], axis=1)], axis=0)  # (2H, 9H)
    # Folded h0 contribution of x2 = [h0|h0] + x.
    wb = jnp.concatenate([p["w_ih1"][:H] + p["w_ih1"][H:2 * H],
                          p["w_x"][:H] + p["w_x"][H:2 * H]], axis=1)         # (H, 5H)
    return {"wa_x": wa_x, "ba": ba, "wh": wh, "wb": wb}


def sentinel_lstm2_seq(x_seq, h_tm1, c_tm1, packed, *, t_chunk=8):
    """Apply SentinelLSTM2 over a sequence.

    x_seq: (T, B, 2H); h_tm1, c_tm1: (B, 2, H).
    Returns (ht, ct, h_top_seq, s_t_seq) where ht/ct are the final stacked states
    (B, 2, H) and h_top_seq/s_t_seq are the per-step outputs (T, B, H).
    """
    T, B, _ = x_seq.shape
    H = h_tm1.shape[-1]
    assert T % t_chunk == 0, "T must be divisible by t_chunk"

    # Hoisted, non-recurrent x projection: one big MXU-friendly batched matmul.
    x_pre = jnp.einsum("tbi,ig->tbg", x_seq, packed["wa_x"],
                       preferred_element_type=jnp.float32) + packed["ba"]    # (T, B, 9H)

    # Packed lane-dense state slab [h0 | h1 | c0 | c1] -> (B, 4H) = (B, 128).
    state0 = jnp.concatenate(
        [h_tm1[:, 0], h_tm1[:, 1], c_tm1[:, 0], c_tm1[:, 1]], axis=-1)

    y, state_f = pl.pallas_call(
        sentinel_lstm2_seq_kernel,
        out_shape=(jax.ShapeDtypeStruct((T, B, 2 * H), jnp.float32),
                   jax.ShapeDtypeStruct((B, 4 * H), jnp.float32)),
        grid_spec=pltpu.PrefetchScalarGridSpec(
            num_scalar_prefetch=0,
            grid=(T // t_chunk,),
            in_specs=[
                pl.BlockSpec((B, 4 * H), lambda g: (0, 0)),               # state0 (resident)
                pl.BlockSpec((t_chunk, B, 9 * H), lambda g: (g, 0, 0)),   # streamed x_pre
                pl.BlockSpec((2 * H, 9 * H), lambda g: (0, 0)),           # wh (resident)
                pl.BlockSpec((H, 5 * H), lambda g: (0, 0)),               # wb (resident)
            ],
            out_specs=[
                pl.BlockSpec((t_chunk, B, 2 * H), lambda g: (g, 0, 0)),   # chunked [h_top|s_t]
                pl.BlockSpec((B, 4 * H), lambda g: (0, 0)),               # resident state carry
            ],
        ),
        compiler_params=pltpu.CompilerParams(
            dimension_semantics=("arbitrary",)),      # serial recurrence over time
        input_output_aliases={0: 1},                  # state0 buffer reused for final state
    )(state0, x_pre, packed["wh"], packed["wb"])

    h_top_seq = y[..., 0:H]
    s_t_seq = y[..., H:2 * H]
    ht = jnp.stack([state_f[:, 0:H], state_f[:, H:2 * H]], axis=1)
    ct = jnp.stack([state_f[:, 2 * H:3 * H], state_f[:, 3 * H:4 * H]], axis=1)
    return ht, ct, h_top_seq, s_t_seq


def sentinel_lstm2_step(x, h_tm1, c_tm1, packed):
    """Single-step forward matching SentinelLSTM2.forward exactly."""
    ht, ct, h_top_seq, s_seq = sentinel_lstm2_seq(
        x[None], h_tm1, c_tm1, packed, t_chunk=1)
    return ht, ct, h_top_seq[0], s_seq[0]


# ----------------------------- reference & setup -----------------------------

def _ref_lstm_cell(x, h, c, w_ih, w_hh, b):
    gates = x @ w_ih + h @ w_hh + b
    H = h.shape[-1]
    i = jax.nn.sigmoid(gates[:, 0 * H:1 * H])
    f = jax.nn.sigmoid(gates[:, 1 * H:2 * H])
    g = jnp.tanh(gates[:, 2 * H:3 * H])
    o = jax.nn.sigmoid(gates[:, 3 * H:4 * H])
    c_new = f * c + i * g
    return o * jnp.tanh(c_new), c_new


def sentinel_lstm2_ref(x, h_tm1, c_tm1, p):
    h0, c0 = _ref_lstm_cell(x, h_tm1[:, 0], c_tm1[:, 0], p["w_ih0"], p["w_hh0"], p["b0"])
    x2 = jnp.concatenate([h0, h0], axis=-1) + x
    h_t, c_t = _ref_lstm_cell(x2, h_tm1[:, 1], c_tm1[:, 1], p["w_ih1"], p["w_hh1"], p["b1"])
    sv = jax.nn.sigmoid(h_tm1[:, 1] @ p["w_h"] + p["b_h"] + x2 @ p["w_x"] + p["b_x"])
    s_t = sv * jnp.tanh(c_t)
    return jnp.stack([h0, h_t], 1), jnp.stack([c0, c_t], 1), h_t, s_t


def init_params(key, hidden_size):
    """Deterministic init matching PyTorch shapes (uniform(-1/sqrt(H), 1/sqrt(H)));
    weights transposed to (in, out), ih/hh biases pre-combined."""
    H = hidden_size
    I = 2 * H  # input_size = 2 * hidden_size (required by the forward pass)
    k = 1.0 / jnp.sqrt(jnp.float32(H))
    keys = jax.random.split(key, 14)
    u = lambda kk, shape: jax.random.uniform(kk, shape, jnp.float32, -k, k)

    params = {
        # lstm_cell_0
        "w_ih0": u(keys[0], (4 * H, I)).T,
        "w_hh0": u(keys[1], (4 * H, H)).T,
        "b0": (u(keys[2], (4 * H,)) + u(keys[3], (4 * H,))).reshape(1, 4 * H),
        # sentinel_lstm.lstm_kernel
        "w_ih1": u(keys[4], (4 * H, I)).T,
        "w_hh1": u(keys[5], (4 * H, H)).T,
        "b1": (u(keys[6], (4 * H,)) + u(keys[7], (4 * H,))).reshape(1, 4 * H),
        # sentinel_lstm.x_gate / h_gate (nn.Linear)
        "w_x": u(keys[8], (H, I)).T,
        "b_x": u(keys[9], (H,)).reshape(1, H),
        "w_h": u(keys[10], (H, H)).T,
        "b_h": u(keys[11], (H,)).reshape(1, H),
    }
    return params


if __name__ == "__main__":
    B, H, T = 8, 32, 16
    I = 2 * H  # input_size

    root = jax.random.PRNGKey(0)
    k_x, k_h, k_c, k_p = jax.random.split(root, 4)

    x_seq = jax.random.normal(k_x, (T, B, I), jnp.float32)
    h_tm1 = jax.random.normal(k_h, (B, 2, H), jnp.float32)
    c_tm1 = jax.random.normal(k_c, (B, 2, H), jnp.float32)
    params = init_params(k_p, H)
    packed = jax.tree_util.tree_map(jax.device_put, pack_params(params, H))

    # --- fused time-loop kernel over the whole sequence ---
    run_seq = jax.jit(functools.partial(sentinel_lstm2_seq, t_chunk=8))
    ht, ct, h_top_seq, s_seq = jax.block_until_ready(
        run_seq(x_seq, h_tm1, c_tm1, packed))

    # Step-by-step pure-JAX reference (original module semantics per timestep).
    h, c = h_tm1, c_tm1
    h_tops, s_ts = [], []
    for t in range(T):
        h, c, h_top, s_t = sentinel_lstm2_ref(x_seq[t], h, c, params)
        h_tops.append(h_top)
        s_ts.append(s_t)
    h_top_ref = jnp.stack(h_tops, axis=0)
    s_ref = jnp.stack(s_ts, axis=0)

    # 5e-4: f32 reassociation from the fused/folded matmuls compounds over T steps.
    for got, want in ((ht, h), (ct, c), (h_top_seq, h_top_ref), (s_seq, s_ref)):
        assert got.shape == want.shape
        assert jnp.max(jnp.abs(got - want)) < 5e-4

    # --- single-step path (exact module forward signature) ---
    ht1, ct1, h_top1, s_t1 = jax.block_until_ready(
        jax.jit(sentinel_lstm2_step)(x_seq[0], h_tm1, c_tm1, packed))
    ht1_r, ct1_r, h_top1_r, s_t1_r = sentinel_lstm2_ref(x_seq[0], h_tm1, c_tm1, params)
    for got, want in ((ht1, ht1_r), (ct1, ct1_r), (h_top1, h_top1_r), (s_t1, s_t1_r)):
        assert got.shape == want.shape
        assert jnp.max(jnp.abs(got - want)) < 1e-4

    print("KERNEL_OK")
</pallas_src>

<mosaic_0001>
module attributes {stable_mosaic.version = 11 : i64} {
  func.func @sentinel_lstm2_seq_kernel(%arg0: i32, %arg1: memref<8x128xf32, #tpu.memory_space<vmem>>, %arg2: memref<8x8x288xf32, #tpu.memory_space<vmem>>, %arg3: memref<64x288xf32, #tpu.memory_space<vmem>>, %arg4: memref<32x160xf32, #tpu.memory_space<vmem>>, %arg5: memref<8x8x64xf32, #tpu.memory_space<vmem>>, %arg6: memref<8x128xf32, #tpu.memory_space<vmem>>) attributes {dimension_semantics = [#tpu.dimension_semantics<arbitrary>], iteration_bounds = array<i64: 2>, scalar_prefetch = 0 : i64, scratch_operands = 0 : i64, tpu.core_type = #tpu.core_type<tc>, window_params = [{pipeline_mode = #tpu.pipeline_mode<synchronous>, transform_indices = @transform_0, window_bounds = array<i64: 8, 128>}, {transform_indices = @transform_1, window_bounds = array<i64: 8, 8, 288>}, {pipeline_mode = #tpu.pipeline_mode<synchronous>, transform_indices = @transform_2, window_bounds = array<i64: 64, 288>}, {pipeline_mode = #tpu.pipeline_mode<synchronous>, transform_indices = @transform_3, window_bounds = array<i64: 32, 160>}, {transform_indices = @transform_4, window_bounds = array<i64: 8, 8, 64>}, {pipeline_mode = #tpu.pipeline_mode<synchronous>, transform_indices = @transform_5, window_bounds = array<i64: 8, 128>}]} {
    %c0_i32 = arith.constant 0 : i32
    %0 = arith.cmpi eq, %arg0, %c0_i32 : i32
    %1 = arith.extui %0 : i1 to i32
    %c0_i32_0 = arith.constant 0 : i32
    %2 = arith.cmpi ne, %1, %c0_i32_0 : i32
    scf.if %2 {
      %c0_136 = arith.constant 0 : index
      %c0_137 = arith.constant 0 : index
      %507 = vector.load %arg1[%c0_136, %c0_137] : memref<8x128xf32, #tpu.memory_space<vmem>>, vector<8x128xf32>
      %c0_138 = arith.constant 0 : index
      %c0_139 = arith.constant 0 : index
      %508 = vector.load %arg6[%c0_138, %c0_139] : memref<8x128xf32, #tpu.memory_space<vmem>>, vector<8x128xf32>
      tpu.vector_store %arg6[%c0_138, %c0_139], %507 {strides = array<i32>} : memref<8x128xf32, #tpu.memory_space<vmem>>, vector<8x128xf32>,
    } else {
    }
    %c0_i32_1 = arith.constant 0 : i32
    %c0 = arith.constant 0 : index
    %c0_2 = arith.constant 0 : index
    %3 = vector.load %arg6[%c0, %c0_2] : memref<8x128xf32, #tpu.memory_space<vmem>>, vector<8x128xf32>
    %4 = vector.extract_strided_slice %3 {offsets = [0, 0], sizes = [8, 64], strides = [1, 1]} : vector<8x128xf32> to vector<8x64xf32>
    %5 = vector.extract_strided_slice %3 {offsets = [0, 64], sizes = [8, 32], strides = [1, 1]} : vector<8x128xf32> to vector<8x32xf32>
    %6 = vector.extract_strided_slice %3 {offsets = [0, 96], sizes = [8, 32], strides = [1, 1]} : vector<8x128xf32> to vector<8x32xf32>
    %7 = arith.index_cast %c0_i32_1 : i32 to index
    %c0_3 = arith.constant 0 : index
    %c0_4 = arith.constant 0 : index
    %8 = vector.load %arg2[%7, %c0_3, %c0_4] : memref<8x8x288xf32, #tpu.memory_space<vmem>>, vector<1x8x288xf32>
    %9 = vector.shape_cast %8 : vector<1x8x288xf32> to vector<8x288xf32>
    %c0_5 = arith.constant 0 : index
    %c0_6 = arith.constant 0 : index
    %10 = vector.load %arg3[%c0_5, %c0_6] : memref<64x288xf32, #tpu.memory_space<vmem>>, vector<64x288xf32>
    %cst = arith.constant dense<0.000000e+00> : vector<8x288xf32>
    %11 = tpu.matmul %4, %10, %cst {dimension_numbers = #tpu.dot_dimension_numbers<[1], [0], [0], [1], [0, 0, 1, 1], [], []>} : vector<8x64xf32>, vector<64x288xf32>, vector<8x288xf32> -> vector<8x288xf32>
    %12 = arith.addf %9, %11 : vector<8x288xf32>
    %13 = vector.extract_strided_slice %12 {offsets = [0, 0], sizes = [8, 128], strides = [1, 1]} : vector<8x288xf32> to vector<8x128xf32>
    %14 = arith.negf %13 : vector<8x128xf32>
    %15 = math.exp %14 : vector<8x128xf32>
    %cst_7 = arith.constant 1.000000e+00 : f32
    %16 = vector.broadcast %cst_7 : f32 to vector<8x128xf32>
    %17 = arith.addf %16, %15 : vector<8x128xf32>
    %18 = arith.divf %16, %17 : vector<8x128xf32>
    %19 = math.tanh %13 : vector<8x128xf32>
    %20 = vector.extract_strided_slice %18 {offsets = [0, 0], sizes = [8, 32], strides = [1, 1]} : vector<8x128xf32> to vector<8x32xf32>
    %21 = vector.extract_strided_slice %18 {offsets = [0, 32], sizes = [8, 32], strides = [1, 1]} : vector<8x128xf32> to vector<8x32xf32>
    %22 = vector.extract_strided_slice %19 {offsets = [0, 64], sizes = [8, 32], strides = [1, 1]} : vector<8x128xf32> to vector<8x32xf32>
    %23 = vector.extract_strided_slice %18 {offsets = [0, 96], sizes = [8, 32], strides = [1, 1]} : vector<8x128xf32> to vector<8x32xf32>
    %24 = arith.mulf %21, %5 : vector<8x32xf32>
    %25 = arith.mulf %20, %22 : vector<8x32xf32>
    %26 = arith.addf %24, %25 : vector<8x32xf32>
    %27 = math.tanh %26 : vector<8x32xf32>
    %28 = arith.mulf %23, %27 : vector<8x32xf32>
    %c0_8 = arith.constant 0 : index
    %c0_9 = arith.constant 0 : index
    %29 = vector.load %arg4[%c0_8, %c0_9] : memref<32x160xf32, #tpu.memory_space<vmem>>, vector<32x160xf32>
    %cst_10 = arith.constant dense<0.000000e+00> : vector<8x160xf32>
    %30 = tpu.matmul %28, %29, %cst_10 {dimension_numbers = #tpu.dot_dimension_numbers<[1], [0], [0], [1], [0, 0, 1, 1], [], []>} : vector<8x32xf32>, vector<32x160xf32>, vector<8x160xf32> -> vector<8x160xf32>
    %31 = vector.extract_strided_slice %12 {offsets = [0, 128], sizes = [8, 128], strides = [1, 1]} : vector<8x288xf32> to vector<8x128xf32>
    %32 = vector.extract_strided_slice %30 {offsets = [0, 0], sizes = [8, 128], strides = [1, 1]} : vector<8x160xf32> to vector<8x128xf32>
    %33 = arith.addf %31, %32 : vector<8x128xf32>
    %34 = vector.extract_strided_slice %12 {offsets = [0, 256], sizes = [8, 32], strides = [1, 1]} : vector<8x288xf32> to vector<8x32xf32>
    %35 = vector.extract_strided_slice %30 {offsets = [0, 128], sizes = [8, 32], strides = [1, 1]} : vector<8x160xf32> to vector<8x32xf32>
    %36 = arith.addf %34, %35 : vector<8x32xf32>
    %37 = arith.negf %33 : vector<8x128xf32>
    %38 = math.exp %37 : vector<8x128xf32>
    %cst_11 = arith.constant 1.000000e+00 : f32
    %39 = vector.broadcast %cst_11 : f32 to vector<8x128xf32>
    %40 = arith.addf %39, %38 : vector<8x128xf32>
    %41 = arith.divf %39, %40 : vector<8x128xf32>
    %42 = math.tanh %33 : vector<8x128xf32>
    %43 = vector.extract_strided_slice %41 {offsets = [0, 0], sizes = [8, 32], strides = [1, 1]} : vector<8x128xf32> to vector<8x32xf32>
    %44 = vector.extract_strided_slice %41 {offsets = [0, 32], sizes = [8, 32], strides = [1, 1]} : vector<8x128xf32> to vector<8x32xf32>
    %45 = vector.extract_strided_slice %42 {offsets = [0, 64], sizes = [8, 32], strides = [1, 1]} : vector<8x128xf32> to vector<8x32xf32>
    %46 = vector.extract_strided_slice %41 {offsets = [0, 96], sizes = [8, 32], strides = [1, 1]} : vector<8x128xf32> to vector<8x32xf32>
    %47 = arith.mulf %44, %6 : vector<8x32xf32>
    %48 = arith.mulf %43, %45 : vector<8x32xf32>
    %49 = arith.addf %47, %48 : vector<8x32xf32>
    %50 = math.tanh %49 : vector<8x32xf32>
    %51 = arith.mulf %46, %50 : vector<8x32xf32>
    %52 = arith.negf %36 : vector<8x32xf32>
    %53 = math.exp %52 : vector<8x32xf32>
    %cst_12 = arith.constant 1.000000e+00 : f32
    %54 = vector.broadcast %cst_12 : f32 to vector<8x32xf32>
    %55 = arith.addf %54, %53 : vector<8x32xf32>
    %56 = arith.divf %54, %55 : vector<8x32xf32>
    %57 = math.tanh %49 : vector<8x32xf32>
    %58 = arith.mulf %56, %57 : vector<8x32xf32>
    %59 = tpu.concatenate %51, %58 in 1 : vector<8x32xf32>, vector<8x32xf32> -> vector<8x64xf32>
    %60 = arith.index_cast %c0_i32_1 : i32 to index
    %c0_13 = arith.constant 0 : index
    %c0_14 = arith.constant 0 : index
    %61 = vector.load %arg5[%60, %c0_13, %c0_14] : memref<8x8x64xf32, #tpu.memory_space<vmem>>, vector<1x8x64xf32>
    %62 = vector.shape_cast %61 : vector<1x8x64xf32> to vector<8x64xf32>
    %63 = vector.shape_cast %59 : vector<8x64xf32> to vector<1x8x64xf32>
    tpu.vector_store %arg5[%60, %c0_13, %c0_14], %63 {strides = array<i32>} : memref<8x8x64xf32, #tpu.memory_space<vmem>>, vector<1x8x64xf32>,
    %64 = tpu.concatenate %28, %51, %26, %49 in 1 : vector<8x32xf32>, vector<8x32xf32>, vector<8x32xf32>, vector<8x32xf32> -> vector<8x128xf32>
    %c0_15 = arith.constant 0 : index
    %c0_16 = arith.constant 0 : index
    %65 = vector.load %arg6[%c0_15, %c0_16] : memref<8x128xf32, #tpu.memory_space<vmem>>, vector<8x128xf32>
    tpu.vector_store %arg6[%c0_15, %c0_16], %64 {strides = array<i32>} : memref<8x128xf32, #tpu.memory_space<vmem>>, vector<8x128xf32>,
    %c1_i32 = arith.constant 1 : i32
    %c0_17 = arith.constant 0 : index
    %c0_18 = arith.constant 0 : index
    %66 = vector.load %arg6[%c0_17, %c0_18] : memref<8x128xf32, #tpu.memory_space<vmem>>, vector<8x128xf32>
    %67 = vector.extract_strided_slice %66 {offsets = [0, 0], sizes = [8, 64], strides = [1, 1]} : vector<8x128xf32> to vector<8x64xf32>
    %68 = vector.extract_strided_slice %66 {offsets = [0, 64], sizes = [8, 32], strides = [1, 1]} : vector<8x128xf32> to vector<8x32xf32>
    %69 = vector.extract_strided_slice %66 {offsets = [0, 96], sizes = [8, 32], strides = [1, 1]} : vector<8x128xf32> to vector<8x32xf32>
    %70 = arith.index_cast %c1_i32 : i32 to index
    %c0_19 = arith.constant 0 : index
    %c0_20 = arith.constant 0 : index
    %71 = vector.load %arg2[%70, %c0_19, %c0_20] : memref<8x8x288xf32, #tpu.memory_space<vmem>>, vector<1x8x288xf32>
    %72 = vector.shape_cast %71 : vector<1x8x288xf32> to vector<8x288xf32>
    %c0_21 = arith.constant 0 : index
    %c0_22 = arith.constant 0 : index
    %73 = vector.load %arg3[%c0_21, %c0_22] : memref<64x288xf32, #tpu.memory_space<vmem>>, vector<64x288xf32>
    %cst_23 = arith.constant dense<0.000000e+00> : vector<8x288xf32>
    %74 = tpu.matmul %67, %73, %cst_23 {dimension_numbers = #tpu.dot_dimension_numbers<[1], [0], [0], [1], [0, 0, 1, 1], [], []>} : vector<8x64xf32>, vector<64x288xf32>, vector<8x288xf32> -> vector<8x288xf32>
    %75 = arith.addf %72, %74 : vector<8x288xf32>
    %76 = vector.extract_strided_slice %75 {offsets = [0, 0], sizes = [8, 128], strides = [1, 1]} : vector<8x288xf32> to vector<8x128xf32>
    %77 = arith.negf %76 : vector<8x128xf32>
    %78 = math.exp %77 : vector<8x128xf32>
    %cst_24 = arith.constant 1.000000e+00 : f32
    %79 = vector.broadcast %cst_24 : f32 to vector<8x128xf32>
    %80 = arith.addf %79, %78 : vector<8x128xf32>
    %81 = arith.divf %79, %80 : vector<8x128xf32>
    %82 = math.tanh %76 : vector<8x128xf32>
    %83 = vector.extract_strided_slice %81 {offsets = [0, 0], sizes = [8, 32], strides = [1, 1]} : vector<8x128xf32> to vector<8x32xf32>
    %84 = vector.extract_strided_slice %81 {offsets = [0, 32], sizes = [8, 32], strides = [1, 1]} : vector<8x128xf32> to vector<8x32xf32>
    %85 = vector.extract_strided_slice %82 {offsets = [0, 64], sizes = [8, 32], strides = [1, 1]} : vector<8x128xf32> to vector<8x32xf32>
    %86 = vector.extract_strided_slice %81 {offsets = [0, 96], sizes = [8, 32], strides = [1, 1]} : vector<8x128xf32> to vector<8x32xf32>
    %87 = arith.mulf %84, %68 : vector<8x32xf32>
    %88 = arith.mulf %83, %85 : vector<8x32xf32>
    %89 = arith.addf %87, %88 : vector<8x32xf32>
    %90 = math.tanh %89 : vector<8x32xf32>
    %91 = arith.mulf %86, %90 : vector<8x32xf32>
    %c0_25 = arith.constant 0 : index
    %c0_26 = arith.constant 0 : index
    %92 = vector.load %arg4[%c0_25, %c0_26] : memref<32x160xf32, #tpu.memory_space<vmem>>, vector<32x160xf32>
    %cst_27 = arith.constant dense<0.000000e+00> : vector<8x160xf32>
    %93 = tpu.matmul %91, %92, %cst_27 {dimension_numbers = #tpu.dot_dimension_numbers<[1], [0], [0], [1], [0, 0, 1, 1], [], []>} : vector<8x32xf32>, vector<32x160xf32>, vector<8x160xf32> -> vector<8x160xf32>
    %94 = vector.extract_strided_slice %75 {offsets = [0, 128], sizes = [8, 128], strides = [1, 1]} : vector<8x288xf32> to vector<8x128xf32>
    %95 = vector.extract_strided_slice %93 {offsets = [0, 0], sizes = [8, 128], strides = [1, 1]} : vector<8x160xf32> to vector<8x128xf32>
    %96 = arith.addf %94, %95 : vector<8x128xf32>
    %97 = vector.extract_strided_slice %75 {offsets = [0, 256], sizes = [8, 32], strides = [1, 1]} : vector<8x288xf32> to vector<8x32xf32>
    %98 = vector.extract_strided_slice %93 {offsets = [0, 128], sizes = [8, 32], strides = [1, 1]} : vector<8x160xf32> to vector<8x32xf32>
    %99 = arith.addf %97, %98 : vector<8x32xf32>
    %100 = arith.negf %96 : vector<8x128xf32>
    %101 = math.exp %100 : vector<8x128xf32>
    %cst_28 = arith.constant 1.000000e+00 : f32
    %102 = vector.broadcast %cst_28 : f32 to vector<8x128xf32>
    %103 = arith.addf %102, %101 : vector<8x128xf32>
    %104 = arith.divf %102, %103 : vector<8x128xf32>
    %105 = math.tanh %96 : vector<8x128xf32>
    %106 = vector.extract_strided_slice %104 {offsets = [0, 0], sizes = [8, 32], strides = [1, 1]} : vector<8x128xf32> to vector<8x32xf32>
    %107 = vector.extract_strided_slice %104 {offsets = [0, 32], sizes = [8, 32], strides = [1, 1]} : vector<8x128xf32> to vector<8x32xf32>
    %108 = vector.extract_strided_slice %105 {offsets = [0, 64], sizes = [8, 32], strides = [1, 1]} : vector<8x128xf32> to vector<8x32xf32>
    %109 = vector.extract_strided_slice %104 {offsets = [0, 96], sizes = [8, 32], strides = [1, 1]} : vector<8x128xf32> to vector<8x32xf32>
    %110 = arith.mulf %107, %69 : vector<8x32xf32>
    %111 = arith.mulf %106, %108 : vector<8x32xf32>
    %112 = arith.addf %110, %111 : vector<8x32xf32>
    %113 = math.tanh %112 : vector<8x32xf32>
    %114 = arith.mulf %109, %113 : vector<8x32xf32>
    %115 = arith.negf %99 : vector<8x32xf32>
    %116 = math.exp %115 : vector<8x32xf32>
    %cst_29 = arith.constant 1.000000e+00 : f32
    %117 = vector.broadcast %cst_29 : f32 to vector<8x32xf32>
    %118 = arith.addf %117, %116 : vector<8x32xf32>
    %119 = arith.divf %117, %118 : vector<8x32xf32>
    %120 = math.tanh %112 : vector<8x32xf32>
    %121 = arith.mulf %119, %120 : vector<8x32xf32>
    %122 = tpu.concatenate %114, %121 in 1 : vector<8x32xf32>, vector<8x32xf32> -> vector<8x64xf32>
    %123 = arith.index_cast %c1_i32 : i32 to index
    %c0_30 = arith.constant 0 : index
    %c0_31 = arith.constant 0 : index
    %124 = vector.load %arg5[%123, %c0_30, %c0_31] : memref<8x8x64xf32, #tpu.memory_space<vmem>>, vector<1x8x64xf32>
    %125 = vector.shape_cast %124 : vector<1x8x64xf32> to vector<8x64xf32>
    %126 = vector.shape_cast %122 : vector<8x64xf32> to vector<1x8x64xf32>
    tpu.vector_store %arg5[%123, %c0_30, %c0_31], %126 {strides = array<i32>} : memref<8x8x64xf32, #tpu.memory_space<vmem>>, vector<1x8x64xf32>,
    %127 = tpu.concatenate %91, %114, %89, %112 in 1 : vector<8x32xf32>, vector<8x32xf32>, vector<8x32xf32>, vector<8x32xf32> -> vector<8x128xf32>
    %c0_32 = arith.constant 0 : index
    %c0_33 = arith.constant 0 : index
    %128 = vector.load %arg6[%c0_32, %c0_33] : memref<8x128xf32, #tpu.memory_space<vmem>>, vector<8x128xf32>
    tpu.vector_store %arg6[%c0_32, %c0_33], %127 {strides = array<i32>} : memref<8x128xf32, #tpu.memory_space<vmem>>, vector<8x128xf32>,
    %c2_i32 = arith.constant 2 : i32
    %c0_34 = arith.constant 0 : index
    %c0_35 = arith.constant 0 : index
    %129 = vector.load %arg6[%c0_34, %c0_35] : memref<8x128xf32, #tpu.memory_space<vmem>>, vector<8x128xf32>
    %130 = vector.extract_strided_slice %129 {offsets = [0, 0], sizes = [8, 64], strides = [1, 1]} : vector<8x128xf32> to vector<8x64xf32>
    %131 = vector.extract_strided_slice %129 {offsets = [0, 64], sizes = [8, 32], strides = [1, 1]} : vector<8x128xf32> to vector<8x32xf32>
    %132 = vector.extract_strided_slice %129 {offsets = [0, 96], sizes = [8, 32], strides = [1, 1]} : vector<8x128xf32> to vector<8x32xf32>
    %133 = arith.index_cast %c2_i32 : i32 to index
    %c0_36 = arith.constant 0 : index
    %c0_37 = arith.constant 0 : index
    %134 = vector.load %arg2[%133, %c0_36, %c0_37] : memref<8x8x288xf32, #tpu.memory_space<vmem>>, vector<1x8x288xf32>
    %135 = vector.shape_cast %134 : vector<1x8x288xf32> to vector<8x288xf32>
    %c0_38 = arith.constant 0 : index
    %c0_39 = arith.constant 0 : index
    %136 = vector.load %arg3[%c0_38, %c0_39] : memref<64x288xf32, #tpu.memory_space<vmem>>, vector<64x288xf32>
    %cst_40 = arith.constant dense<0.000000e+00> : vector<8x288xf32>
    %137 = tpu.matmul %130, %136, %cst_40 {dimension_numbers = #tpu.dot_dimension_numbers<[1], [0], [0], [1], [0, 0, 1, 1], [], []>} : vector<8x64xf32>, vector<64x288xf32>, vector<8x288xf32> -> vector<8x288xf32>
    %138 = arith.addf %135, %137 : vector<8x288xf32>
    %139 = vector.extract_strided_slice %138 {offsets = [0, 0], sizes = [8, 128], strides = [1, 1]} : vector<8x288xf32> to vector<8x128xf32>
    %140 = arith.negf %139 : vector<8x128xf32>
    %141 = math.exp %140 : vector<8x128xf32>
    %cst_41 = arith.constant 1.000000e+00 : f32
    %142 = vector.broadcast %cst_41 : f32 to vector<8x128xf32>
    %143 = arith.addf %142, %141 : vector<8x128xf32>
    %144 = arith.divf %142, %143 : vector<8x128xf32>
    %145 = math.tanh %139 : vector<8x128xf32>
    %146 = vector.extract_strided_slice %144 {offsets = [0, 0], sizes = [8, 32], strides = [1, 1]} : vector<8x128xf32> to vector<8x32xf32>
    %147 = vector.extract_strided_slice %144 {offsets = [0, 32], sizes = [8, 32], strides = [1, 1]} : vector<8x128xf32> to vector<8x32xf32>
    %148 = vector.extract_strided_slice %145 {offsets = [0, 64], sizes = [8, 32], strides = [1, 1]} : vector<8x128xf32> to vector<8x32xf32>
    %149 = vector.extract_strided_slice %144 {offsets = [0, 96], sizes = [8, 32], strides = [1, 1]} : vector<8x128xf32> to vector<8x32xf32>
    %150 = arith.mulf %147, %131 : vector<8x32xf32>
    %151 = arith.mulf %146, %148 : vector<8x32xf32>
    %152 = arith.addf %150, %151 : vector<8x32xf32>
    %153 = math.tanh %152 : vector<8x32xf32>
    %154 = arith.mulf %149, %153 : vector<8x32xf32>
    %c0_42 = arith.constant 0 : index
    %c0_43 = arith.constant 0 : index
    %155 = vector.load %arg4[%c0_42, %c0_43] : memref<32x160xf32, #tpu.memory_space<vmem>>, vector<32x160xf32>
    %cst_44 = arith.constant dense<0.000000e+00> : vector<8x160xf32>
    %156 = tpu.matmul %154, %155, %cst_44 {dimension_numbers = #tpu.dot_dimension_numbers<[1], [0], [0], [1], [0, 0, 1, 1], [], []>} : vector<8x32xf32>, vector<32x160xf32>, vector<8x160xf32> -> vector<8x160xf32>
    %157 = vector.extract_strided_slice %138 {offsets = [0, 128], sizes = [8, 128], strides = [1, 1]} : vector<8x288xf32> to vector<8x128xf32>
    %158 = vector.extract_strided_slice %156 {offsets = [0, 0], sizes = [8, 128], strides = [1, 1]} : vector<8x160xf32> to vector<8x128xf32>
    %159 = arith.addf %157, %158 : vector<8x128xf32>
    %160 = vector.extract_strided_slice %138 {offsets = [0, 256], sizes = [8, 32], strides = [1, 1]} : vector<8x288xf32> to vector<8x32xf32>
    %161 = vector.extract_strided_slice %156 {offsets = [0, 128], sizes = [8, 32], strides = [1, 1]} : vector<8x160xf32> to vector<8x32xf32>
    %162 = arith.addf %160, %161 : vector<8x32xf32>
    %163 = arith.negf %159 : vector<8x128xf32>
    %164 = math.exp %163 : vector<8x128xf32>
    %cst_45 = arith.constant 1.000000e+00 : f32
    %165 = vector.broadcast %cst_45 : f32 to vector<8x128xf32>
    %166 = arith.addf %165, %164 : vector<8x128xf32>
    %167 = arith.divf %165, %166 : vector<8x128xf32>
    %168 = math.tanh %159 : vector<8x128xf32>
    %169 = vector.extract_strided_slice %167 {offsets = [0, 0], sizes = [8, 32], strides = [1, 1]} : vector<8x128xf32> to vector<8x32xf32>
    %170 = vector.extract_strided_slice %167 {offsets = [0, 32], sizes = [8, 32], strides = [1, 1]} : vector<8x128xf32> to vector<8x32xf32>
    %171 = vector.extract_strided_slice %168 {offsets = [0, 64], sizes = [8, 32], strides = [1, 1]} : vector<8x128xf32> to vector<8x32xf32>
    %172 = vector.extract_strided_slice %167 {offsets = [0, 96], sizes = [8, 32], strides = [1, 1]} : vector<8x128xf32> to vector<8x32xf32>
    %173 = arith.mulf %170, %132 : vector<8x32xf32>
    %174 = arith.mulf %169, %171 : vector<8x32xf32>
    %175 = arith.addf %173, %174 : vector<8x32xf32>
    %176 = math.tanh %175 : vector<8x32xf32>
    %177 = arith.mulf %172, %176 : vector<8x32xf32>
    %178 = arith.negf %162 : vector<8x32xf32>
    %179 = math.exp %178 : vector<8x32xf32>
    %cst_46 = arith.constant 1.000000e+00 : f32
    %180 = vector.broadcast %cst_46 : f32 to vector<8x32xf32>
    %181 = arith.addf %180, %179 : vector<8x32xf32>
    %182 = arith.divf %180, %181 : vector<8x32xf32>
    %183 = math.tanh %175 : vector<8x32xf32>
    %184 = arith.mulf %182, %183 : vector<8x32xf32>
    %185 = tpu.concatenate %177, %184 in 1 : vector<8x32xf32>, vector<8x32xf32> -> vector<8x64xf32>
    %186 = arith.index_cast %c2_i32 : i32 to index
    %c0_47 = arith.constant 0 : index
    %c0_48 = arith.constant 0 : index
    %187 = vector.load %arg5[%186, %c0_47, %c0_48] : memref<8x8x64xf32, #tpu.memory_space<vmem>>, vector<1x8x64xf32>
    %188 = vector.shape_cast %187 : vector<1x8x64xf32> to vector<8x64xf32>
    %189 = vector.shape_cast %185 : vector<8x64xf32> to vector<1x8x64xf32>
    tpu.vector_store %arg5[%186, %c0_47, %c0_48], %189 {strides = array<i32>} : memref<8x8x64xf32, #tpu.memory_space<vmem>>, vector<1x8x64xf32>,
    %190 = tpu.concatenate %154, %177, %152, %175 in 1 : vector<8x32xf32>, vector<8x32xf32>, vector<8x32xf32>, vector<8x32xf32> -> vector<8x128xf32>
    %c0_49 = arith.constant 0 : index
    %c0_50 = arith.constant 0 : index
    %191 = vector.load %arg6[%c0_49, %c0_50] : memref<8x128xf32, #tpu.memory_space<vmem>>, vector<8x128xf32>
    tpu.vector_store %arg6[%c0_49, %c0_50], %190 {strides = array<i32>} : memref<8x128xf32, #tpu.memory_space<vmem>>, vector<8x128xf32>,
    %c3_i32 = arith.constant 3 : i32
    %c0_51 = arith.constant 0 : index
    %c0_52 = arith.constant 0 : index
    %192 = vector.load %arg6[%c0_51, %c0_52] : memref<8x128xf32, #tpu.memory_space<vmem>>, vector<8x128xf32>
    %193 = vector.extract_strided_slice %192 {offsets = [0, 0], sizes = [8, 64], strides = [1, 1]} : vector<8x128xf32> to vector<8x64xf32>
    %194 = vector.extract_strided_slice %192 {offsets = [0, 64], sizes = [8, 32], strides = [1, 1]} : vector<8x128xf32> to vector<8x32xf32>
    %195 = vector.extract_strided_slice %192 {offsets = [0, 96], sizes = [8, 32], strides = [1, 1]} : vector<8x128xf32> to vector<8x32xf32>
    %196 = arith.index_cast %c3_i32 : i32 to index
    %c0_53 = arith.constant 0 : index
    %c0_54 = arith.constant 0 : index
    %197 = vector.load %arg2[%196, %c0_53, %c0_54] : memref<8x8x288xf32, #tpu.memory_space<vmem>>, vector<1x8x288xf32>
    %198 = vector.shape_cast %197 : vector<1x8x288xf32> to vector<8x288xf32>
    %c0_55 = arith.constant 0 : index
    %c0_56 = arith.constant 0 : index
    %199 = vector.load %arg3[%c0_55, %c0_56] : memref<64x288xf32, #tpu.memory_space<vmem>>, vector<64x288xf32>
    %cst_57 = arith.constant dense<0.000000e+00> : vector<8x288xf32>
    %200 = tpu.matmul %193, %199, %cst_57 {dimension_numbers = #tpu.dot_dimension_numbers<[1], [0], [0], [1], [0, 0, 1, 1], [], []>} : vector<8x64xf32>, vector<64x288xf32>, vector<8x288xf32> -> vector<8x288xf32>
    %201 = arith.addf %198, %200 : vector<8x288xf32>
    %202 = vector.extract_strided_slice %201 {offsets = [0, 0], sizes = [8, 128], strides = [1, 1]} : vector<8x288xf32> to vector<8x128xf32>
    %203 = arith.negf %202 : vector<8x128xf32>
    %204 = math.exp %203 : vector<8x128xf32>
    %cst_58 = arith.constant 1.000000e+00 : f32
    %205 = vector.broadcast %cst_58 : f32 to vector<8x128xf32>
    %206 = arith.addf %205, %204 : vector<8x128xf32>
    %207 = arith.divf %205, %206 : vector<8x128xf32>
    %208 = math.tanh %202 : vector<8x128xf32>
    %209 = vector.extract_strided_slice %207 {offsets = [0, 0], sizes = [8, 32], strides = [1, 1]} : vector<8x128xf32> to vector<8x32xf32>
    %210 = vector.extract_strided_slice %207 {offsets = [0, 32], sizes = [8, 32], strides = [1, 1]} : vector<8x128xf32> to vector<8x32xf32>
    %211 = vector.extract_strided_slice %208 {offsets = [0, 64], sizes = [8, 32], strides = [1, 1]} : vector<8x128xf32> to vector<8x32xf32>
    %212 = vector.extract_strided_slice %207 {offsets = [0, 96], sizes = [8, 32], strides = [1, 1]} : vector<8x128xf32> to vector<8x32xf32>
    %213 = arith.mulf %210, %194 : vector<8x32xf32>
    %214 = arith.mulf %209, %211 : vector<8x32xf32>
    %215 = arith.addf %213, %214 : vector<8x32xf32>
    %216 = math.tanh %215 : vector<8x32xf32>
    %217 = arith.mulf %212, %216 : vector<8x32xf32>
    %c0_59 = arith.constant 0 : index
    %c0_60 = arith.constant 0 : index
    %218 = vector.load %arg4[%c0_59, %c0_60] : memref<32x160xf32, #tpu.memory_space<vmem>>, vector<32x160xf32>
    %cst_61 = arith.constant dense<0.000000e+00> : vector<8x160xf32>
    %219 = tpu.matmul %217, %218, %cst_61 {dimension_numbers = #tpu.dot_dimension_numbers<[1], [0], [0], [1], [0, 0, 1, 1], [], []>} : vector<8x32xf32>, vector<32x160xf32>, vector<8x160xf32> -> vector<8x160xf32>
    %220 = vector.extract_strided_slice %201 {offsets = [0, 128], sizes = [8, 128], strides = [1, 1]} : vector<8x288xf32> to vector<8x128xf32>
    %221 = vector.extract_strided_slice %219 {offsets = [0, 0], sizes = [8, 128], strides = [1, 1]} : vector<8x160xf32> to vector<8x128xf32>
    %222 = arith.addf %220, %221 : vector<8x128xf32>
    %223 = vector.extract_strided_slice %201 {offsets = [0, 256], sizes = [8, 32], strides = [1, 1]} : vector<8x288xf32> to vector<8x32xf32>
    %224 = vector.extract_strided_slice %219 {offsets = [0, 128], sizes = [8, 32], strides = [1, 1]} : vector<8x160xf32> to vector<8x32xf32>
    %225 = arith.addf %223, %224 : vector<8x32xf32>
    %226 = arith.negf %222 : vector<8x128xf32>
    %227 = math.exp %226 : vector<8x128xf32>
    %cst_62 = arith.constant 1.000000e+00 : f32
    %228 = vector.broadcast %cst_62 : f32 to vector<8x128xf32>
    %229 = arith.addf %228, %227 : vector<8x128xf32>
    %230 = arith.divf %228, %229 : vector<8x128xf32>
    %231 = math.tanh %222 : vector<8x128xf32>
    %232 = vector.extract_strided_slice %230 {offsets = [0, 0], sizes = [8, 32], strides = [1, 1]} : vector<8x128xf32> to vector<8x32xf32>
    %233 = vector.extract_strided_slice %230 {offsets = [0, 32], sizes = [8, 32], strides = [1, 1]} : vector<8x128xf32> to vector<8x32xf32>
    %234 = vector.extract_strided_slice %231 {offsets = [0, 64], sizes = [8, 32], strides = [1, 1]} : vector<8x128xf32> to vector<8x32xf32>
    %235 = vector.extract_strided_slice %230 {offsets = [0, 96], sizes = [8, 32], strides = [1, 1]} : vector<8x128xf32> to vector<8x32xf32>
    %236 = arith.mulf %233, %195 : vector<8x32xf32>
    %237 = arith.mulf %232, %234 : vector<8x32xf32>
    %238 = arith.addf %236, %237 : vector<8x32xf32>
    %239 = math.tanh %238 : vector<8x32xf32>
    %240 = arith.mulf %235, %239 : vector<8x32xf32>
    %241 = arith.negf %225 : vector<8x32xf32>
    %242 = math.exp %241 : vector<8x32xf32>
    %cst_63 = arith.constant 1.000000e+00 : f32
    %243 = vector.broadcast %cst_63 : f32 to vector<8x32xf32>
    %244 = arith.addf %243, %242 : vector<8x32xf32>
    %245 = arith.divf %243, %244 : vector<8x32xf32>
    %246 = math.tanh %238 : vector<8x32xf32>
    %247 = arith.mulf %245, %246 : vector<8x32xf32>
    %248 = tpu.concatenate %240, %247 in 1 : vector<8x32xf32>, vector<8x32xf32> -> vector<8x64xf32>
    %249 = arith.index_cast %c3_i32 : i32 to index
    %c0_64 = arith.constant 0 : index
    %c0_65 = arith.constant 0 : index
    %250 = vector.load %arg5[%249, %c0_64, %c0_65] : memref<8x8x64xf32, #tpu.memory_space<vmem>>, vector<1x8x64xf32>
    %251 = vector.shape_cast %250 : vector<1x8x64xf32> to vector<8x64xf32>
    %252 = vector.shape_cast %248 : vector<8x64xf32> to vector<1x8x64xf32>
    tpu.vector_store %arg5[%249, %c0_64, %c0_65], %252 {strides = array<i32>} : memref<8x8x64xf32, #tpu.memory_space<vmem>>, vector<1x8x64xf32>,
    %253 = tpu.concatenate %217, %240, %215, %238 in 1 : vector<8x32xf32>, vector<8x32xf32>, vector<8x32xf32>, vector<8x32xf32> -> vector<8x128xf32>
    %c0_66 = arith.constant 0 : index
    %c0_67 = arith.constant 0 : index
    %254 = vector.load %arg6[%c0_66, %c0_67] : memref<8x128xf32, #tpu.memory_space<vmem>>, vector<8x128xf32>
    tpu.vector_store %arg6[%c0_66, %c0_67], %253 {strides = array<i32>} : memref<8x128xf32, #tpu.memory_space<vmem>>, vector<8x128xf32>,
    %c4_i32 = arith.constant 4 : i32
    %c0_68 = arith.constant 0 : index
    %c0_69 = arith.constant 0 : index
    %255 = vector.load %arg6[%c0_68, %c0_69] : memref<8x128xf32, #tpu.memory_space<vmem>>, vector<8x128xf32>
    %256 = vector.extract_strided_slice %255 {offsets = [0, 0], sizes = [8, 64], strides = [1, 1]} : vector<8x128xf32> to vector<8x64xf32>
    %257 = vector.extract_strided_slice %255 {offsets = [0, 64], sizes = [8, 32], strides = [1, 1]} : vector<8x128xf32> to vector<8x32xf32>
    %258 = vector.extract_strided_slice %255 {offsets = [0, 96], sizes = [8, 32], strides = [1, 1]} : vector<8x128xf32> to vector<8x32xf32>
    %259 = arith.index_cast %c4_i32 : i32 to index
    %c0_70 = arith.constant 0 : index
    %c0_71 = arith.constant 0 : index
    %260 = vector.load %arg2[%259, %c0_70, %c0_71] : memref<8x8x288xf32, #tpu.memory_space<vmem>>, vector<1x8x288xf32>
    %261 = vector.shape_cast %260 : vector<1x8x288xf32> to vector<8x288xf32>
    %c0_72 = arith.constant 0 : index
    %c0_73 = arith.constant 0 : index
    %262 = vector.load %arg3[%c0_72, %c0_73] : memref<64x288xf32, #tpu.memory_space<vmem>>, vector<64x288xf32>
    %cst_74 = arith.constant dense<0.000000e+00> : vector<8x288xf32>
    %263 = tpu.matmul %256, %262, %cst_74 {dimension_numbers = #tpu.dot_dimension_numbers<[1], [0], [0], [1], [0, 0, 1, 1], [], []>} : vector<8x64xf32>, vector<64x288xf32>, vector<8x288xf32> -> vector<8x288xf32>
    %264 = arith.addf %261, %263 : vector<8x288xf32>
    %265 = vector.extract_strided_slice %264 {offsets = [0, 0], sizes = [8, 128], strides = [1, 1]} : vector<8x288xf32> to vector<8x128xf32>
    %266 = arith.negf %265 : vector<8x128xf32>
    %267 = math.exp %266 : vector<8x128xf32>
    %cst_75 = arith.constant 1.000000e+00 : f32
    %268 = vector.broadcast %cst_75 : f32 to vector<8x128xf32>
    %269 = arith.addf %268, %267 : vector<8x128xf32>
    %270 = arith.divf %268, %269 : vector<8x128xf32>
    %271 = math.tanh %265 : vector<8x128xf32>
    %272 = vector.extract_strided_slice %270 {offsets = [0, 0], sizes = [8, 32], strides = [1, 1]} : vector<8x128xf32> to vector<8x32xf32>
    %273 = vector.extract_strided_slice %270 {offsets = [0, 32], sizes = [8, 32], strides = [1, 1]} : vector<8x128xf32> to vector<8x32xf32>
    %274 = vector.extract_strided_slice %271 {offsets = [0, 64], sizes = [8, 32], strides = [1, 1]} : vector<8x128xf32> to vector<8x32xf32>
    %275 = vector.extract_strided_slice %270 {offsets = [0, 96], sizes = [8, 32], strides = [1, 1]} : vector<8x128xf32> to vector<8x32xf32>
    %276 = arith.mulf %273, %257 : vector<8x32xf32>
    %277 = arith.mulf %272, %274 : vector<8x32xf32>
    %278 = arith.addf %276, %277 : vector<8x32xf32>
    %279 = math.tanh %278 : vector<8x32xf32>
    %280 = arith.mulf %275, %279 : vector<8x32xf32>
    %c0_76 = arith.constant 0 : index
    %c0_77 = arith.constant 0 : index
    %281 = vector.load %arg4[%c0_76, %c0_77] : memref<32x160xf32, #tpu.memory_space<vmem>>, vector<32x160xf32>
    %cst_78 = arith.constant dense<0.000000e+00> : vector<8x160xf32>
    %282 = tpu.matmul %280, %281, %cst_78 {dimension_numbers = #tpu.dot_dimension_numbers<[1], [0], [0], [1], [0, 0, 1, 1], [], []>} : vector<8x32xf32>, vector<32x160xf32>, vector<8x160xf32> -> vector<8x160xf32>
    %283 = vector.extract_strided_slice %264 {offsets = [0, 128], sizes = [8, 128], strides = [1, 1]} : vector<8x288xf32> to vector<8x128xf32>
    %284 = vector.extract_strided_slice %282 {offsets = [0, 0], sizes = [8, 128], strides = [1, 1]} : vector<8x160xf32> to vector<8x128xf32>
    %285 = arith.addf %283, %284 : vector<8x128xf32>
    %286 = vector.extract_strided_slice %264 {offsets = [0, 256], sizes = [8, 32], strides = [1, 1]} : vector<8x288xf32> to vector<8x32xf32>
    %287 = vector.extract_strided_slice %282 {offsets = [0, 128], sizes = [8, 32], strides = [1, 1]} : vector<8x160xf32> to vector<8x32xf32>
    %288 = arith.addf %286, %287 : vector<8x32xf32>
    %289 = arith.negf %285 : vector<8x128xf32>
    %290 = math.exp %289 : vector<8x128xf32>
    %cst_79 = arith.constant 1.000000e+00 : f32
    %291 = vector.broadcast %cst_79 : f32 to vector<8x128xf32>
    %292 = arith.addf %291, %290 : vector<8x128xf32>
    %293 = arith.divf %291, %292 : vector<8x128xf32>
    %294 = math.tanh %285 : vector<8x128xf32>
    %295 = vector.extract_strided_slice %293 {offsets = [0, 0], sizes = [8, 32], strides = [1, 1]} : vector<8x128xf32> to vector<8x32xf32>
    %296 = vector.extract_strided_slice %293 {offsets = [0, 32], sizes = [8, 32], strides = [1, 1]} : vector<8x128xf32> to vector<8x32xf32>
    %297 = vector.extract_strided_slice %294 {offsets = [0, 64], sizes = [8, 32], strides = [1, 1]} : vector<8x128xf32> to vector<8x32xf32>
    %298 = vector.extract_strided_slice %293 {offsets = [0, 96], sizes = [8, 32], strides = [1, 1]} : vector<8x128xf32> to vector<8x32xf32>
    %299 = arith.mulf %296, %258 : vector<8x32xf32>
    %300 = arith.mulf %295, %297 : vector<8x32xf32>
    %301 = arith.addf %299, %300 : vector<8x32xf32>
    %302 = math.tanh %301 : vector<8x32xf32>
    %303 = arith.mulf %298, %302 : vector<8x32xf32>
    %304 = arith.negf %288 : vector<8x32xf32>
    %305 = math.exp %304 : vector<8x32xf32>
    %cst_80 = arith.constant 1.000000e+00 : f32
    %306 = vector.broadcast %cst_80 : f32 to vector<8x32xf32>
    %307 = arith.addf %306, %305 : vector<8x32xf32>
    %308 = arith.divf %306, %307 : vector<8x32xf32>
    %309 = math.tanh %301 : vector<8x32xf32>
    %310 = arith.mulf %308, %309 : vector<8x32xf32>
    %311 = tpu.concatenate %303, %310 in 1 : vector<8x32xf32>, vector<8x32xf32> -> vector<8x64xf32>
    %312 = arith.index_cast %c4_i32 : i32 to index
    %c0_81 = arith.constant 0 : index
    %c0_82 = arith.constant 0 : index
    %313 = vector.load %arg5[%312, %c0_81, %c0_82] : memref<8x8x64xf32, #tpu.memory_space<vmem>>, vector<1x8x64xf32>
    %314 = vector.shape_cast %313 : vector<1x8x64xf32> to vector<8x64xf32>
    %315 = vector.shape_cast %311 : vector<8x64xf32> to vector<1x8x64xf32>
    tpu.vector_store %arg5[%312, %c0_81, %c0_82], %315 {strides = array<i32>} : memref<8x8x64xf32, #tpu.memory_space<vmem>>, vector<1x8x64xf32>,
    %316 = tpu.concatenate %280, %303, %278, %301 in 1 : vector<8x32xf32>, vector<8x32xf32>, vector<8x32xf32>, vector<8x32xf32> -> vector<8x128xf32>
    %c0_83 = arith.constant 0 : index
    %c0_84 = arith.constant 0 : index
    %317 = vector.load %arg6[%c0_83, %c0_84] : memref<8x128xf32, #tpu.memory_space<vmem>>, vector<8x128xf32>
    tpu.vector_store %arg6[%c0_83, %c0_84], %316 {strides = array<i32>} : memref<8x128xf32, #tpu.memory_space<vmem>>, vector<8x128xf32>,
    %c5_i32 = arith.constant 5 : i32
    %c0_85 = arith.constant 0 : index
    %c0_86 = arith.constant 0 : index
    %318 = vector.load %arg6[%c0_85, %c0_86] : memref<8x128xf32, #tpu.memory_space<vmem>>, vector<8x128xf32>
    %319 = vector.extract_strided_slice %318 {offsets = [0, 0], sizes = [8, 64], strides = [1, 1]} : vector<8x128xf32> to vector<8x64xf32>
    %320 = vector.extract_strided_slice %318 {offsets = [0, 64], sizes = [8, 32], strides = [1, 1]} : vector<8x128xf32> to vector<8x32xf32>
    %321 = vector.extract_strided_slice %318 {offsets = [0, 96], sizes = [8, 32], strides = [1, 1]} : vector<8x128xf32> to vector<8x32xf32>
    %322 = arith.index_cast %c5_i32 : i32 to index
    %c0_87 = arith.constant 0 : index
    %c0_88 = arith.constant 0 : index
    %323 = vector.load %arg2[%322, %c0_87, %c0_88] : memref<8x8x288xf32, #tpu.memory_space<vmem>>, vector<1x8x288xf32>
    %324 = vector.shape_cast %323 : vector<1x8x288xf32> to vector<8x288xf32>
    %c0_89 = arith.constant 0 : index
    %c0_90 = arith.constant 0 : index
    %325 = vector.load %arg3[%c0_89, %c0_90] : memref<64x288xf32, #tpu.memory_space<vmem>>, vector<64x288xf32>
    %cst_91 = arith.constant dense<0.000000e+00> : vector<8x288xf32>
    %326 = tpu.matmul %319, %325, %cst_91 {dimension_numbers = #tpu.dot_dimension_numbers<[1], [0], [0], [1], [0, 0, 1, 1], [], []>} : vector<8x64xf32>, vector<64x288xf32>, vector<8x288xf32> -> vector<8x288xf32>
    %327 = arith.addf %324, %326 : vector<8x288xf32>
    %328 = vector.extract_strided_slice %327 {offsets = [0, 0], sizes = [8, 128], strides = [1, 1]} : vector<8x288xf32> to vector<8x128xf32>
    %329 = arith.negf %328 : vector<8x128xf32>
    %330 = math.exp %329 : vector<8x128xf32>
    %cst_92 = arith.constant 1.000000e+00 : f32
    %331 = vector.broadcast %cst_92 : f32 to vector<8x128xf32>
    %332 = arith.addf %331, %330 : vector<8x128xf32>
    %333 = arith.divf %331, %332 : vector<8x128xf32>
    %334 = math.tanh %328 : vector<8x128xf32>
    %335 = vector.extract_strided_slice %333 {offsets = [0, 0], sizes = [8, 32], strides = [1, 1]} : vector<8x128xf32> to vector<8x32xf32>
    %336 = vector.extract_strided_slice %333 {offsets = [0, 32], sizes = [8, 32], strides = [1, 1]} : vector<8x128xf32> to vector<8x32xf32>
    %337 = vector.extract_strided_slice %334 {offsets = [0, 64], sizes = [8, 32], strides = [1, 1]} : vector<8x128xf32> to vector<8x32xf32>
    %338 = vector.extract_strided_slice %333 {offsets = [0, 96], sizes = [8, 32], strides = [1, 1]} : vector<8x128xf32> to vector<8x32xf32>
    %339 = arith.mulf %336, %320 : vector<8x32xf32>
    %340 = arith.mulf %335, %337 : vector<8x32xf32>
    %341 = arith.addf %339, %340 : vector<8x32xf32>
    %342 = math.tanh %341 : vector<8x32xf32>
    %343 = arith.mulf %338, %342 : vector<8x32xf32>
    %c0_93 = arith.constant 0 : index
    %c0_94 = arith.constant 0 : index
    %344 = vector.load %arg4[%c0_93, %c0_94] : memref<32x160xf32, #tpu.memory_space<vmem>>, vector<32x160xf32>
    %cst_95 = arith.constant dense<0.000000e+00> : vector<8x160xf32>
    %345 = tpu.matmul %343, %344, %cst_95 {dimension_numbers = #tpu.dot_dimension_numbers<[1], [0], [0], [1], [0, 0, 1, 1], [], []>} : vector<8x32xf32>, vector<32x160xf32>, vector<8x160xf32> -> vector<8x160xf32>
    %346 = vector.extract_strided_slice %327 {offsets = [0, 128], sizes = [8, 128], strides = [1, 1]} : vector<8x288xf32> to vector<8x128xf32>
    %347 = vector.extract_strided_slice %345 {offsets = [0, 0], sizes = [8, 128], strides = [1, 1]} : vector<8x160xf32> to vector<8x128xf32>
    %348 = arith.addf %346, %347 : vector<8x128xf32>
    %349 = vector.extract_strided_slice %327 {offsets = [0, 256], sizes = [8, 32], strides = [1, 1]} : vector<8x288xf32> to vector<8x32xf32>
    %350 = vector.extract_strided_slice %345 {offsets = [0, 128], sizes = [8, 32], strides = [1, 1]} : vector<8x160xf32> to vector<8x32xf32>
    %351 = arith.addf %349, %350 : vector<8x32xf32>
    %352 = arith.negf %348 : vector<8x128xf32>
    %353 = math.exp %352 : vector<8x128xf32>
    %cst_96 = arith.constant 1.000000e+00 : f32
    %354 = vector.broadcast %cst_96 : f32 to vector<8x128xf32>
    %355 = arith.addf %354, %353 : vector<8x128xf32>
    %356 = arith.divf %354, %355 : vector<8x128xf32>
    %357 = math.tanh %348 : vector<8x128xf32>
    %358 = vector.extract_strided_slice %356 {offsets = [0, 0], sizes = [8, 32], strides = [1, 1]} : vector<8x128xf32> to vector<8x32xf32>
    %359 = vector.extract_strided_slice %356 {offsets = [0, 32], sizes = [8, 32], strides = [1, 1]} : vector<8x128xf32> to vector<8x32xf32>
    %360 = vector.extract_strided_slice %357 {offsets = [0, 64], sizes = [8, 32], strides = [1, 1]} : vector<8x128xf32> to vector<8x32xf32>
    %361 = vector.extract_strided_slice %356 {offsets = [0, 96], sizes = [8, 32], strides = [1, 1]} : vector<8x128xf32> to vector<8x32xf32>
    %362 = arith.mulf %359, %321 : vector<8x32xf32>
    %363 = arith.mulf %358, %360 : vector<8x32xf32>
    %364 = arith.addf %362, %363 : vector<8x32xf32>
    %365 = math.tanh %364 : vector<8x32xf32>
    %366 = arith.mulf %361, %365 : vector<8x32xf32>
    %367 = arith.negf %351 : vector<8x32xf32>
    %368 = math.exp %367 : vector<8x32xf32>
    %cst_97 = arith.constant 1.000000e+00 : f32
    %369 = vector.broadcast %cst_97 : f32 to vector<8x32xf32>
    %370 = arith.addf %369, %368 : vector<8x32xf32>
    %371 = arith.divf %369, %370 : vector<8x32xf32>
    %372 = math.tanh %364 : vector<8x32xf32>
    %373 = arith.mulf %371, %372 : vector<8x32xf32>
    %374 = tpu.concatenate %366, %373 in 1 : vector<8x32xf32>, vector<8x32xf32> -> vector<8x64xf32>
    %375 = arith.index_cast %c5_i32 : i32 to index
    %c0_98 = arith.constant 0 : index
    %c0_99 = arith.constant 0 : index
    %376 = vector.load %arg5[%375, %c0_98, %c0_99] : memref<8x8x64xf32, #tpu.memory_space<vmem>>, vector<1x8x64xf32>
    %377 = vector.shape_cast %376 : vector<1x8x64xf32> to vector<8x64xf32>
    %378 = vector.shape_cast %374 : vector<8x64xf32> to vector<1x8x64xf32>
    tpu.vector_store %arg5[%375, %c0_98, %c0_99], %378 {strides = array<i32>} : memref<8x8x64xf32, #tpu.memory_space<vmem>>, vector<1x8x64xf32>,
    %379 = tpu.concatenate %343, %366, %341, %364 in 1 : vector<8x32xf32>, vector<8x32xf32>, vector<8x32xf32>, vector<8x32xf32> -> vector<8x128xf32>
    %c0_100 = arith.constant 0 : index
    %c0_101 = arith.constant 0 : index
    %380 = vector.load %arg6[%c0_100, %c0_101] : memref<8x128xf32, #tpu.memory_space<vmem>>, vector<8x128xf32>
    tpu.vector_store %arg6[%c0_100, %c0_101], %379 {strides = array<i32>} : memref<8x128xf32, #tpu.memory_space<vmem>>, vector<8x128xf32>,
    %c6_i32 = arith.constant 6 : i32
    %c0_102 = arith.constant 0 : index
    %c0_103 = arith.constant 0 : index
    %381 = vector.load %arg6[%c0_102, %c0_103] : memref<8x128xf32, #tpu.memory_space<vmem>>, vector<8x128xf32>
    %382 = vector.extract_strided_slice %381 {offsets = [0, 0], sizes = [8, 64], strides = [1, 1]} : vector<8x128xf32> to vector<8x64xf32>
    %383 = vector.extract_strided_slice %381 {offsets = [0, 64], sizes = [8, 32], strides = [1, 1]} : vector<8x128xf32> to vector<8x32xf32>
    %384 = vector.extract_strided_slice %381 {offsets = [0, 96], sizes = [8, 32], strides = [1, 1]} : vector<8x128xf32> to vector<8x32xf32>
    %385 = arith.index_cast %c6_i32 : i32 to index
    %c0_104 = arith.constant 0 : index
    %c0_105 = arith.constant 0 : index
    %386 = vector.load %arg2[%385, %c0_104, %c0_105] : memref<8x8x288xf32, #tpu.memory_space<vmem>>, vector<1x8x288xf32>
    %387 = vector.shape_cast %386 : vector<1x8x288xf32> to vector<8x288xf32>
    %c0_106 = arith.constant 0 : index
    %c0_107 = arith.constant 0 : index
    %388 = vector.load %arg3[%c0_106, %c0_107] : memref<64x288xf32, #tpu.memory_space<vmem>>, vector<64x288xf32>
    %cst_108 = arith.constant dense<0.000000e+00> : vector<8x288xf32>
    %389 = tpu.matmul %382, %388, %cst_108 {dimension_numbers = #tpu.dot_dimension_numbers<[1], [0], [0], [1], [0, 0, 1, 1], [], []>} : vector<8x64xf32>, vector<64x288xf32>, vector<8x288xf32> -> vector<8x288xf32>
    %390 = arith.addf %387, %389 : vector<8x288xf32>
    %391 = vector.extract_strided_slice %390 {offsets = [0, 0], sizes = [8, 128], strides = [1, 1]} : vector<8x288xf32> to vector<8x128xf32>
    %392 = arith.negf %391 : vector<8x128xf32>
    %393 = math.exp %392 : vector<8x128xf32>
    %cst_109 = arith.constant 1.000000e+00 : f32
    %394 = vector.broadcast %cst_109 : f32 to vector<8x128xf32>
    %395 = arith.addf %394, %393 : vector<8x128xf32>
    %396 = arith.divf %394, %395 : vector<8x128xf32>
    %397 = math.tanh %391 : vector<8x128xf32>
    %398 = vector.extract_strided_slice %396 {offsets = [0, 0], sizes = [8, 32], strides = [1, 1]} : vector<8x128xf32> to vector<8x32xf32>
    %399 = vector.extract_strided_slice %396 {offsets = [0, 32], sizes = [8, 32], strides = [1, 1]} : vector<8x128xf32> to vector<8x32xf32>
    %400 = vector.extract_strided_slice %397 {offsets = [0, 64], sizes = [8, 32], strides = [1, 1]} : vector<8x128xf32> to vector<8x32xf32>
    %401 = vector.extract_strided_slice %396 {offsets = [0, 96], sizes = [8, 32], strides = [1, 1]} : vector<8x128xf32> to vector<8x32xf32>
    %402 = arith.mulf %399, %383 : vector<8x32xf32>
    %403 = arith.mulf %398, %400 : vector<8x32xf32>
    %404 = arith.addf %402, %403 : vector<8x32xf32>
    %405 = math.tanh %404 : vector<8x32xf32>
    %406 = arith.mulf %401, %405 : vector<8x32xf32>
    %c0_110 = arith.constant 0 : index
    %c0_111 = arith.constant 0 : index
    %407 = vector.load %arg4[%c0_110, %c0_111] : memref<32x160xf32, #tpu.memory_space<vmem>>, vector<32x160xf32>
    %cst_112 = arith.constant dense<0.000000e+00> : vector<8x160xf32>
    %408 = tpu.matmul %406, %407, %cst_112 {dimension_numbers = #tpu.dot_dimension_numbers<[1], [0], [0], [1], [0, 0, 1, 1], [], []>} : vector<8x32xf32>, vector<32x160xf32>, vector<8x160xf32> -> vector<8x160xf32>
    %409 = vector.extract_strided_slice %390 {offsets = [0, 128], sizes = [8, 128], strides = [1, 1]} : vector<8x288xf32> to vector<8x128xf32>
    %410 = vector.extract_strided_slice %408 {offsets = [0, 0], sizes = [8, 128], strides = [1, 1]} : vector<8x160xf32> to vector<8x128xf32>
    %411 = arith.addf %409, %410 : vector<8x128xf32>
    %412 = vector.extract_strided_slice %390 {offsets = [0, 256], sizes = [8, 32], strides = [1, 1]} : vector<8x288xf32> to vector<8x32xf32>
    %413 = vector.extract_strided_slice %408 {offsets = [0, 128], sizes = [8, 32], strides = [1, 1]} : vector<8x160xf32> to vector<8x32xf32>
    %414 = arith.addf %412, %413 : vector<8x32xf32>
    %415 = arith.negf %411 : vector<8x128xf32>
    %416 = math.exp %415 : vector<8x128xf32>
    %cst_113 = arith.constant 1.000000e+00 : f32
    %417 = vector.broadcast %cst_113 : f32 to vector<8x128xf32>
    %418 = arith.addf %417, %416 : vector<8x128xf32>
    %419 = arith.divf %417, %418 : vector<8x128xf32>
    %420 = math.tanh %411 : vector<8x128xf32>
    %421 = vector.extract_strided_slice %419 {offsets = [0, 0], sizes = [8, 32], strides = [1, 1]} : vector<8x128xf32> to vector<8x32xf32>
    %422 = vector.extract_strided_slice %419 {offsets = [0, 32], sizes = [8, 32], strides = [1, 1]} : vector<8x128xf32> to vector<8x32xf32>
    %423 = vector.extract_strided_slice %420 {offsets = [0, 64], sizes = [8, 32], strides = [1, 1]} : vector<8x128xf32> to vector<8x32xf32>
    %424 = vector.extract_strided_slice %419 {offsets = [0, 96], sizes = [8, 32], strides = [1, 1]} : vector<8x128xf32> to vector<8x32xf32>
    %425 = arith.mulf %422, %384 : vector<8x32xf32>
    %426 = arith.mulf %421, %423 : vector<8x32xf32>
    %427 = arith.addf %425, %426 : vector<8x32xf32>
    %428 = math.tanh %427 : vector<8x32xf32>
    %429 = arith.mulf %424, %428 : vector<8x32xf32>
    %430 = arith.negf %414 : vector<8x32xf32>
    %431 = math.exp %430 : vector<8x32xf32>
    %cst_114 = arith.constant 1.000000e+00 : f32
    %432 = vector.broadcast %cst_114 : f32 to vector<8x32xf32>
    %433 = arith.addf %432, %431 : vector<8x32xf32>
    %434 = arith.divf %432, %433 : vector<8x32xf32>
    %435 = math.tanh %427 : vector<8x32xf32>
    %436 = arith.mulf %434, %435 : vector<8x32xf32>
    %437 = tpu.concatenate %429, %436 in 1 : vector<8x32xf32>, vector<8x32xf32> -> vector<8x64xf32>
    %438 = arith.index_cast %c6_i32 : i32 to index
    %c0_115 = arith.constant 0 : index
    %c0_116 = arith.constant 0 : index
    %439 = vector.load %arg5[%438, %c0_115, %c0_116] : memref<8x8x64xf32, #tpu.memory_space<vmem>>, vector<1x8x64xf32>
    %440 = vector.shape_cast %439 : vector<1x8x64xf32> to vector<8x64xf32>
    %441 = vector.shape_cast %437 : vector<8x64xf32> to vector<1x8x64xf32>
    tpu.vector_store %arg5[%438, %c0_115, %c0_116], %441 {strides = array<i32>} : memref<8x8x64xf32, #tpu.memory_space<vmem>>, vector<1x8x64xf32>,
    %442 = tpu.concatenate %406, %429, %404, %427 in 1 : vector<8x32xf32>, vector<8x32xf32>, vector<8x32xf32>, vector<8x32xf32> -> vector<8x128xf32>
    %c0_117 = arith.constant 0 : index
    %c0_118 = arith.constant 0 : index
    %443 = vector.load %arg6[%c0_117, %c0_118] : memref<8x128xf32, #tpu.memory_space<vmem>>, vector<8x128xf32>
    tpu.vector_store %arg6[%c0_117, %c0_118], %442 {strides = array<i32>} : memref<8x128xf32, #tpu.memory_space<vmem>>, vector<8x128xf32>,
    %c7_i32 = arith.constant 7 : i32
    %c0_119 = arith.constant 0 : index
    %c0_120 = arith.constant 0 : index
    %444 = vector.load %arg6[%c0_119, %c0_120] : memref<8x128xf32, #tpu.memory_space<vmem>>, vector<8x128xf32>
    %445 = vector.extract_strided_slice %444 {offsets = [0, 0], sizes = [8, 64], strides = [1, 1]} : vector<8x128xf32> to vector<8x64xf32>
    %446 = vector.extract_strided_slice %444 {offsets = [0, 64], sizes = [8, 32], strides = [1, 1]} : vector<8x128xf32> to vector<8x32xf32>
    %447 = vector.extract_strided_slice %444 {offsets = [0, 96], sizes = [8, 32], strides = [1, 1]} : vector<8x128xf32> to vector<8x32xf32>
    %448 = arith.index_cast %c7_i32 : i32 to index
    %c0_121 = arith.constant 0 : index
    %c0_122 = arith.constant 0 : index
    %449 = vector.load %arg2[%448, %c0_121, %c0_122] : memref<8x8x288xf32, #tpu.memory_space<vmem>>, vector<1x8x288xf32>
    %450 = vector.shape_cast %449 : vector<1x8x288xf32> to vector<8x288xf32>
    %c0_123 = arith.constant 0 : index
    %c0_124 = arith.constant 0 : index
    %451 = vector.load %arg3[%c0_123, %c0_124] : memref<64x288xf32, #tpu.memory_space<vmem>>, vector<64x288xf32>
    %cst_125 = arith.constant dense<0.000000e+00> : vector<8x288xf32>
    %452 = tpu.matmul %445, %451, %cst_125 {dimension_numbers = #tpu.dot_dimension_numbers<[1], [0], [0], [1], [0, 0, 1, 1], [], []>} : vector<8x64xf32>, vector<64x288xf32>, vector<8x288xf32> -> vector<8x288xf32>
    %453 = arith.addf %450, %452 : vector<8x288xf32>
    %454 = vector.extract_strided_slice %453 {offsets = [0, 0], sizes = [8, 128], strides = [1, 1]} : vector<8x288xf32> to vector<8x128xf32>
    %455 = arith.negf %454 : vector<8x128xf32>
    %456 = math.exp %455 : vector<8x128xf32>
    %cst_126 = arith.constant 1.000000e+00 : f32
    %457 = vector.broadcast %cst_126 : f32 to vector<8x128xf32>
    %458 = arith.addf %457, %456 : vector<8x128xf32>
    %459 = arith.divf %457, %458 : vector<8x128xf32>
    %460 = math.tanh %454 : vector<8x128xf32>
    %461 = vector.extract_strided_slice %459 {offsets = [0, 0], sizes = [8, 32], strides = [1, 1]} : vector<8x128xf32> to vector<8x32xf32>
    %462 = vector.extract_strided_slice %459 {offsets = [0, 32], sizes = [8, 32], strides = [1, 1]} : vector<8x128xf32> to vector<8x32xf32>
    %463 = vector.extract_strided_slice %460 {offsets = [0, 64], sizes = [8, 32], strides = [1, 1]} : vector<8x128xf32> to vector<8x32xf32>
    %464 = vector.extract_strided_slice %459 {offsets = [0, 96], sizes = [8, 32], strides = [1, 1]} : vector<8x128xf32> to vector<8x32xf32>
    %465 = arith.mulf %462, %446 : vector<8x32xf32>
    %466 = arith.mulf %461, %463 : vector<8x32xf32>
    %467 = arith.addf %465, %466 : vector<8x32xf32>
    %468 = math.tanh %467 : vector<8x32xf32>
    %469 = arith.mulf %464, %468 : vector<8x32xf32>
    %c0_127 = arith.constant 0 : index
    %c0_128 = arith.constant 0 : index
    %470 = vector.load %arg4[%c0_127, %c0_128] : memref<32x160xf32, #tpu.memory_space<vmem>>, vector<32x160xf32>
    %cst_129 = arith.constant dense<0.000000e+00> : vector<8x160xf32>
    %471 = tpu.matmul %469, %470, %cst_129 {dimension_numbers = #tpu.dot_dimension_numbers<[1], [0], [0], [1], [0, 0, 1, 1], [], []>} : vector<8x32xf32>, vector<32x160xf32>, vector<8x160xf32> -> vector<8x160xf32>
    %472 = vector.extract_strided_slice %453 {offsets = [0, 128], sizes = [8, 128], strides = [1, 1]} : vector<8x288xf32> to vector<8x128xf32>
    %473 = vector.extract_strided_slice %471 {offsets = [0, 0], sizes = [8, 128], strides = [1, 1]} : vector<8x160xf32> to vector<8x128xf32>
    %474 = arith.addf %472, %473 : vector<8x128xf32>
    %475 = vector.extract_strided_slice %453 {offsets = [0, 256], sizes = [8, 32], strides = [1, 1]} : vector<8x288xf32> to vector<8x32xf32>
    %476 = vector.extract_strided_slice %471 {offsets = [0, 128], sizes = [8, 32], strides = [1, 1]} : vector<8x160xf32> to vector<8x32xf32>
    %477 = arith.addf %475, %476 : vector<8x32xf32>
    %478 = arith.negf %474 : vector<8x128xf32>
    %479 = math.exp %478 : vector<8x128xf32>
    %cst_130 = arith.constant 1.000000e+00 : f32
    %480 = vector.broadcast %cst_130 : f32 to vector<8x128xf32>
    %481 = arith.addf %480, %479 : vector<8x128xf32>
    %482 = arith.divf %480, %481 : vector<8x128xf32>
    %483 = math.tanh %474 : vector<8x128xf32>
    %484 = vector.extract_strided_slice %482 {offsets = [0, 0], sizes = [8, 32], strides = [1, 1]} : vector<8x128xf32> to vector<8x32xf32>
    %485 = vector.extract_strided_slice %482 {offsets = [0, 32], sizes = [8, 32], strides = [1, 1]} : vector<8x128xf32> to vector<8x32xf32>
    %486 = vector.extract_strided_slice %483 {offsets = [0, 64], sizes = [8, 32], strides = [1, 1]} : vector<8x128xf32> to vector<8x32xf32>
    %487 = vector.extract_strided_slice %482 {offsets = [0, 96], sizes = [8, 32], strides = [1, 1]} : vector<8x128xf32> to vector<8x32xf32>
    %488 = arith.mulf %485, %447 : vector<8x32xf32>
    %489 = arith.mulf %484, %486 : vector<8x32xf32>
    %490 = arith.addf %488, %489 : vector<8x32xf32>
    %491 = math.tanh %490 : vector<8x32xf32>
    %492 = arith.mulf %487, %491 : vector<8x32xf32>
    %493 = arith.negf %477 : vector<8x32xf32>
    %494 = math.exp %493 : vector<8x32xf32>
    %cst_131 = arith.constant 1.000000e+00 : f32
    %495 = vector.broadcast %cst_131 : f32 to vector<8x32xf32>
    %496 = arith.addf %495, %494 : vector<8x32xf32>
    %497 = arith.divf %495, %496 : vector<8x32xf32>
    %498 = math.tanh %490 : vector<8x32xf32>
    %499 = arith.mulf %497, %498 : vector<8x32xf32>
    %500 = tpu.concatenate %492, %499 in 1 : vector<8x32xf32>, vector<8x32xf32> -> vector<8x64xf32>
    %501 = arith.index_cast %c7_i32 : i32 to index
    %c0_132 = arith.constant 0 : index
    %c0_133 = arith.constant 0 : index
    %502 = vector.load %arg5[%501, %c0_132, %c0_133] : memref<8x8x64xf32, #tpu.memory_space<vmem>>, vector<1x8x64xf32>
    %503 = vector.shape_cast %502 : vector<1x8x64xf32> to vector<8x64xf32>
    %504 = vector.shape_cast %500 : vector<8x64xf32> to vector<1x8x64xf32>
    tpu.vector_store %arg5[%501, %c0_132, %c0_133], %504 {strides = array<i32>} : memref<8x8x64xf32, #tpu.memory_space<vmem>>, vector<1x8x64xf32>,
    %505 = tpu.concatenate %469, %492, %467, %490 in 1 : vector<8x32xf32>, vector<8x32xf32>, vector<8x32xf32>, vector<8x32xf32> -> vector<8x128xf32>
    %c0_134 = arith.constant 0 : index
    %c0_135 = arith.constant 0 : index
    %506 = vector.load %arg6[%c0_134, %c0_135] : memref<8x128xf32, #tpu.memory_space<vmem>>, vector<8x128xf32>
    tpu.vector_store %arg6[%c0_134, %c0_135], %505 {strides = array<i32>} : memref<8x128xf32, #tpu.memory_space<vmem>>, vector<8x128xf32>,
    %c8_i32 = arith.constant 8 : i32
    return
  }
  func.func @transform_0(%arg0: i32) -> (i32, i32) {
    %c0_i32 = arith.constant 0 : i32
    %c0_i32_0 = arith.constant 0 : i32
    %c0_i32_1 = arith.constant 0 : i32
    return %c0_i32, %c0_i32_0 : i32, i32
  }
  func.func @transform_1(%arg0: i32) -> (i32, i32, i32) {
    %c0_i32 = arith.constant 0 : i32
    %c0_i32_0 = arith.constant 0 : i32
    %c0_i32_1 = arith.constant 0 : i32
    return %arg0, %c0_i32, %c0_i32_0 : i32, i32, i32
  }
  func.func @transform_2(%arg0: i32) -> (i32, i32) {
    %c0_i32 = arith.constant 0 : i32
    %c0_i32_0 = arith.constant 0 : i32
    %c0_i32_1 = arith.constant 0 : i32
    return %c0_i32, %c0_i32_0 : i32, i32
  }
  func.func @transform_3(%arg0: i32) -> (i32, i32) {
    %c0_i32 = arith.constant 0 : i32
    %c0_i32_0 = arith.constant 0 : i32
    %c0_i32_1 = arith.constant 0 : i32
    return %c0_i32, %c0_i32_0 : i32, i32
  }
  func.func @transform_4(%arg0: i32) -> (i32, i32, i32) {
    %c0_i32 = arith.constant 0 : i32
    %c0_i32_0 = arith.constant 0 : i32
    %c0_i32_1 = arith.constant 0 : i32
    return %arg0, %c0_i32, %c0_i32_0 : i32, i32, i32
  }
  func.func @transform_5(%arg0: i32) -> (i32, i32) {
    %c0_i32 = arith.constant 0 : i32
    %c0_i32_0 = arith.constant 0 : i32
    %c0_i32_1 = arith.constant 0 : i32
    return %c0_i32, %c0_i32_0 : i32, i32
  }
}

</mosaic_0001>

<llo_original>
// kernel: sentinel_lstm2_seq.1
$region0: #{sentinel_lstm2_seq.1}
  #allocation0 [shape = 'u32[]', space=smem, size = 0x4, offset = 0x4, fixed_abs, tag = 'smem constant byte address 0x4 - core index']
  #allocation1 [shape = 'u32[72,128]{1,0:T(1,128)}', space=vmem, size = 0x9000, scoped, tag = 'internal scratch']
  %s0 = inlined_call_operand.vmem [shape: f32[8,128], index: 0, kind: input, shape index: {}, may-alias: {0,5}]
  %s1 = inlined_call_operand.vmem [shape: f32[16,8,288], index: 1, kind: input, shape index: {}]
  %s2 = inlined_call_operand.vmem [shape: f32[64,288], index: 2, kind: input, shape index: {}]
  %s3 = inlined_call_operand.vmem [shape: f32[32,160], index: 3, kind: input, shape index: {}]
  %s4 = inlined_call_operand.vmem [shape: f32[16,8,64], index: 4, kind: output, shape index: {0}]
  %s5 = inlined_call_operand.vmem [shape: f32[8,128], index: 5, kind: output, shape index: {1}, may-alias: {0,5}]
  %6 = xla_tuple %s4, %s5
  %s7 = sld [smem:[#allocation0]]
  $region61: #{sentinel_lstm2_seq.1} parent=0
    _
  %s9 = ssub.s32 1, %s7
  %s10 = scalar_select 0, %s9, %s7
  loop: start=0, step=1, limit=4
  $region2: #{sentinel_lstm2_seq.1} parent=0 // loop_pre_header
    _
  $region3: #{sentinel_lstm2_seq.1} parent=0 // loop_header
    %s12 = sphi 0, %s16
    %p13 = scmp.ge.s32.totalorder %s12, 4
    %s20 = sphi 0, %s20
    %s22 = sphi 0, %s20
    %s23 = sphi 0, %s22
    %s37 = sphi 0, %s23
    %s43 = sphi 0, %s45
    %s46 = sphi 0, %s43
    %s47 = sphi 0, %s46
    %s63 = sphi 0, %s47
    %s67 = sphi 0, %s67
    %s69 = sphi 0, %s67
    %s70 = sphi 0, %s69
    %s84 = sphi 0, %s70
    %s88 = sphi 0, %s88
    %s90 = sphi 0, %s88
    %s91 = sphi 0, %s90
    %s105 = sphi 0, %s91
    %s111 = sphi 0, %s113
    %s114 = sphi 0, %s111
    %s115 = sphi 0, %s114
    %s131 = sphi 0, %s115
    %s135 = sphi 0, %s135
    %s137 = sphi 0, %s135
    %s138 = sphi 0, %s137
    %s152 = sphi 0, %s138
  $region4: #{sentinel_lstm2_seq.1} parent=0 // loop_header_branch
    %15 = sbr.rel (%p13) target = $region8
  $region5: #{sentinel_lstm2_seq.1} parent=0 // loop_body
    %s17 = ssub.s32 %s12, 1
    %s18 = ssub.s32 %s12, 2
    %s19 = sadd.s32 %s12, 1
    %s21 = sadd.s32 %s20, 1
    %p24 = scmp.eq.s32.totalorder %s12, 1
    %p25 = scmp.ne.s32.totalorder %s20, %s22
    %p26 = scmp.eq.s32.totalorder %s12, 0
    %p27 = por %p25, %p26
    %p28 = scmp.ne.s32.totalorder %s20, %s22
    %p29 = scmp.eq.s32.totalorder %s17, 1
    %p30 = por %p28, %p29
    %p31 = scmp.ne.s32.totalorder %s22, %s23
    %p32 = scmp.eq.s32.totalorder %s17, 0
    %p33 = por %p31, %p32
    %p34 = scmp.ne.s32.totalorder %s22, %s23
    %p35 = scmp.eq.s32.totalorder %s18, 1
    %p36 = por %p34, %p35
    %p38 = scmp.ne.s32.totalorder %s23, %s37
    %p39 = scmp.eq.s32.totalorder %s18, 0
    %p40 = por %p38, %p39
    %s41 = ssub.s32 %s12, %s19
    %p42 = scmp.eq.s32.totalorder %s41, 0
    %s44 = sadd.s32 %s43, 1
    %s45 = scalar_select %p42, %s43, %s44
    %p48 = pneg %p42
    %p49 = scmp.eq.s32.totalorder %s12, 1
    %p50 = por %p48, %p49
    %p51 = scmp.ne.s32.totalorder %s43, %s46
    %p52 = scmp.eq.s32.totalorder %s12, 0
    %p53 = por %p51, %p52
    %p54 = scmp.ne.s32.totalorder %s43, %s46
    %p55 = scmp.eq.s32.totalorder %s17, 1
    %p56 = por %p54, %p55
    %p57 = scmp.ne.s32.totalorder %s46, %s47
    %p58 = scmp.eq.s32.totalorder %s17, 0
    %p59 = por %p57, %p58
    %p60 = scmp.ne.s32.totalorder %s46, %s47
    %p61 = scmp.eq.s32.totalorder %s18, 1
    %p62 = por %p60, %p61
    %p64 = scmp.ne.s32.totalorder %s47, %s63
    %p65 = scmp.eq.s32.totalorder %s18, 0
    %p66 = por %p64, %p65
    %s68 = sadd.s32 %s67, 1
    %p71 = scmp.eq.s32.totalorder %s12, 1
    %p72 = scmp.ne.s32.totalorder %s67, %s69
    %p73 = scmp.eq.s32.totalorder %s12, 0
    %p74 = por %p72, %p73
    %p75 = scmp.ne.s32.totalorder %s67, %s69
    %p76 = scmp.eq.s32.totalorder %s17, 1
    %p77 = por %p75, %p76
    %p78 = scmp.ne.s32.totalorder %s69, %s70
    %p79 = scmp.eq.s32.totalorder %s17, 0
    %p80 = por %p78, %p79
    %p81 = scmp.ne.s32.totalorder %s69, %s70
    %p82 = scmp.eq.s32.totalorder %s18, 1
    %p83 = por %p81, %p82
    %p85 = scmp.ne.s32.totalorder %s70, %s84
    %p86 = scmp.eq.s32.totalorder %s18, 0
    %p87 = por %p85, %p86
    %s89 = sadd.s32 %s88, 1
    %p92 = scmp.eq.s32.totalorder %s12, 1
    %p93 = scmp.ne.s32.totalorder %s88, %s90
    %p94 = scmp.eq.s32.totalorder %s12, 0
    %p95 = por %p93, %p94
    %p96 = scmp.ne.s32.totalorder %s88, %s90
    %p97 = scmp.eq.s32.totalorder %s17, 1
    %p98 = por %p96, %p97
    %p99 = scmp.ne.s32.totalorder %s90, %s91
    %p100 = scmp.eq.s32.totalorder %s17, 0
    %p101 = por %p99, %p100
    %p102 = scmp.ne.s32.totalorder %s90, %s91
    %p103 = scmp.eq.s32.totalorder %s18, 1
    %p104 = por %p102, %p103
    %p106 = scmp.ne.s32.totalorder %s91, %s105
    %p107 = scmp.eq.s32.totalorder %s18, 0
    %p108 = por %p106, %p107
    %s109 = ssub.s32 %s12, %s19
    %p110 = scmp.eq.s32.totalorder %s109, 0
    %s112 = sadd.s32 %s111, 1
    %s113 = scalar_select %p110, %s111, %s112
    %p116 = pneg %p110
    %p117 = scmp.eq.s32.totalorder %s12, 1
    %p118 = por %p116, %p117
    %p119 = scmp.ne.s32.totalorder %s111, %s114
    %p120 = scmp.eq.s32.totalorder %s12, 0
    %p121 = por %p119, %p120
    %p122 = scmp.ne.s32.totalorder %s111, %s114
    %p123 = scmp.eq.s32.totalorder %s17, 1
    %p124 = por %p122, %p123
    %p125 = scmp.ne.s32.totalorder %s114, %s115
    %p126 = scmp.eq.s32.totalorder %s17, 0
    %p127 = por %p125, %p126
    %p128 = scmp.ne.s32.totalorder %s114, %s115
    %p129 = scmp.eq.s32.totalorder %s18, 1
    %p130 = por %p128, %p129
    %p132 = scmp.ne.s32.totalorder %s115, %s131
    %p133 = scmp.eq.s32.totalorder %s18, 0
    %p134 = por %p132, %p133
    %s136 = sadd.s32 %s135, 1
    %p139 = scmp.eq.s32.totalorder %s12, 1
    %p140 = scmp.ne.s32.totalorder %s135, %s137
    %p141 = scmp.eq.s32.totalorder %s12, 0
    %p142 = por %p140, %p141
    %p143 = scmp.ne.s32.totalorder %s135, %s137
    %p144 = scmp.eq.s32.totalorder %s17, 1
    %p145 = por %p143, %p144
    %p146 = scmp.ne.s32.totalorder %s137, %s138
    %p147 = scmp.eq.s32.totalorder %s17, 0
    %p148 = por %p146, %p147
    %p149 = scmp.ne.s32.totalorder %s137, %s138
    %p150 = scmp.eq.s32.totalorder %s18, 1
    %p151 = por %p149, %p150
    %p153 = scmp.ne.s32.totalorder %s138, %s152
    %p154 = scmp.eq.s32.totalorder %s18, 0
    %p155 = por %p153, %p154
    %p156 = scmp.le.s32.totalorder 1, %s12
    %p157 = scmp.lt.s32.totalorder %s12, 3
    %p158 = pnand %p156, %p157
    %p159 = pneg %p158
    // Predicated region
    $region9: #{sentinel_lstm2_seq.1} parent=5 // pred_check
      _
    $region10: #{sentinel_lstm2_seq.1} parent=5 // pred_check_branch
      %161 = sbr.rel (%p158) target = $region12
    $region11: #{sentinel_lstm2_seq.1} parent=5 // pred_region
      %s162 = ssub.s32 %s12, 1
      // Predicated region
      $region13: #{sentinel_lstm2_seq.1} parent=11 // pred_check
        %p163 = pneg %p33
      $region14: #{sentinel_lstm2_seq.1} parent=11 // pred_check_branch
        %165 = sbr.rel (%p163) target = $region16
      $region15: #{sentinel_lstm2_seq.1} parent=11 // pred_region
        _
      $region16: #{sentinel_lstm2_seq.1} parent=11 // pred_fallthru
        _
      // Predicated region
      $region17: #{sentinel_lstm2_seq.1} parent=11 // pred_check
        %p166 = pneg %p80
      $region18: #{sentinel_lstm2_seq.1} parent=11 // pred_check_branch
        %168 = sbr.rel (%p166) target = $region20
      $region19: #{sentinel_lstm2_seq.1} parent=11 // pred_region
        _
      $region20: #{sentinel_lstm2_seq.1} parent=11 // pred_fallthru
        _
      // Predicated region
      $region21: #{sentinel_lstm2_seq.1} parent=11 // pred_check
        %p169 = pneg %p101
      $region22: #{sentinel_lstm2_seq.1} parent=11 // pred_check_branch
        %171 = sbr.rel (%p169) target = $region24
      $region23: #{sentinel_lstm2_seq.1} parent=11 // pred_region
        _
      $region24: #{sentinel_lstm2_seq.1} parent=11 // pred_fallthru
        _
    $region12: #{sentinel_lstm2_seq.1} parent=5 // pred_fallthru
      _
    %p172 = scmp.lt.s32.totalorder %s12, 2
    // Predicated region
    $region25: #{sentinel_lstm2_seq.1} parent=5 // pred_check
      %p173 = pneg %p172
    $region26: #{sentinel_lstm2_seq.1} parent=5 // pred_check_branch
      %175 = sbr.rel (%p173) target = $region28
    $region27: #{sentinel_lstm2_seq.1} parent=5 // pred_region
      // Predicated region
      $region29: #{sentinel_lstm2_seq.1} parent=27 // pred_check
        %p176 = pneg %p53
      $region30: #{sentinel_lstm2_seq.1} parent=27 // pred_check_branch
        %178 = sbr.rel (%p176) target = $region32
      $region31: #{sentinel_lstm2_seq.1} parent=27 // pred_region
        %s179 = smul.u32 8, %s12
        %p180 = scmp.lt.s32.totalorder %s179, 15
        %s181 = scalar_select %p180, %s179, 15
        %s182 = smul.addr %s181, 3
        %s183 = smul.addr %s182, 8
        %s184 = scalar_lea.vmem %s1, %s183
        %s185 = smul.u32 8, %s12
      $region32: #{sentinel_lstm2_seq.1} parent=27 // pred_fallthru
        _
    $region28: #{sentinel_lstm2_seq.1} parent=5 // pred_fallthru
      _
    %p186 = scmp.le.s32.totalorder 1, %s12
    %p187 = scmp.lt.s32.totalorder %s12, 3
    %p188 = pnand %p186, %p187
    %p189 = pneg %p188
    // Predicated region
    $region33: #{sentinel_lstm2_seq.1} parent=5 // pred_check
      _
    $region34: #{sentinel_lstm2_seq.1} parent=5 // pred_check_branch
      %191 = sbr.rel (%p188) target = $region36
    $region35: #{sentinel_lstm2_seq.1} parent=5 // pred_region
      %s192 = ssub.s32 %s12, 1
      %p193 = pneg %p33
      %p194 = pneg %p30
      %s195 = smul.u32 8, %s17
      %p196 = scmp.lt.s32.totalorder %s195, 15
      %s197 = scalar_select %p196, %s195, 15
      %s198 = smul.addr %s197, 3
      %s199 = smul.addr %s198, 8
      %s200 = scalar_lea.vmem %s1, %s199
      %p201 = pneg %p59
      %p202 = pneg %p56
      %p203 = pneg %p80
      %p204 = pneg %p77
      %p205 = pneg %p101
      %p206 = pneg %p98
      %p207 = pneg %p127
      %p208 = pneg %p124
      %s209 = smul.u32 8, %s17
      %p210 = scmp.lt.s32.totalorder %s209, 15
      %s211 = scalar_select %p210, %s209, 15
      %s212 = smul.addr %s211, 8
      %s213 = scalar_lea.vmem %s4, %s212
      %p214 = pneg %p148
      %p215 = pneg %p145
      %s216 = smul.u32 8, %s17
      %p217 = scmp.lt.s32.totalorder %s216, 15
      %s218 = scalar_select %p217, %s216, 15
      %s219 = smul.addr %s218, 3
      %s220 = smul.addr %s219, 8
      %s221 = scalar_lea.vmem %s1, %s220
      %s222 = smul.u32 8, %s17
      %s223 = smul.u32 8, %s17
      %p224 = scmp.lt.s32.totalorder %s223, 15
      %s225 = scalar_select %p224, %s223, 15
      %s226 = smul.addr %s225, 8
      %s227 = scalar_lea.vmem %s4, %s226
      %s228 = smul.u32 8, %s17
      %p229 = scmp.eq.s32.totalorder %s17, 0
      // Predicated region
      $region37: #{sentinel_lstm2_seq.1} parent=35 // pred_check
        %p230 = pneg %p229
      $region38: #{sentinel_lstm2_seq.1} parent=35 // pred_check_branch
        %232 = sbr.rel (%p230) target = $region40
      $region39: #{sentinel_lstm2_seq.1} parent=35 // pred_region
        %v233 = vld [vmem:[%s0] sm:$0xff]
        %234 = vst [vmem:[%s5] sm:$0xff] %v233
      $region40: #{sentinel_lstm2_seq.1} parent=35 // pred_fallthru
        _
      %v235 = vld [vmem:[%s5] sm:$0xff]
      %v236 = vld [vmem:[%s221] sm:$0xff]
      %v237 = vld [vmem:[%s221 + $0x8] sm:$0xff]
      %v238 = vld [vmem:[%s221 + $0x10] sm:$0xff]
      %v239 = vld [vmem:[%s2] sm:$0xff]
      %v240 = vld [vmem:[%s2 + $0x8] sm:$0xff]
      %v241 = vld [vmem:[%s2 + $0x10] sm:$0xff]
      %v242 = vld [vmem:[%s2 + $0x18] sm:$0xff]
      %v243 = vld [vmem:[%s2 + $0x20] sm:$0xff]
      %v244 = vld [vmem:[%s2 + $0x28] sm:$0xff]
      %v245 = vld [vmem:[%s2 + $0x30] sm:$0xff]
      %v246 = vld [vmem:[%s2 + $0x38] sm:$0xff]
      %v247 = vld [vmem:[%s2 + $0x40] sm:$0xff]
      %v248 = vld [vmem:[%s2 + $0x48] sm:$0xff]
      %v249 = vld [vmem:[%s2 + $0x50] sm:$0xff]
      %v250 = vld [vmem:[%s2 + $0x58] sm:$0xff]
      %v251 = vld [vmem:[%s2 + $0x60] sm:$0xff]
      %v252 = vld [vmem:[%s2 + $0x68] sm:$0xff]
      %v253 = vld [vmem:[%s2 + $0x70] sm:$0xff]
      %v254 = vld [vmem:[%s2 + $0x78] sm:$0xff]
      %v255 = vld [vmem:[%s2 + $0x80] sm:$0xff]
      %v256 = vld [vmem:[%s2 + $0x88] sm:$0xff]
      %v257 = vld [vmem:[%s2 + $0x90] sm:$0xff]
      %v258 = vld [vmem:[%s2 + $0x98] sm:$0xff]
      %v259 = vld [vmem:[%s2 + $0xa0] sm:$0xff]
      %v260 = vld [vmem:[%s2 + $0xa8] sm:$0xff]
      %v261 = vld [vmem:[%s2 + $0xb0] sm:$0xff]
      %v262 = vld [vmem:[%s2 + $0xb8] sm:$0xff]
      %vm263 = vcmask 523264
      %v265 = vsel %vm263, %v235, 0
      %267 = vmatpush.msra.mxu0 0.0
      %268 = vmatpush.msra.mxu0 0.0
      %269 = vmatpush.msra.mxu0 0.0
      %270 = vmatpush.msra.mxu0 0.0
      %271 = vmatpush.msra.mxu0 0.0
      %272 = vmatpush.msra.mxu0 0.0
      %273 = vmatpush.msra.mxu0 0.0
      %274 = vmatpush.msra.mxu0 0.0
      %275 = vmatpush.msra.mxu0 %v260
      %276 = vmatpush.msra.mxu0 %v257
      %277 = vmatpush.msra.mxu0 %v254
      %278 = vmatpush.msra.mxu0 %v251
      %279 = vmatpush.msra.mxu0 %v248
      %280 = vmatpush.msra.mxu0 %v245
      %281 = vmatpush.msra.mxu0 %v242
      %282 = vmatpush.msra.mxu0 %v239
      %283 = vmatmul.f32.gmra.mxu0 %v265
      %v284 = vpop.f32.mrf.mxu0
      %v285 = vadd.f32 0.0, %v284
      %286 = vdwg.mxu0
      %287 = vmatpush.msra.mxu0 0.0
      %288 = vmatpush.msra.mxu0 0.0
      %289 = vmatpush.msra.mxu0 0.0
      %290 = vmatpush.msra.mxu0 0.0
      %291 = vmatpush.msra.mxu0 0.0
      %292 = vmatpush.msra.mxu0 0.0
      %293 = vmatpush.msra.mxu0 0.0
      %294 = vmatpush.msra.mxu0 0.0
      %295 = vmatpush.msra.mxu0 %v261
      %296 = vmatpush.msra.mxu0 %v258
      %297 = vmatpush.msra.mxu0 %v255
      %298 = vmatpush.msra.mxu0 %v252
      %299 = vmatpush.msra.mxu0 %v249
      %300 = vmatpush.msra.mxu0 %v246
      %301 = vmatpush.msra.mxu0 %v243
      %302 = vmatpush.msra.mxu0 %v240
      %303 = vmatmul.f32.gmra.mxu0 %v265
      %v304 = vpop.f32.mrf.mxu0
      %v305 = vadd.f32 0.0, %v304
      %306 = vdwg.mxu0
      %307 = vmatpush.msra.mxu0 0.0
      %308 = vmatpush.msra.mxu0 0.0
      %309 = vmatpush.msra.mxu0 0.0
      %310 = vmatpush.msra.mxu0 0.0
      %311 = vmatpush.msra.mxu0 0.0
      %312 = vmatpush.msra.mxu0 0.0
      %313 = vmatpush.msra.mxu0 0.0
      %314 = vmatpush.msra.mxu0 0.0
      %315 = vmatpush.msra.mxu0 %v262
      %316 = vmatpush.msra.mxu0 %v259
      %317 = vmatpush.msra.mxu0 %v256
      %318 = vmatpush.msra.mxu0 %v253
      %319 = vmatpush.msra.mxu0 %v250
      %320 = vmatpush.msra.mxu0 %v247
      %321 = vmatpush.msra.mxu0 %v244
      %322 = vmatpush.msra.mxu0 %v241
      %323 = vmatmul.f32.gmra.mxu0 %v265
      %v324 = vpop.f32.mrf.mxu0
      %v325 = vadd.f32 0.0, %v324
      %326 = vdwg.mxu0
      %v327 = vadd.f32 %v236, %v285
      %v328 = vadd.f32 %v237, %v305
      %v329 = vadd.f32 %v238, %v325
      %v330 = vxor.u32 %v327, 2147483648
      %v331 = vmul.f32 %v330, 1.442695
      %v332 = vpow.pop %v331
      %v333 = vadd.f32 %v332, 1.0
      %v334 = vrcp.pop %v333
      %v335 = vmul.f32 %v333, %v334
      %v336 = vsub.f32 1.0, %v335
      %v337 = vmul.f32 %v334, %v336
      %v338 = vadd.f32 %v334, %v337
      %vm339 = vweird.f32 %v333
      %vm340 = vweird.f32 %v334
      %vm341 = vmor %vm339, %vm340
      %v342 = vsel %vm341, %v334, %v338
      %v343 = vand.u32 2147483647, %v333
      %vm344 = vcmp.eq.f32.partialorder %v343, 8.507059e+37
      %v345 = vand.u32 %v333, 2147483648
      %v346 = vor.u32 1.1754944e-38, %v345
      %v347 = vsel %vm344, %v346, %v342
      %v348 = vmul.f32 1.0, %v347
      %v349 = vtanh.pop %v327
      %350 = vrot.lane.b32.xlu0 %v235, 96
      %v351 = vpop.permute.xlu0 %350
      %v353 = vmul.f32 %v348, %v351
      %355 = vrot.lane.b32.xlu0 %v349, 64
      %v356 = vpop.permute.xlu0 %355
      %v358 = vmul.f32 %v348, %v356
      %360 = vrot.lane.b32.xlu0 %v358, 32
      %v361 = vpop.permute.xlu0 %360
      %v363 = vadd.f32 %v353, %v361
      %v364 = vtanh.pop %v363
      %366 = vrot.lane.b32.xlu0 %v364, 64
      %v367 = vpop.permute.xlu0 %366
      %v369 = vmul.f32 %v348, %v367
      %v370 = vld [vmem:[%s3] sm:$0xff]
      %v371 = vld [vmem:[%s3 + $0x8] sm:$0xff]
      %v372 = vld [vmem:[%s3 + $0x10] sm:$0xff]
      %v373 = vld [vmem:[%s3 + $0x18] sm:$0xff]
      %v374 = vld [vmem:[%s3 + $0x20] sm:$0xff]
      %v375 = vld [vmem:[%s3 + $0x28] sm:$0xff]
      %v376 = vld [vmem:[%s3 + $0x30] sm:$0xff]
      %v377 = vld [vmem:[%s3 + $0x38] sm:$0xff]
      %379 = vrot.lane.b32.xlu0 %v369, 32
      %v380 = vpop.permute.xlu0 %379
      %vm381 = vcmask 261120
      %v382 = vsel %vm381, %v380, 0
      %384 = vmatpush.msra.mxu0 0.0
      %385 = vmatpush.msra.mxu0 0.0
      %386 = vmatpush.msra.mxu0 0.0
      %387 = vmatpush.msra.mxu0 0.0
      %388 = vmatpush.msra.mxu0 0.0
      %389 = vmatpush.msra.mxu0 0.0
      %390 = vmatpush.msra.mxu0 0.0
      %391 = vmatpush.msra.mxu0 0.0
      %392 = vmatpush.msra.mxu0 0.0
      %393 = vmatpush.msra.mxu0 0.0
      %394 = vmatpush.msra.mxu0 0.0
      %395 = vmatpush.msra.mxu0 0.0
      %396 = vmatpush.msra.mxu0 %v376
      %397 = vmatpush.msra.mxu0 %v374
      %398 = vmatpush.msra.mxu0 %v372
      %399 = vmatpush.msra.mxu0 %v370
      %400 = vmatmul.f32.gmra.mxu0 %v382
      %v401 = vpop.f32.mrf.mxu0
      %v402 = vadd.f32 0.0, %v401
      %403 = vdwg.mxu0
      %404 = vmatpush.msra.mxu0 0.0
      %405 = vmatpush.msra.mxu0 0.0
      %406 = vmatpush.msra.mxu0 0.0
      %407 = vmatpush.msra.mxu0 0.0
      %408 = vmatpush.msra.mxu0 0.0
      %409 = vmatpush.msra.mxu0 0.0
      %410 = vmatpush.msra.mxu0 0.0
      %411 = vmatpush.msra.mxu0 0.0
      %412 = vmatpush.msra.mxu0 0.0
      %413 = vmatpush.msra.mxu0 0.0
      %414 = vmatpush.msra.mxu0 0.0
      %415 = vmatpush.msra.mxu0 0.0
      %416 = vmatpush.msra.mxu0 %v377
      %417 = vmatpush.msra.mxu0 %v375
      %418 = vmatpush.msra.mxu0 %v373
      %419 = vmatpush.msra.mxu0 %v371
      %420 = vmatmul.f32.gmra.mxu0 %v382
      %v421 = vpop.f32.mrf.mxu0
      %v422 = vadd.f32 0.0, %v421
      %423 = vdwg.mxu0
      %v424 = vadd.f32 %v328, %v402
      %v425 = vadd.f32 %v329, %v422
      %v426 = vxor.u32 %v424, 2147483648
      %v427 = vmul.f32 %v426, 1.442695
      %v428 = vpow.pop %v427
      %v429 = vadd.f32 %v428, 1.0
      %v430 = vrcp.pop %v429
      %v431 = vmul.f32 %v429, %v430
      %v432 = vsub.f32 1.0, %v431
      %v433 = vmul.f32 %v430, %v432
      %v434 = vadd.f32 %v430, %v433
      %vm435 = vweird.f32 %v429
      %vm436 = vweird.f32 %v430
      %vm437 = vmor %vm435, %vm436
      %v438 = vsel %vm437, %v430, %v434
      %v439 = vand.u32 2147483647, %v429
      %vm440 = vcmp.eq.f32.partialorder %v439, 8.507059e+37
      %v441 = vand.u32 %v429, 2147483648
      %v442 = vor.u32 1.1754944e-38, %v441
      %v443 = vsel %vm440, %v442, %v438
      %v444 = vmul.f32 1.0, %v443
      %v445 = vtanh.pop %v424
      %446 = vrot.lane.b32.xlu0 %v235, 64
      %v447 = vpop.permute.xlu0 %446
      %v449 = vmul.f32 %v444, %v447
      %451 = vrot.lane.b32.xlu0 %v445, 64
      %v452 = vpop.permute.xlu0 %451
      %v454 = vmul.f32 %v444, %v452
      %456 = vrot.lane.b32.xlu0 %v454, 32
      %v457 = vpop.permute.xlu0 %456
      %v459 = vadd.f32 %v449, %v457
      %v460 = vtanh.pop %v459
      %462 = vrot.lane.b32.xlu0 %v460, 64
      %v463 = vpop.permute.xlu0 %462
      %v465 = vmul.f32 %v444, %v463
      %v466 = vxor.u32 %v425, 2147483648
      %v467 = vmul.f32 %v466, 1.442695
      %v468 = vpow.pop %v467
      %v469 = vadd.f32 %v468, 1.0
      %v470 = vrcp.pop %v469
      %v471 = vmul.f32 %v469, %v470
      %v472 = vsub.f32 1.0, %v471
      %v473 = vmul.f32 %v470, %v472
      %v474 = vadd.f32 %v470, %v473
      %vm475 = vweird.f32 %v469
      %vm476 = vweird.f32 %v470
      %vm477 = vmor %vm475, %vm476
      %v478 = vsel %vm477, %v470, %v474
      %v479 = vand.u32 2147483647, %v469
      %vm480 = vcmp.eq.f32.partialorder %v479, 8.507059e+37
      %v481 = vand.u32 %v469, 2147483648
      %v482 = vor.u32 1.1754944e-38, %v481
      %v483 = vsel %vm480, %v482, %v478
      %v484 = vmul.f32 1.0, %v483
      %485 = vrot.lane.b32.xlu0 %v460, 96
      %v486 = vpop.permute.xlu0 %485
      %v488 = vmul.f32 %v484, %v486
      %490 = vrot.lane.b32.xlu0 %v465, 32
      %v491 = vpop.permute.xlu0 %490
      %494 = vrot.lane.b32.xlu0 %v488, 32
      %v495 = vpop.permute.xlu0 %494
      %v497 = vsel %vm381, %v491, %v495
      %498 = vst.msk [vmem:[%s227] sm:$0xff] %vm263, %v497
      %500 = vrot.lane.b32.xlu0 %v465, 64
      %v501 = vpop.permute.xlu0 %500
      %504 = vrot.lane.b32.xlu0 %v363, 32
      %v505 = vpop.permute.xlu0 %504
      %508 = vrot.lane.b32.xlu0 %v459, 64
      %v509 = vpop.permute.xlu0 %508
      %v511 = vsel %vm381, %v380, %v501
      %v512 = vsel %vm263, %v511, %v505
      %vm513 = vcmask 785408
      %v514 = vsel %vm513, %v512, %v509
      %515 = vst [vmem:[%s5] sm:$0xff] %v514
      %v516 = vld [vmem:[%s5] sm:$0xff]
      %s517 = scalar_lea.vmem %s221, 24
      %v518 = vld [vmem:[%s517] sm:$0xff]
      %v519 = vld [vmem:[%s517 + $0x8] sm:$0xff]
      %v520 = vld [vmem:[%s517 + $0x10] sm:$0xff]
      %v521 = vld [vmem:[%s2] sm:$0xff]
      %v522 = vld [vmem:[%s2 + $0x8] sm:$0xff]
      %v523 = vld [vmem:[%s2 + $0x10] sm:$0xff]
      %v524 = vld [vmem:[%s2 + $0x18] sm:$0xff]
      %v525 = vld [vmem:[%s2 + $0x20] sm:$0xff]
      %v526 = vld [vmem:[%s2 + $0x28] sm:$0xff]
      %v527 = vld [vmem:[%s2 + $0x30] sm:$0xff]
      %v528 = vld [vmem:[%s2 + $0x38] sm:$0xff]
      %v529 = vld [vmem:[%s2 + $0x40] sm:$0xff]
      %v530 = vld [vmem:[%s2 + $0x48] sm:$0xff]
      %v531 = vld [vmem:[%s2 + $0x50] sm:$0xff]
      %v532 = vld [vmem:[%s2 + $0x58] sm:$0xff]
      %v533 = vld [vmem:[%s2 + $0x60] sm:$0xff]
      %v534 = vld [vmem:[%s2 + $0x68] sm:$0xff]
      %v535 = vld [vmem:[%s2 + $0x70] sm:$0xff]
      %v536 = vld [vmem:[%s2 + $0x78] sm:$0xff]
      %v537 = vld [vmem:[%s2 + $0x80] sm:$0xff]
      %v538 = vld [vmem:[%s2 + $0x88] sm:$0xff]
      %v539 = vld [vmem:[%s2 + $0x90] sm:$0xff]
      %v540 = vld [vmem:[%s2 + $0x98] sm:$0xff]
      %v541 = vld [vmem:[%s2 + $0xa0] sm:$0xff]
      %v542 = vld [vmem:[%s2 + $0xa8] sm:$0xff]
      %v543 = vld [vmem:[%s2 + $0xb0] sm:$0xff]
      %v544 = vld [vmem:[%s2 + $0xb8] sm:$0xff]
      %v546 = vsel %vm263, %v516, 0
      %548 = vmatpush.msra.mxu0 0.0
      %549 = vmatpush.msra.mxu0 0.0
      %550 = vmatpush.msra.mxu0 0.0
      %551 = vmatpush.msra.mxu0 0.0
      %552 = vmatpush.msra.mxu0 0.0
      %553 = vmatpush.msra.mxu0 0.0
      %554 = vmatpush.msra.mxu0 0.0
      %555 = vmatpush.msra.mxu0 0.0
      %556 = vmatpush.msra.mxu0 %v542
      %557 = vmatpush.msra.mxu0 %v539
      %558 = vmatpush.msra.mxu0 %v536
      %559 = vmatpush.msra.mxu0 %v533
      %560 = vmatpush.msra.mxu0 %v530
      %561 = vmatpush.msra.mxu0 %v527
      %562 = vmatpush.msra.mxu0 %v524
      %563 = vmatpush.msra.mxu0 %v521
      %564 = vmatmul.f32.gmra.mxu0 %v546
      %v565 = vpop.f32.mrf.mxu0
      %v566 = vadd.f32 0.0, %v565
      %567 = vdwg.mxu0
      %568 = vmatpush.msra.mxu0 0.0
      %569 = vmatpush.msra.mxu0 0.0
      %570 = vmatpush.msra.mxu0 0.0
      %571 = vmatpush.msra.mxu0 0.0
      %572 = vmatpush.msra.mxu0 0.0
      %573 = vmatpush.msra.mxu0 0.0
      %574 = vmatpush.msra.mxu0 0.0
      %575 = vmatpush.msra.mxu0 0.0
      %576 = vmatpush.msra.mxu0 %v543
      %577 = vmatpush.msra.mxu0 %v540
      %578 = vmatpush.msra.mxu0 %v537
      %579 = vmatpush.msra.mxu0 %v534
      %580 = vmatpush.msra.mxu0 %v531
      %581 = vmatpush.msra.mxu0 %v528
      %582 = vmatpush.msra.mxu0 %v525
      %583 = vmatpush.msra.mxu0 %v522
      %584 = vmatmul.f32.gmra.mxu0 %v546
      %v585 = vpop.f32.mrf.mxu0
      %v586 = vadd.f32 0.0, %v585
      %587 = vdwg.mxu0
      %588 = vmatpush.msra.mxu0 0.0
      %589 = vmatpush.msra.mxu0 0.0
      %590 = vmatpush.msra.mxu0 0.0
      %591 = vmatpush.msra.mxu0 0.0
      %592 = vmatpush.msra.mxu0 0.0
      %593 = vmatpush.msra.mxu0 0.0
      %594 = vmatpush.msra.mxu0 0.0
      %595 = vmatpush.msra.mxu0 0.0
      %596 = vmatpush.msra.mxu0 %v544
      %597 = vmatpush.msra.mxu0 %v541
      %598 = vmatpush.msra.mxu0 %v538
      %599 = vmatpush.msra.mxu0 %v535
      %600 = vmatpush.msra.mxu0 %v532
      %601 = vmatpush.msra.mxu0 %v529
      %602 = vmatpush.msra.mxu0 %v526
      %603 = vmatpush.msra.mxu0 %v523
      %604 = vmatmul.f32.gmra.mxu0 %v546
      %v605 = vpop.f32.mrf.mxu0
      %v606 = vadd.f32 0.0, %v605
      %607 = vdwg.mxu0
      %v608 = vadd.f32 %v518, %v566
      %v609 = vadd.f32 %v519, %v586
      %v610 = vadd.f32 %v520, %v606
      %v611 = vxor.u32 %v608, 2147483648
      %v612 = vmul.f32 %v611, 1.442695
      %v613 = vpow.pop %v612
      %v614 = vadd.f32 %v613, 1.0
      %v615 = vrcp.pop %v614
      %v616 = vmul.f32 %v614, %v615
      %v617 = vsub.f32 1.0, %v616
      %v618 = vmul.f32 %v615, %v617
      %v619 = vadd.f32 %v615, %v618
      %vm620 = vweird.f32 %v614
      %vm621 = vweird.f32 %v615
      %vm622 = vmor %vm620, %vm621
      %v623 = vsel %vm622, %v615, %v619
      %v624 = vand.u32 2147483647, %v614
      %vm625 = vcmp.eq.f32.partialorder %v624, 8.507059e+37
      %v626 = vand.u32 %v614, 2147483648
      %v627 = vor.u32 1.1754944e-38, %v626
      %v628 = vsel %vm625, %v627, %v623
      %v629 = vmul.f32 1.0, %v628
      %v630 = vtanh.pop %v608
      %631 = vrot.lane.b32.xlu0 %v516, 96
      %v632 = vpop.permute.xlu0 %631
      %v634 = vmul.f32 %v629, %v632
      %636 = vrot.lane.b32.xlu0 %v630, 64
      %v637 = vpop.permute.xlu0 %636
      %v639 = vmul.f32 %v629, %v637
      %641 = vrot.lane.b32.xlu0 %v639, 32
      %v642 = vpop.permute.xlu0 %641
      %v644 = vadd.f32 %v634, %v642
      %v645 = vtanh.pop %v644
      %647 = vrot.lane.b32.xlu0 %v645, 64
      %v648 = vpop.permute.xlu0 %647
      %v650 = vmul.f32 %v629, %v648
      %v651 = vld [vmem:[%s3] sm:$0xff]
      %v652 = vld [vmem:[%s3 + $0x8] sm:$0xff]
      %v653 = vld [vmem:[%s3 + $0x10] sm:$0xff]
      %v654 = vld [vmem:[%s3 + $0x18] sm:$0xff]
      %v655 = vld [vmem:[%s3 + $0x20] sm:$0xff]
      %v656 = vld [vmem:[%s3 + $0x28] sm:$0xff]
      %v657 = vld [vmem:[%s3 + $0x30] sm:$0xff]
      %v658 = vld [vmem:[%s3 + $0x38] sm:$0xff]
      %660 = vrot.lane.b32.xlu0 %v650, 32
      %v661 = vpop.permute.xlu0 %660
      %v662 = vsel %vm381, %v661, 0
      %664 = vmatpush.msra.mxu0 0.0
      %665 = vmatpush.msra.mxu0 0.0
      %666 = vmatpush.msra.mxu0 0.0
      %667 = vmatpush.msra.mxu0 0.0
      %668 = vmatpush.msra.mxu0 0.0
      %669 = vmatpush.msra.mxu0 0.0
      %670 = vmatpush.msra.mxu0 0.0
      %671 = vmatpush.msra.mxu0 0.0
      %672 = vmatpush.msra.mxu0 0.0
      %673 = vmatpush.msra.mxu0 0.0
      %674 = vmatpush.msra.mxu0 0.0
      %675 = vmatpush.msra.mxu0 0.0
      %676 = vmatpush.msra.mxu0 %v657
      %677 = vmatpush.msra.mxu0 %v655
      %678 = vmatpush.msra.mxu0 %v653
      %679 = vmatpush.msra.mxu0 %v651
      %680 = vmatmul.f32.gmra.mxu0 %v662
      %v681 = vpop.f32.mrf.mxu0
      %v682 = vadd.f32 0.0, %v681
      %683 = vdwg.mxu0
      %684 = vmatpush.msra.mxu0 0.0
      %685 = vmatpush.msra.mxu0 0.0
      %686 = vmatpush.msra.mxu0 0.0
      %687 = vmatpush.msra.mxu0 0.0
      %688 = vmatpush.msra.mxu0 0.0
      %689 = vmatpush.msra.mxu0 0.0
      %690 = vmatpush.msra.mxu0 0.0
      %691 = vmatpush.msra.mxu0 0.0
      %692 = vmatpush.msra.mxu0 0.0
      %693 = vmatpush.msra.mxu0 0.0
      %694 = vmatpush.msra.mxu0 0.0
      %695 = vmatpush.msra.mxu0 0.0
      %696 = vmatpush.msra.mxu0 %v658
      %697 = vmatpush.msra.mxu0 %v656
      %698 = vmatpush.msra.mxu0 %v654
      %699 = vmatpush.msra.mxu0 %v652
      %700 = vmatmul.f32.gmra.mxu0 %v662
      %v701 = vpop.f32.mrf.mxu0
      %v702 = vadd.f32 0.0, %v701
      %703 = vdwg.mxu0
      %v704 = vadd.f32 %v609, %v682
      %v705 = vadd.f32 %v610, %v702
      %v706 = vxor.u32 %v704, 2147483648
      %v707 = vmul.f32 %v706, 1.442695
      %v708 = vpow.pop %v707
      %v709 = vadd.f32 %v708, 1.0
      %v710 = vrcp.pop %v709
      %v711 = vmul.f32 %v709, %v710
      %v712 = vsub.f32 1.0, %v711
      %v713 = vmul.f32 %v710, %v712
      %v714 = vadd.f32 %v710, %v713
      %vm715 = vweird.f32 %v709
      %vm716 = vweird.f32 %v710
      %vm717 = vmor %vm715, %vm716
      %v718 = vsel %vm717, %v710, %v714
      %v719 = vand.u32 2147483647, %v709
      %vm720 = vcmp.eq.f32.partialorder %v719, 8.507059e+37
      %v721 = vand.u32 %v709, 2147483648
      %v722 = vor.u32 1.1754944e-38, %v721
      %v723 = vsel %vm720, %v722, %v718
      %v724 = vmul.f32 1.0, %v723
      %v725 = vtanh.pop %v704
      %726 = vrot.lane.b32.xlu0 %v516, 64
      %v727 = vpop.permute.xlu0 %726
      %v729 = vmul.f32 %v724, %v727
      %731 = vrot.lane.b32.xlu0 %v725, 64
      %v732 = vpop.permute.xlu0 %731
      %v734 = vmul.f32 %v724, %v732
      %736 = vrot.lane.b32.xlu0 %v734, 32
      %v737 = vpop.permute.xlu0 %736
      %v739 = vadd.f32 %v729, %v737
      %v740 = vtanh.pop %v739
      %742 = vrot.lane.b32.xlu0 %v740, 64
      %v743 = vpop.permute.xlu0 %742
      %v745 = vmul.f32 %v724, %v743
      %v746 = vxor.u32 %v705, 2147483648
      %v747 = vmul.f32 %v746, 1.442695
      %v748 = vpow.pop %v747
      %v749 = vadd.f32 %v748, 1.0
      %v750 = vrcp.pop %v749
      %v751 = vmul.f32 %v749, %v750
      %v752 = vsub.f32 1.0, %v751
      %v753 = vmul.f32 %v750, %v752
      %v754 = vadd.f32 %v750, %v753
      %vm755 = vweird.f32 %v749
      %vm756 = vweird.f32 %v750
      %vm757 = vmor %vm755, %vm756
      %v758 = vsel %vm757, %v750, %v754
      %v759 = vand.u32 2147483647, %v749
      %vm760 = vcmp.eq.f32.partialorder %v759, 8.507059e+37
      %v761 = vand.u32 %v749, 2147483648
      %v762 = vor.u32 1.1754944e-38, %v761
      %v763 = vsel %vm760, %v762, %v758
      %v764 = vmul.f32 1.0, %v763
      %765 = vrot.lane.b32.xlu0 %v740, 96
      %v766 = vpop.permute.xlu0 %765
      %v768 = vmul.f32 %v764, %v766
      %770 = vrot.lane.b32.xlu0 %v745, 32
      %v771 = vpop.permute.xlu0 %770
      %774 = vrot.lane.b32.xlu0 %v768, 32
      %v775 = vpop.permute.xlu0 %774
      %v777 = vsel %vm381, %v771, %v775
      %s778 = scalar_lea.vmem %s227, 8
      %779 = vst.msk [vmem:[%s778] sm:$0xff] %vm263, %v777
      %781 = vrot.lane.b32.xlu0 %v745, 64
      %v782 = vpop.permute.xlu0 %781
      %785 = vrot.lane.b32.xlu0 %v644, 32
      %v786 = vpop.permute.xlu0 %785
      %789 = vrot.lane.b32.xlu0 %v739, 64
      %v790 = vpop.permute.xlu0 %789
      %v792 = vsel %vm381, %v661, %v782
      %v793 = vsel %vm263, %v792, %v786
      %v794 = vsel %vm513, %v793, %v790
      %795 = vst [vmem:[%s5] sm:$0xff] %v794
      %v796 = vld [vmem:[%s5] sm:$0xff]
      %s797 = scalar_lea.vmem %s221, 48
      %v798 = vld [vmem:[%s797] sm:$0xff]
      %v799 = vld [vmem:[%s797 + $0x8] sm:$0xff]
      %v800 = vld [vmem:[%s797 + $0x10] sm:$0xff]
      %v801 = vld [vmem:[%s2] sm:$0xff]
      %v802 = vld [vmem:[%s2 + $0x8] sm:$0xff]
      %v803 = vld [vmem:[%s2 + $0x10] sm:$0xff]
      %v804 = vld [vmem:[%s2 + $0x18] sm:$0xff]
      %v805 = vld [vmem:[%s2 + $0x20] sm:$0xff]
      %v806 = vld [vmem:[%s2 + $0x28] sm:$0xff]
      %v807 = vld [vmem:[%s2 + $0x30] sm:$0xff]
      %v808 = vld [vmem:[%s2 + $0x38] sm:$0xff]
      %v809 = vld [vmem:[%s2 + $0x40] sm:$0xff]
      %v810 = vld [vmem:[%s2 + $0x48] sm:$0xff]
      %v811 = vld [vmem:[%s2 + $0x50] sm:$0xff]
      %v812 = vld [vmem:[%s2 + $0x58] sm:$0xff]
      %v813 = vld [vmem:[%s2 + $0x60] sm:$0xff]
      %v814 = vld [vmem:[%s2 + $0x68] sm:$0xff]
      %v815 = vld [vmem:[%s2 + $0x70] sm:$0xff]
      %v816 = vld [vmem:[%s2 + $0x78] sm:$0xff]
      %v817 = vld [vmem:[%s2 + $0x80] sm:$0xff]
      %v818 = vld [vmem:[%s2 + $0x88] sm:$0xff]
      %v819 = vld [vmem:[%s2 + $0x90] sm:$0xff]
      %v820 = vld [vmem:[%s2 + $0x98] sm:$0xff]
      %v821 = vld [vmem:[%s2 + $0xa0] sm:$0xff]
      %v822 = vld [vmem:[%s2 + $0xa8] sm:$0xff]
      %v823 = vld [vmem:[%s2 + $0xb0] sm:$0xff]
      %v824 = vld [vmem:[%s2 + $0xb8] sm:$0xff]
      %v826 = vsel %vm263, %v796, 0
      %828 = vmatpush.msra.mxu0 0.0
      %829 = vmatpush.msra.mxu0 0.0
      %830 = vmatpush.msra.mxu0 0.0
      %831 = vmatpush.msra.mxu0 0.0
      %832 = vmatpush.msra.mxu0 0.0
      %833 = vmatpush.msra.mxu0 0.0
      %834 = vmatpush.msra.mxu0 0.0
      %835 = vmatpush.msra.mxu0 0.0
      %836 = vmatpush.msra.mxu0 %v822
      %837 = vmatpush.msra.mxu0 %v819
      %838 = vmatpush.msra.mxu0 %v816
      %839 = vmatpush.msra.mxu0 %v813
      %840 = vmatpush.msra.mxu0 %v810
      %841 = vmatpush.msra.mxu0 %v807
      %842 = vmatpush.msra.mxu0 %v804
      %843 = vmatpush.msra.mxu0 %v801
      %844 = vmatmul.f32.gmra.mxu0 %v826
      %v845 = vpop.f32.mrf.mxu0
      %v846 = vadd.f32 0.0, %v845
      %847 = vdwg.mxu0
      %848 = vmatpush.msra.mxu0 0.0
      %849 = vmatpush.msra.mxu0 0.0
      %850 = vmatpush.msra.mxu0 0.0
      %851 = vmatpush.msra.mxu0 0.0
      %852 = vmatpush.msra.mxu0 0.0
      %853 = vmatpush.msra.mxu0 0.0
      %854 = vmatpush.msra.mxu0 0.0
      %855 = vmatpush.msra.mxu0 0.0
      %856 = vmatpush.msra.mxu0 %v823
      %857 = vmatpush.msra.mxu0 %v820
      %858 = vmatpush.msra.mxu0 %v817
      %859 = vmatpush.msra.mxu0 %v814
      %860 = vmatpush.msra.mxu0 %v811
      %861 = vmatpush.msra.mxu0 %v808
      %862 = vmatpush.msra.mxu0 %v805
      %863 = vmatpush.msra.mxu0 %v802
      %864 = vmatmul.f32.gmra.mxu0 %v826
      %v865 = vpop.f32.mrf.mxu0
      %v866 = vadd.f32 0.0, %v865
      %867 = vdwg.mxu0
      %868 = vmatpush.msra.mxu0 0.0
      %869 = vmatpush.msra.mxu0 0.0
      %870 = vmatpush.msra.mxu0 0.0
      %871 = vmatpush.msra.mxu0 0.0
      %872 = vmatpush.msra.mxu0 0.0
      %873 = vmatpush.msra.mxu0 0.0
      %874 = vmatpush.msra.mxu0 0.0
      %875 = vmatpush.msra.mxu0 0.0
      %876 = vmatpush.msra.mxu0 %v824
      %877 = vmatpush.msra.mxu0 %v821
      %878 = vmatpush.msra.mxu0 %v818
      %879 = vmatpush.msra.mxu0 %v815
      %880 = vmatpush.msra.mxu0 %v812
      %881 = vmatpush.msra.mxu0 %v809
      %882 = vmatpush.msra.mxu0 %v806
      %883 = vmatpush.msra.mxu0 %v803
      %884 = vmatmul.f32.gmra.mxu0 %v826
      %v885 = vpop.f32.mrf.mxu0
      %v886 = vadd.f32 0.0, %v885
      %887 = vdwg.mxu0
      %v888 = vadd.f32 %v798, %v846
      %v889 = vadd.f32 %v799, %v866
      %v890 = vadd.f32 %v800, %v886
      %v891 = vxor.u32 %v888, 2147483648
      %v892 = vmul.f32 %v891, 1.442695
      %v893 = vpow.pop %v892
      %v894 = vadd.f32 %v893, 1.0
      %v895 = vrcp.pop %v894
      %v896 = vmul.f32 %v894, %v895
      %v897 = vsub.f32 1.0, %v896
      %v898 = vmul.f32 %v895, %v897
      %v899 = vadd.f32 %v895, %v898
      %vm900 = vweird.f32 %v894
      %vm901 = vweird.f32 %v895
      %vm902 = vmor %vm900, %vm901
      %v903 = vsel %vm902, %v895, %v899
      %v904 = vand.u32 2147483647, %v894
      %vm905 = vcmp.eq.f32.partialorder %v904, 8.507059e+37
      %v906 = vand.u32 %v894, 2147483648
      %v907 = vor.u32 1.1754944e-38, %v906
      %v908 = vsel %vm905, %v907, %v903
      %v909 = vmul.f32 1.0, %v908
      %v910 = vtanh.pop %v888
      %911 = vrot.lane.b32.xlu0 %v796, 96
      %v912 = vpop.permute.xlu0 %911
      %v914 = vmul.f32 %v909, %v912
      %916 = vrot.lane.b32.xlu0 %v910, 64
      %v917 = vpop.permute.xlu0 %916
      %v919 = vmul.f32 %v909, %v917
      %921 = vrot.lane.b32.xlu0 %v919, 32
      %v922 = vpop.permute.xlu0 %921
      %v924 = vadd.f32 %v914, %v922
      %v925 = vtanh.pop %v924
      %927 = vrot.lane.b32.xlu0 %v925, 64
      %v928 = vpop.permute.xlu0 %927
      %v930 = vmul.f32 %v909, %v928
      %v931 = vld [vmem:[%s3] sm:$0xff]
      %v932 = vld [vmem:[%s3 + $0x8] sm:$0xff]
      %v933 = vld [vmem:[%s3 + $0x10] sm:$0xff]
      %v934 = vld [vmem:[%s3 + $0x18] sm:$0xff]
      %v935 = vld [vmem:[%s3 + $0x20] sm:$0xff]
      %v936 = vld [vmem:[%s3 + $0x28] sm:$0xff]
      %v937 = vld [vmem:[%s3 + $0x30] sm:$0xff]
      %v938 = vld [vmem:[%s3 + $0x38] sm:$0xff]
      %940 = vrot.lane.b32.xlu0 %v930, 32
      %v941 = vpop.permute.xlu0 %940
      %v942 = vsel %vm381, %v941, 0
      %944 = vmatpush.msra.mxu0 0.0
      %945 = vmatpush.msra.mxu0 0.0
      %946 = vmatpush.msra.mxu0 0.0
      %947 = vmatpush.msra.mxu0 0.0
      %948 = vmatpush.msra.mxu0 0.0
      %949 = vmatpush.msra.mxu0 0.0
      %950 = vmatpush.msra.mxu0 0.0
      %951 = vmatpush.msra.mxu0 0.0
      %952 = vmatpush.msra.mxu0 0.0
      %953 = vmatpush.msra.mxu0 0.0
      %954 = vmatpush.msra.mxu0 0.0
      %955 = vmatpush.msra.mxu0 0.0
      %956 = vmatpush.msra.mxu0 %v937
      %957 = vmatpush.msra.mxu0 %v935
      %958 = vmatpush.msra.mxu0 %v933
      %959 = vmatpush.msra.mxu0 %v931
      %960 = vmatmul.f32.gmra.mxu0 %v942
      %v961 = vpop.f32.mrf.mxu0
      %v962 = vadd.f32 0.0, %v961
      %963 = vdwg.mxu0
      %964 = vmatpush.msra.mxu0 0.0
      %965 = vmatpush.msra.mxu0 0.0
      %966 = vmatpush.msra.mxu0 0.0
      %967 = vmatpush.msra.mxu0 0.0
      %968 = vmatpush.msra.mxu0 0.0
      %969 = vmatpush.msra.mxu0 0.0
      %970 = vmatpush.msra.mxu0 0.0
      %971 = vmatpush.msra.mxu0 0.0
      %972 = vmatpush.msra.mxu0 0.0
      %973 = vmatpush.msra.mxu0 0.0
      %974 = vmatpush.msra.mxu0 0.0
      %975 = vmatpush.msra.mxu0 0.0
      %976 = vmatpush.msra.mxu0 %v938
      %977 = vmatpush.msra.mxu0 %v936
      %978 = vmatpush.msra.mxu0 %v934
      %979 = vmatpush.msra.mxu0 %v932
      %980 = vmatmul.f32.gmra.mxu0 %v942
      %v981 = vpop.f32.mrf.mxu0
      %v982 = vadd.f32 0.0, %v981
      %983 = vdwg.mxu0
      %v984 = vadd.f32 %v889, %v962
      %v985 = vadd.f32 %v890, %v982
      %v986 = vxor.u32 %v984, 2147483648
      %v987 = vmul.f32 %v986, 1.442695
      %v988 = vpow.pop %v987
      %v989 = vadd.f32 %v988, 1.0
      %v990 = vrcp.pop %v989
      %v991 = vmul.f32 %v989, %v990
      %v992 = vsub.f32 1.0, %v991
      %v993 = vmul.f32 %v990, %v992
      %v994 = vadd.f32 %v990, %v993
      %vm995 = vweird.f32 %v989
      %vm996 = vweird.f32 %v990
      %vm997 = vmor %vm995, %vm996
      %v998 = vsel %vm997, %v990, %v994
      %v999 = vand.u32 2147483647, %v989
      %vm1000 = vcmp.eq.f32.partialorder %v999, 8.507059e+37
      %v1001 = vand.u32 %v989, 2147483648
      %v1002 = vor.u32 1.1754944e-38, %v1001
      %v1003 = vsel %vm1000, %v1002, %v998
      %v1004 = vmul.f32 1.0, %v1003
      %v1005 = vtanh.pop %v984
      %1006 = vrot.lane.b32.xlu0 %v796, 64
      %v1007 = vpop.permute.xlu0 %1006
      %v1009 = vmul.f32 %v1004, %v1007
      %1011 = vrot.lane.b32.xlu0 %v1005, 64
      %v1012 = vpop.permute.xlu0 %1011
      %v1014 = vmul.f32 %v1004, %v1012
      %1016 = vrot.lane.b32.xlu0 %v1014, 32
      %v1017 = vpop.permute.xlu0 %1016
      %v1019 = vadd.f32 %v1009, %v1017
      %v1020 = vtanh.pop %v1019
      %1022 = vrot.lane.b32.xlu0 %v1020, 64
      %v1023 = vpop.permute.xlu0 %1022
      %v1025 = vmul.f32 %v1004, %v1023
      %v1026 = vxor.u32 %v985, 2147483648
      %v1027 = vmul.f32 %v1026, 1.442695
      %v1028 = vpow.pop %v1027
      %v1029 = vadd.f32 %v1028, 1.0
      %v1030 = vrcp.pop %v1029
      %v1031 = vmul.f32 %v1029, %v1030
      %v1032 = vsub.f32 1.0, %v1031
      %v1033 = vmul.f32 %v1030, %v1032
      %v1034 = vadd.f32 %v1030, %v1033
      %vm1035 = vweird.f32 %v1029
      %vm1036 = vweird.f32 %v1030
      %vm1037 = vmor %vm1035, %vm1036
      %v1038 = vsel %vm1037, %v1030, %v1034
      %v1039 = vand.u32 2147483647, %v1029
      %vm1040 = vcmp.eq.f32.partialorder %v1039, 8.507059e+37
      %v1041 = vand.u32 %v1029, 2147483648
      %v1042 = vor.u32 1.1754944e-38, %v1041
      %v1043 = vsel %vm1040, %v1042, %v1038
      %v1044 = vmul.f32 1.0, %v1043
      %1045 = vrot.lane.b32.xlu0 %v1020, 96
      %v1046 = vpop.permute.xlu0 %1045
      %v1048 = vmul.f32 %v1044, %v1046
      %1050 = vrot.lane.b32.xlu0 %v1025, 32
      %v1051 = vpop.permute.xlu0 %1050
      %1054 = vrot.lane.b32.xlu0 %v1048, 32
      %v1055 = vpop.permute.xlu0 %1054
      %v1057 = vsel %vm381, %v1051, %v1055
      %s1058 = scalar_lea.vmem %s227, 16
      %1059 = vst.msk [vmem:[%s1058] sm:$0xff] %vm263, %v1057
      %1061 = vrot.lane.b32.xlu0 %v1025, 64
      %v1062 = vpop.permute.xlu0 %1061
      %1065 = vrot.lane.b32.xlu0 %v924, 32
      %v1066 = vpop.permute.xlu0 %1065
      %1069 = vrot.lane.b32.xlu0 %v1019, 64
      %v1070 = vpop.permute.xlu0 %1069
      %v1072 = vsel %vm381, %v941, %v1062
      %v1073 = vsel %vm263, %v1072, %v1066
      %v1074 = vsel %vm513, %v1073, %v1070
      %1075 = vst [vmem:[%s5] sm:$0xff] %v1074
      %v1076 = vld [vmem:[%s5] sm:$0xff]
      %s1077 = scalar_lea.vmem %s221, 72
      %v1078 = vld [vmem:[%s1077] sm:$0xff]
      %v1079 = vld [vmem:[%s1077 + $0x8] sm:$0xff]
      %v1080 = vld [vmem:[%s1077 + $0x10] sm:$0xff]
      %v1081 = vld [vmem:[%s2] sm:$0xff]
      %v1082 = vld [vmem:[%s2 + $0x8] sm:$0xff]
      %v1083 = vld [vmem:[%s2 + $0x10] sm:$0xff]
      %v1084 = vld [vmem:[%s2 + $0x18] sm:$0xff]
      %v1085 = vld [vmem:[%s2 + $0x20] sm:$0xff]
      %v1086 = vld [vmem:[%s2 + $0x28] sm:$0xff]
      %v1087 = vld [vmem:[%s2 + $0x30] sm:$0xff]
      %v1088 = vld [vmem:[%s2 + $0x38] sm:$0xff]
      %v1089 = vld [vmem:[%s2 + $0x40] sm:$0xff]
      %v1090 = vld [vmem:[%s2 + $0x48] sm:$0xff]
      %v1091 = vld [vmem:[%s2 + $0x50] sm:$0xff]
      %v1092 = vld [vmem:[%s2 + $0x58] sm:$0xff]
      %v1093 = vld [vmem:[%s2 + $0x60] sm:$0xff]
      %v1094 = vld [vmem:[%s2 + $0x68] sm:$0xff]
      %v1095 = vld [vmem:[%s2 + $0x70] sm:$0xff]
      %v1096 = vld [vmem:[%s2 + $0x78] sm:$0xff]
      %v1097 = vld [vmem:[%s2 + $0x80] sm:$0xff]
      %v1098 = vld [vmem:[%s2 + $0x88] sm:$0xff]
      %v1099 = vld [vmem:[%s2 + $0x90] sm:$0xff]
      %v1100 = vld [vmem:[%s2 + $0x98] sm:$0xff]
      %v1101 = vld [vmem:[%s2 + $0xa0] sm:$0xff]
      %v1102 = vld [vmem:[%s2 + $0xa8] sm:$0xff]
      %v1103 = vld [vmem:[%s2 + $0xb0] sm:$0xff]
      %v1104 = vld [vmem:[%s2 + $0xb8] sm:$0xff]
      %v1106 = vsel %vm263, %v1076, 0
      %1108 = vmatpush.msra.mxu0 0.0
      %1109 = vmatpush.msra.mxu0 0.0
      %1110 = vmatpush.msra.mxu0 0.0
      %1111 = vmatpush.msra.mxu0 0.0
      %1112 = vmatpush.msra.mxu0 0.0
      %1113 = vmatpush.msra.mxu0 0.0
      %1114 = vmatpush.msra.mxu0 0.0
      %1115 = vmatpush.msra.mxu0 0.0
      %1116 = vmatpush.msra.mxu0 %v1102
      %1117 = vmatpush.msra.mxu0 %v1099
      %1118 = vmatpush.msra.mxu0 %v1096
      %1119 = vmatpush.msra.mxu0 %v1093
      %1120 = vmatpush.msra.mxu0 %v1090
      %1121 = vmatpush.msra.mxu0 %v1087
      %1122 = vmatpush.msra.mxu0 %v1084
      %1123 = vmatpush.msra.mxu0 %v1081
      %1124 = vmatmul.f32.gmra.mxu0 %v1106
      %v1125 = vpop.f32.mrf.mxu0
      %v1126 = vadd.f32 0.0, %v1125
      %1127 = vdwg.mxu0
      %1128 = vmatpush.msra.mxu0 0.0
      %1129 = vmatpush.msra.mxu0 0.0
      %1130 = vmatpush.msra.mxu0 0.0
      %1131 = vmatpush.msra.mxu0 0.0
      %1132 = vmatpush.msra.mxu0 0.0
      %1133 = vmatpush.msra.mxu0 0.0
      %1134 = vmatpush.msra.mxu0 0.0
      %1135 = vmatpush.msra.mxu0 0.0
      %1136 = vmatpush.msra.mxu0 %v1103
      %1137 = vmatpush.msra.mxu0 %v1100
      %1138 = vmatpush.msra.mxu0 %v1097
      %1139 = vmatpush.msra.mxu0 %v1094
      %1140 = vmatpush.msra.mxu0 %v1091
      %1141 = vmatpush.msra.mxu0 %v1088
      %1142 = vmatpush.msra.mxu0 %v1085
      %1143 = vmatpush.msra.mxu0 %v1082
      %1144 = vmatmul.f32.gmra.mxu0 %v1106
      %v1145 = vpop.f32.mrf.mxu0
      %v1146 = vadd.f32 0.0, %v1145
      %1147 = vdwg.mxu0
      %1148 = vmatpush.msra.mxu0 0.0
      %1149 = vmatpush.msra.mxu0 0.0
      %1150 = vmatpush.msra.mxu0 0.0
      %1151 = vmatpush.msra.mxu0 0.0
      %1152 = vmatpush.msra.mxu0 0.0
      %1153 = vmatpush.msra.mxu0 0.0
      %1154 = vmatpush.msra.mxu0 0.0
      %1155 = vmatpush.msra.mxu0 0.0
      %1156 = vmatpush.msra.mxu0 %v1104
      %1157 = vmatpush.msra.mxu0 %v1101
      %1158 = vmatpush.msra.mxu0 %v1098
      %1159 = vmatpush.msra.mxu0 %v1095
      %1160 = vmatpush.msra.mxu0 %v1092
      %1161 = vmatpush.msra.mxu0 %v1089
      %1162 = vmatpush.msra.mxu0 %v1086
      %1163 = vmatpush.msra.mxu0 %v1083
      %1164 = vmatmul.f32.gmra.mxu0 %v1106
      %v1165 = vpop.f32.mrf.mxu0
      %v1166 = vadd.f32 0.0, %v1165
      %1167 = vdwg.mxu0
      %v1168 = vadd.f32 %v1078, %v1126
      %v1169 = vadd.f32 %v1079, %v1146
      %v1170 = vadd.f32 %v1080, %v1166
      %v1171 = vxor.u32 %v1168, 2147483648
      %v1172 = vmul.f32 %v1171, 1.442695
      %v1173 = vpow.pop %v1172
      %v1174 = vadd.f32 %v1173, 1.0
      %v1175 = vrcp.pop %v1174
      %v1176 = vmul.f32 %v1174, %v1175
      %v1177 = vsub.f32 1.0, %v1176
      %v1178 = vmul.f32 %v1175, %v1177
      %v1179 = vadd.f32 %v1175, %v1178
      %vm1180 = vweird.f32 %v1174
      %vm1181 = vweird.f32 %v1175
      %vm1182 = vmor %vm1180, %vm1181
      %v1183 = vsel %vm1182, %v1175, %v1179
      %v1184 = vand.u32 2147483647, %v1174
      %vm1185 = vcmp.eq.f32.partialorder %v1184, 8.507059e+37
      %v1186 = vand.u32 %v1174, 2147483648
      %v1187 = vor.u32 1.1754944e-38, %v1186
      %v1188 = vsel %vm1185, %v1187, %v1183
      %v1189 = vmul.f32 1.0, %v1188
      %v1190 = vtanh.pop %v1168
      %1191 = vrot.lane.b32.xlu0 %v1076, 96
      %v1192 = vpop.permute.xlu0 %1191
      %v1194 = vmul.f32 %v1189, %v1192
      %1196 = vrot.lane.b32.xlu0 %v1190, 64
      %v1197 = vpop.permute.xlu0 %1196
      %v1199 = vmul.f32 %v1189, %v1197
      %1201 = vrot.lane.b32.xlu0 %v1199, 32
      %v1202 = vpop.permute.xlu0 %1201
      %v1204 = vadd.f32 %v1194, %v1202
      %v1205 = vtanh.pop %v1204
      %1207 = vrot.lane.b32.xlu0 %v1205, 64
      %v1208 = vpop.permute.xlu0 %1207
      %v1210 = vmul.f32 %v1189, %v1208
      %v1211 = vld [vmem:[%s3] sm:$0xff]
      %v1212 = vld [vmem:[%s3 + $0x8] sm:$0xff]
      %v1213 = vld [vmem:[%s3 + $0x10] sm:$0xff]
      %v1214 = vld [vmem:[%s3 + $0x18] sm:$0xff]
      %v1215 = vld [vmem:[%s3 + $0x20] sm:$0xff]
      %v1216 = vld [vmem:[%s3 + $0x28] sm:$0xff]
      %v1217 = vld [vmem:[%s3 + $0x30] sm:$0xff]
      %v1218 = vld [vmem:[%s3 + $0x38] sm:$0xff]
      %1220 = vrot.lane.b32.xlu0 %v1210, 32
      %v1221 = vpop.permute.xlu0 %1220
      %v1222 = vsel %vm381, %v1221, 0
      %1224 = vmatpush.msra.mxu0 0.0
      %1225 = vmatpush.msra.mxu0 0.0
      %1226 = vmatpush.msra.mxu0 0.0
      %1227 = vmatpush.msra.mxu0 0.0
      %1228 = vmatpush.msra.mxu0 0.0
      %1229 = vmatpush.msra.mxu0 0.0
      %1230 = vmatpush.msra.mxu0 0.0
      %1231 = vmatpush.msra.mxu0 0.0
      %1232 = vmatpush.msra.mxu0 0.0
      %1233 = vmatpush.msra.mxu0 0.0
      %1234 = vmatpush.msra.mxu0 0.0
      %1235 = vmatpush.msra.mxu0 0.0
      %1236 = vmatpush.msra.mxu0 %v1217
      %1237 = vmatpush.msra.mxu0 %v1215
      %1238 = vmatpush.msra.mxu0 %v1213
      %1239 = vmatpush.msra.mxu0 %v1211
      %1240 = vmatmul.f32.gmra.mxu0 %v1222
      %v1241 = vpop.f32.mrf.mxu0
      %v1242 = vadd.f32 0.0, %v1241
      %1243 = vdwg.mxu0
      %1244 = vmatpush.msra.mxu0 0.0
      %1245 = vmatpush.msra.mxu0 0.0
      %1246 = vmatpush.msra.mxu0 0.0
      %1247 = vmatpush.msra.mxu0 0.0
      %1248 = vmatpush.msra.mxu0 0.0
      %1249 = vmatpush.msra.mxu0 0.0
      %1250 = vmatpush.msra.mxu0 0.0
      %1251 = vmatpush.msra.mxu0 0.0
      %1252 = vmatpush.msra.mxu0 0.0
      %1253 = vmatpush.msra.mxu0 0.0
      %1254 = vmatpush.msra.mxu0 0.0
      %1255 = vmatpush.msra.mxu0 0.0
      %1256 = vmatpush.msra.mxu0 %v1218
      %1257 = vmatpush.msra.mxu0 %v1216
      %1258 = vmatpush.msra.mxu0 %v1214
      %1259 = vmatpush.msra.mxu0 %v1212
      %1260 = vmatmul.f32.gmra.mxu0 %v1222
      %v1261 = vpop.f32.mrf.mxu0
      %v1262 = vadd.f32 0.0, %v1261
      %1263 = vdwg.mxu0
      %v1264 = vadd.f32 %v1169, %v1242
      %v1265 = vadd.f32 %v1170, %v1262
      %v1266 = vxor.u32 %v1264, 2147483648
      %v1267 = vmul.f32 %v1266, 1.442695
      %v1268 = vpow.pop %v1267
      %v1269 = vadd.f32 %v1268, 1.0
      %v1270 = vrcp.pop %v1269
      %v1271 = vmul.f32 %v1269, %v1270
      %v1272 = vsub.f32 1.0, %v1271
      %v1273 = vmul.f32 %v1270, %v1272
      %v1274 = vadd.f32 %v1270, %v1273
      %vm1275 = vweird.f32 %v1269
      %vm1276 = vweird.f32 %v1270
      %vm1277 = vmor %vm1275, %vm1276
      %v1278 = vsel %vm1277, %v1270, %v1274
      %v1279 = vand.u32 2147483647, %v1269
      %vm1280 = vcmp.eq.f32.partialorder %v1279, 8.507059e+37
      %v1281 = vand.u32 %v1269, 2147483648
      %v1282 = vor.u32 1.1754944e-38, %v1281
      %v1283 = vsel %vm1280, %v1282, %v1278
      %v1284 = vmul.f32 1.0, %v1283
      %v1285 = vtanh.pop %v1264
      %1286 = vrot.lane.b32.xlu0 %v1076, 64
      %v1287 = vpop.permute.xlu0 %1286
      %v1289 = vmul.f32 %v1284, %v1287
      %1291 = vrot.lane.b32.xlu0 %v1285, 64
      %v1292 = vpop.permute.xlu0 %1291
      %v1294 = vmul.f32 %v1284, %v1292
      %1296 = vrot.lane.b32.xlu0 %v1294, 32
      %v1297 = vpop.permute.xlu0 %1296
      %v1299 = vadd.f32 %v1289, %v1297
      %v1300 = vtanh.pop %v1299
      %1302 = vrot.lane.b32.xlu0 %v1300, 64
      %v1303 = vpop.permute.xlu0 %1302
      %v1305 = vmul.f32 %v1284, %v1303
      %v1306 = vxor.u32 %v1265, 2147483648
      %v1307 = vmul.f32 %v1306, 1.442695
      %v1308 = vpow.pop %v1307
      %v1309 = vadd.f32 %v1308, 1.0
      %v1310 = vrcp.pop %v1309
      %v1311 = vmul.f32 %v1309, %v1310
      %v1312 = vsub.f32 1.0, %v1311
      %v1313 = vmul.f32 %v1310, %v1312
      %v1314 = vadd.f32 %v1310, %v1313
      %vm1315 = vweird.f32 %v1309
      %vm1316 = vweird.f32 %v1310
      %vm1317 = vmor %vm1315, %vm1316
      %v1318 = vsel %vm1317, %v1310, %v1314
      %v1319 = vand.u32 2147483647, %v1309
      %vm1320 = vcmp.eq.f32.partialorder %v1319, 8.507059e+37
      %v1321 = vand.u32 %v1309, 2147483648
      %v1322 = vor.u32 1.1754944e-38, %v1321
      %v1323 = vsel %vm1320, %v1322, %v1318
      %v1324 = vmul.f32 1.0, %v1323
      %1325 = vrot.lane.b32.xlu0 %v1300, 96
      %v1326 = vpop.permute.xlu0 %1325
      %v1328 = vmul.f32 %v1324, %v1326
      %1330 = vrot.lane.b32.xlu0 %v1305, 32
      %v1331 = vpop.permute.xlu0 %1330
      %1334 = vrot.lane.b32.xlu0 %v1328, 32
      %v1335 = vpop.permute.xlu0 %1334
      %v1337 = vsel %vm381, %v1331, %v1335
      %s1338 = scalar_lea.vmem %s227, 24
      %1339 = vst.msk [vmem:[%s1338] sm:$0xff] %vm263, %v1337
      %1341 = vrot.lane.b32.xlu0 %v1305, 64
      %v1342 = vpop.permute.xlu0 %1341
      %1345 = vrot.lane.b32.xlu0 %v1204, 32
      %v1346 = vpop.permute.xlu0 %1345
      %1349 = vrot.lane.b32.xlu0 %v1299, 64
      %v1350 = vpop.permute.xlu0 %1349
      %v1352 = vsel %vm381, %v1221, %v1342
      %v1353 = vsel %vm263, %v1352, %v1346
      %v1354 = vsel %vm513, %v1353, %v1350
      %1355 = vst [vmem:[%s5] sm:$0xff] %v1354
      %v1356 = vld [vmem:[%s5] sm:$0xff]
      %s1357 = scalar_lea.vmem %s221, 96
      %v1358 = vld [vmem:[%s1357] sm:$0xff]
      %v1359 = vld [vmem:[%s1357 + $0x8] sm:$0xff]
      %v1360 = vld [vmem:[%s1357 + $0x10] sm:$0xff]
      %v1361 = vld [vmem:[%s2] sm:$0xff]
      %v1362 = vld [vmem:[%s2 + $0x8] sm:$0xff]
      %v1363 = vld [vmem:[%s2 + $0x10] sm:$0xff]
      %v1364 = vld [vmem:[%s2 + $0x18] sm:$0xff]
      %v1365 = vld [vmem:[%s2 + $0x20] sm:$0xff]
      %v1366 = vld [vmem:[%s2 + $0x28] sm:$0xff]
      %v1367 = vld [vmem:[%s2 + $0x30] sm:$0xff]
      %v1368 = vld [vmem:[%s2 + $0x38] sm:$0xff]
      %v1369 = vld [vmem:[%s2 + $0x40] sm:$0xff]
      %v1370 = vld [vmem:[%s2 + $0x48] sm:$0xff]
      %v1371 = vld [vmem:[%s2 + $0x50] sm:$0xff]
      %v1372 = vld [vmem:[%s2 + $0x58] sm:$0xff]
      %v1373 = vld [vmem:[%s2 + $0x60] sm:$0xff]
      %v1374 = vld [vmem:[%s2 + $0x68] sm:$0xff]
      %v1375 = vld [vmem:[%s2 + $0x70] sm:$0xff]
      %v1376 = vld [vmem:[%s2 + $0x78] sm:$0xff]
      %v1377 = vld [vmem:[%s2 + $0x80] sm:$0xff]
      %v1378 = vld [vmem:[%s2 + $0x88] sm:$0xff]
      %v1379 = vld [vmem:[%s2 + $0x90] sm:$0xff]
      %v1380 = vld [vmem:[%s2 + $0x98] sm:$0xff]
      %v1381 = vld [vmem:[%s2 + $0xa0] sm:$0xff]
      %v1382 = vld [vmem:[%s2 + $0xa8] sm:$0xff]
      %v1383 = vld [vmem:[%s2 + $0xb0] sm:$0xff]
      %v1384 = vld [vmem:[%s2 + $0xb8] sm:$0xff]
      %v1386 = vsel %vm263, %v1356, 0
      %1388 = vmatpush.msra.mxu0 0.0
      %1389 = vmatpush.msra.mxu0 0.0
      %1390 = vmatpush.msra.mxu0 0.0
      %1391 = vmatpush.msra.mxu0 0.0
      %1392 = vmatpush.msra.mxu0 0.0
      %1393 = vmatpush.msra.mxu0 0.0
      %1394 = vmatpush.msra.mxu0 0.0
      %1395 = vmatpush.msra.mxu0 0.0
      %1396 = vmatpush.msra.mxu0 %v1382
      %1397 = vmatpush.msra.mxu0 %v1379
      %1398 = vmatpush.msra.mxu0 %v1376
      %1399 = vmatpush.msra.mxu0 %v1373
      %1400 = vmatpush.msra.mxu0 %v1370
      %1401 = vmatpush.msra.mxu0 %v1367
      %1402 = vmatpush.msra.mxu0 %v1364
      %1403 = vmatpush.msra.mxu0 %v1361
      %1404 = vmatmul.f32.gmra.mxu0 %v1386
      %v1405 = vpop.f32.mrf.mxu0
      %v1406 = vadd.f32 0.0, %v1405
      %1407 = vdwg.mxu0
      %1408 = vmatpush.msra.mxu0 0.0
      %1409 = vmatpush.msra.mxu0 0.0
      %1410 = vmatpush.msra.mxu0 0.0
      %1411 = vmatpush.msra.mxu0 0.0
      %1412 = vmatpush.msra.mxu0 0.0
      %1413 = vmatpush.msra.mxu0 0.0
      %1414 = vmatpush.msra.mxu0 0.0
      %1415 = vmatpush.msra.mxu0 0.0
      %1416 = vmatpush.msra.mxu0 %v1383
      %1417 = vmatpush.msra.mxu0 %v1380
      %1418 = vmatpush.msra.mxu0 %v1377
      %1419 = vmatpush.msra.mxu0 %v1374
      %1420 = vmatpush.msra.mxu0 %v1371
      %1421 = vmatpush.msra.mxu0 %v1368
      %1422 = vmatpush.msra.mxu0 %v1365
      %1423 = vmatpush.msra.mxu0 %v1362
      %1424 = vmatmul.f32.gmra.mxu0 %v1386
      %v1425 = vpop.f32.mrf.mxu0
      %v1426 = vadd.f32 0.0, %v1425
      %1427 = vdwg.mxu0
      %1428 = vmatpush.msra.mxu0 0.0
      %1429 = vmatpush.msra.mxu0 0.0
      %1430 = vmatpush.msra.mxu0 0.0
      %1431 = vmatpush.msra.mxu0 0.0
      %1432 = vmatpush.msra.mxu0 0.0
      %1433 = vmatpush.msra.mxu0 0.0
      %1434 = vmatpush.msra.mxu0 0.0
      %1435 = vmatpush.msra.mxu0 0.0
      %1436 = vmatpush.msra.mxu0 %v1384
      %1437 = vmatpush.msra.mxu0 %v1381
      %1438 = vmatpush.msra.mxu0 %v1378
      %1439 = vmatpush.msra.mxu0 %v1375
      %1440 = vmatpush.msra.mxu0 %v1372
      %1441 = vmatpush.msra.mxu0 %v1369
      %1442 = vmatpush.msra.mxu0 %v1366
      %1443 = vmatpush.msra.mxu0 %v1363
      %1444 = vmatmul.f32.gmra.mxu0 %v1386
      %v1445 = vpop.f32.mrf.mxu0
      %v1446 = vadd.f32 0.0, %v1445
      %1447 = vdwg.mxu0
      %v1448 = vadd.f32 %v1358, %v1406
      %v1449 = vadd.f32 %v1359, %v1426
      %v1450 = vadd.f32 %v1360, %v1446
      %v1451 = vxor.u32 %v1448, 2147483648
      %v1452 = vmul.f32 %v1451, 1.442695
      %v1453 = vpow.pop %v1452
      %v1454 = vadd.f32 %v1453, 1.0
      %v1455 = vrcp.pop %v1454
      %v1456 = vmul.f32 %v1454, %v1455
      %v1457 = vsub.f32 1.0, %v1456
      %v1458 = vmul.f32 %v1455, %v1457
      %v1459 = vadd.f32 %v1455, %v1458
      %vm1460 = vweird.f32 %v1454
      %vm1461 = vweird.f32 %v1455
      %vm1462 = vmor %vm1460, %vm1461
      %v1463 = vsel %vm1462, %v1455, %v1459
      %v1464 = vand.u32 2147483647, %v1454
      %vm1465 = vcmp.eq.f32.partialorder %v1464, 8.507059e+37
      %v1466 = vand.u32 %v1454, 2147483648
      %v1467 = vor.u32 1.1754944e-38, %v1466
      %v1468 = vsel %vm1465, %v1467, %v1463
      %v1469 = vmul.f32 1.0, %v1468
      %v1470 = vtanh.pop %v1448
      %1471 = vrot.lane.b32.xlu0 %v1356, 96
      %v1472 = vpop.permute.xlu0 %1471
      %v1474 = vmul.f32 %v1469, %v1472
      %1476 = vrot.lane.b32.xlu0 %v1470, 64
      %v1477 = vpop.permute.xlu0 %1476
      %v1479 = vmul.f32 %v1469, %v1477
      %1481 = vrot.lane.b32.xlu0 %v1479, 32
      %v1482 = vpop.permute.xlu0 %1481
      %v1484 = vadd.f32 %v1474, %v1482
      %v1485 = vtanh.pop %v1484
      %1487 = vrot.lane.b32.xlu0 %v1485, 64
      %v1488 = vpop.permute.xlu0 %1487
      %v1490 = vmul.f32 %v1469, %v1488
      %v1491 = vld [vmem:[%s3] sm:$0xff]
      %v1492 = vld [vmem:[%s3 + $0x8] sm:$0xff]
      %v1493 = vld [vmem:[%s3 + $0x10] sm:$0xff]
      %v1494 = vld [vmem:[%s3 + $0x18] sm:$0xff]
      %v1495 = vld [vmem:[%s3 + $0x20] sm:$0xff]
      %v1496 = vld [vmem:[%s3 + $0x28] sm:$0xff]
      %v1497 = vld [vmem:[%s3 + $0x30] sm:$0xff]
      %v1498 = vld [vmem:[%s3 + $0x38] sm:$0xff]
      %1500 = vrot.lane.b32.xlu0 %v1490, 32
      %v1501 = vpop.permute.xlu0 %1500
      %v1502 = vsel %vm381, %v1501, 0
      %1504 = vmatpush.msra.mxu0 0.0
      %1505 = vmatpush.msra.mxu0 0.0
      %1506 = vmatpush.msra.mxu0 0.0
      %1507 = vmatpush.msra.mxu0 0.0
      %1508 = vmatpush.msra.mxu0 0.0
      %1509 = vmatpush.msra.mxu0 0.0
      %1510 = vmatpush.msra.mxu0 0.0
      %1511 = vmatpush.msra.mxu0 0.0
      %1512 = vmatpush.msra.mxu0 0.0
      %1513 = vmatpush.msra.mxu0 0.0
      %1514 = vmatpush.msra.mxu0 0.0
      %1515 = vmatpush.msra.mxu0 0.0
      %1516 = vmatpush.msra.mxu0 %v1497
      %1517 = vmatpush.msra.mxu0 %v1495
      %1518 = vmatpush.msra.mxu0 %v1493
      %1519 = vmatpush.msra.mxu0 %v1491
      %1520 = vmatmul.f32.gmra.mxu0 %v1502
      %v1521 = vpop.f32.mrf.mxu0
      %v1522 = vadd.f32 0.0, %v1521
      %1523 = vdwg.mxu0
      %1524 = vmatpush.msra.mxu0 0.0
      %1525 = vmatpush.msra.mxu0 0.0
      %1526 = vmatpush.msra.mxu0 0.0
      %1527 = vmatpush.msra.mxu0 0.0
      %1528 = vmatpush.msra.mxu0 0.0
      %1529 = vmatpush.msra.mxu0 0.0
      %1530 = vmatpush.msra.mxu0 0.0
      %1531 = vmatpush.msra.mxu0 0.0
      %1532 = vmatpush.msra.mxu0 0.0
      %1533 = vmatpush.msra.mxu0 0.0
      %1534 = vmatpush.msra.mxu0 0.0
      %1535 = vmatpush.msra.mxu0 0.0
      %1536 = vmatpush.msra.mxu0 %v1498
      %1537 = vmatpush.msra.mxu0 %v1496
      %1538 = vmatpush.msra.mxu0 %v1494
      %1539 = vmatpush.msra.mxu0 %v1492
      %1540 = vmatmul.f32.gmra.mxu0 %v1502
      %v1541 = vpop.f32.mrf.mxu0
      %v1542 = vadd.f32 0.0, %v1541
      %1543 = vdwg.mxu0
      %v1544 = vadd.f32 %v1449, %v1522
      %v1545 = vadd.f32 %v1450, %v1542
      %v1546 = vxor.u32 %v1544, 2147483648
      %v1547 = vmul.f32 %v1546, 1.442695
      %v1548 = vpow.pop %v1547
      %v1549 = vadd.f32 %v1548, 1.0
      %v1550 = vrcp.pop %v1549
      %v1551 = vmul.f32 %v1549, %v1550
      %v1552 = vsub.f32 1.0, %v1551
      %v1553 = vmul.f32 %v1550, %v1552
      %v1554 = vadd.f32 %v1550, %v1553
      %vm1555 = vweird.f32 %v1549
      %vm1556 = vweird.f32 %v1550
      %vm1557 = vmor %vm1555, %vm1556
      %v1558 = vsel %vm1557, %v1550, %v1554
      %v1559 = vand.u32 2147483647, %v1549
      %vm1560 = vcmp.eq.f32.partialorder %v1559, 8.507059e+37
      %v1561 = vand.u32 %v1549, 2147483648
      %v1562 = vor.u32 1.1754944e-38, %v1561
      %v1563 = vsel %vm1560, %v1562, %v1558
      %v1564 = vmul.f32 1.0, %v1563
      %v1565 = vtanh.pop %v1544
      %1566 = vrot.lane.b32.xlu0 %v1356, 64
      %v1567 = vpop.permute.xlu0 %1566
      %v1569 = vmul.f32 %v1564, %v1567
      %1571 = vrot.lane.b32.xlu0 %v1565, 64
      %v1572 = vpop.permute.xlu0 %1571
      %v1574 = vmul.f32 %v1564, %v1572
      %1576 = vrot.lane.b32.xlu0 %v1574, 32
      %v1577 = vpop.permute.xlu0 %1576
      %v1579 = vadd.f32 %v1569, %v1577
      %v1580 = vtanh.pop %v1579
      %1582 = vrot.lane.b32.xlu0 %v1580, 64
      %v1583 = vpop.permute.xlu0 %1582
      %v1585 = vmul.f32 %v1564, %v1583
      %v1586 = vxor.u32 %v1545, 2147483648
      %v1587 = vmul.f32 %v1586, 1.442695
      %v1588 = vpow.pop %v1587
      %v1589 = vadd.f32 %v1588, 1.0
      %v1590 = vrcp.pop %v1589
      %v1591 = vmul.f32 %v1589, %v1590
      %v1592 = vsub.f32 1.0, %v1591
      %v1593 = vmul.f32 %v1590, %v1592
      %v1594 = vadd.f32 %v1590, %v1593
      %vm1595 = vweird.f32 %v1589
      %vm1596 = vweird.f32 %v1590
      %vm1597 = vmor %vm1595, %vm1596
      %v1598 = vsel %vm1597, %v1590, %v1594
      %v1599 = vand.u32 2147483647, %v1589
      %vm1600 = vcmp.eq.f32.partialorder %v1599, 8.507059e+37
      %v1601 = vand.u32 %v1589, 2147483648
      %v1602 = vor.u32 1.1754944e-38, %v1601
      %v1603 = vsel %vm1600, %v1602, %v1598
      %v1604 = vmul.f32 1.0, %v1603
      %1605 = vrot.lane.b32.xlu0 %v1580, 96
      %v1606 = vpop.permute.xlu0 %1605
      %v1608 = vmul.f32 %v1604, %v1606
      %1610 = vrot.lane.b32.xlu0 %v1585, 32
      %v1611 = vpop.permute.xlu0 %1610
      %1614 = vrot.lane.b32.xlu0 %v1608, 32
      %v1615 = vpop.permute.xlu0 %1614
      %v1617 = vsel %vm381, %v1611, %v1615
      %s1618 = scalar_lea.vmem %s227, 32
      %1619 = vst.msk [vmem:[%s1618] sm:$0xff] %vm263, %v1617
      %1621 = vrot.lane.b32.xlu0 %v1585, 64
      %v1622 = vpop.permute.xlu0 %1621
      %1625 = vrot.lane.b32.xlu0 %v1484, 32
      %v1626 = vpop.permute.xlu0 %1625
      %1629 = vrot.lane.b32.xlu0 %v1579, 64
      %v1630 = vpop.permute.xlu0 %1629
      %v1632 = vsel %vm381, %v1501, %v1622
      %v1633 = vsel %vm263, %v1632, %v1626
      %v1634 = vsel %vm513, %v1633, %v1630
      %1635 = vst [vmem:[%s5] sm:$0xff] %v1634
      %v1636 = vld [vmem:[%s5] sm:$0xff]
      %s1637 = scalar_lea.vmem %s221, 120
      %v1638 = vld [vmem:[%s1637] sm:$0xff]
      %v1639 = vld [vmem:[%s1637 + $0x8] sm:$0xff]
      %v1640 = vld [vmem:[%s1637 + $0x10] sm:$0xff]
      %v1641 = vld [vmem:[%s2] sm:$0xff]
      %v1642 = vld [vmem:[%s2 + $0x8] sm:$0xff]
      %v1643 = vld [vmem:[%s2 + $0x10] sm:$0xff]
      %v1644 = vld [vmem:[%s2 + $0x18] sm:$0xff]
      %v1645 = vld [vmem:[%s2 + $0x20] sm:$0xff]
      %v1646 = vld [vmem:[%s2 + $0x28] sm:$0xff]
      %v1647 = vld [vmem:[%s2 + $0x30] sm:$0xff]
      %v1648 = vld [vmem:[%s2 + $0x38] sm:$0xff]
      %v1649 = vld [vmem:[%s2 + $0x40] sm:$0xff]
      %v1650 = vld [vmem:[%s2 + $0x48] sm:$0xff]
      %v1651 = vld [vmem:[%s2 + $0x50] sm:$0xff]
      %v1652 = vld [vmem:[%s2 + $0x58] sm:$0xff]
      %v1653 = vld [vmem:[%s2 + $0x60] sm:$0xff]
      %v1654 = vld [vmem:[%s2 + $0x68] sm:$0xff]
      %v1655 = vld [vmem:[%s2 + $0x70] sm:$0xff]
      %v1656 = vld [vmem:[%s2 + $0x78] sm:$0xff]
      %v1657 = vld [vmem:[%s2 + $0x80] sm:$0xff]
      %v1658 = vld [vmem:[%s2 + $0x88] sm:$0xff]
      %v1659 = vld [vmem:[%s2 + $0x90] sm:$0xff]
      %v1660 = vld [vmem:[%s2 + $0x98] sm:$0xff]
      %v1661 = vld [vmem:[%s2 + $0xa0] sm:$0xff]
      %v1662 = vld [vmem:[%s2 + $0xa8] sm:$0xff]
      %v1663 = vld [vmem:[%s2 + $0xb0] sm:$0xff]
      %v1664 = vld [vmem:[%s2 + $0xb8] sm:$0xff]
      %v1666 = vsel %vm263, %v1636, 0
      %1668 = vmatpush.msra.mxu0 0.0
      %1669 = vmatpush.msra.mxu0 0.0
      %1670 = vmatpush.msra.mxu0 0.0
      %1671 = vmatpush.msra.mxu0 0.0
      %1672 = vmatpush.msra.mxu0 0.0
      %1673 = vmatpush.msra.mxu0 0.0
      %1674 = vmatpush.msra.mxu0 0.0
      %1675 = vmatpush.msra.mxu0 0.0
      %1676 = vmatpush.msra.mxu0 %v1662
      %1677 = vmatpush.msra.mxu0 %v1659
      %1678 = vmatpush.msra.mxu0 %v1656
      %1679 = vmatpush.msra.mxu0 %v1653
      %1680 = vmatpush.msra.mxu0 %v1650
      %1681 = vmatpush.msra.mxu0 %v1647
      %1682 = vmatpush.msra.mxu0 %v1644
      %1683 = vmatpush.msra.mxu0 %v1641
      %1684 = vmatmul.f32.gmra.mxu0 %v1666
      %v1685 = vpop.f32.mrf.mxu0
      %v1686 = vadd.f32 0.0, %v1685
      %1687 = vdwg.mxu0
      %1688 = vmatpush.msra.mxu0 0.0
      %1689 = vmatpush.msra.mxu0 0.0
      %1690 = vmatpush.msra.mxu0 0.0
      %1691 = vmatpush.msra.mxu0 0.0
      %1692 = vmatpush.msra.mxu0 0.0
      %1693 = vmatpush.msra.mxu0 0.0
      %1694 = vmatpush.msra.mxu0 0.0
      %1695 = vmatpush.msra.mxu0 0.0
      %1696 = vmatpush.msra.mxu0 %v1663
      %1697 = vmatpush.msra.mxu0 %v1660
      %1698 = vmatpush.msra.mxu0 %v1657
      %1699 = vmatpush.msra.mxu0 %v1654
      %1700 = vmatpush.msra.mxu0 %v1651
      %1701 = vmatpush.msra.mxu0 %v1648
      %1702 = vmatpush.msra.mxu0 %v1645
      %1703 = vmatpush.msra.mxu0 %v1642
      %1704 = vmatmul.f32.gmra.mxu0 %v1666
      %v1705 = vpop.f32.mrf.mxu0
      %v1706 = vadd.f32 0.0, %v1705
      %1707 = vdwg.mxu0
      %1708 = vmatpush.msra.mxu0 0.0
      %1709 = vmatpush.msra.mxu0 0.0
      %1710 = vmatpush.msra.mxu0 0.0
      %1711 = vmatpush.msra.mxu0 0.0
      %1712 = vmatpush.msra.mxu0 0.0
      %1713 = vmatpush.msra.mxu0 0.0
      %1714 = vmatpush.msra.mxu0 0.0
      %1715 = vmatpush.msra.mxu0 0.0
      %1716 = vmatpush.msra.mxu0 %v1664
      %1717 = vmatpush.msra.mxu0 %v1661
      %1718 = vmatpush.msra.mxu0 %v1658
      %1719 = vmatpush.msra.mxu0 %v1655
      %1720 = vmatpush.msra.mxu0 %v1652
      %1721 = vmatpush.msra.mxu0 %v1649
      %1722 = vmatpush.msra.mxu0 %v1646
      %1723 = vmatpush.msra.mxu0 %v1643
      %1724 = vmatmul.f32.gmra.mxu0 %v1666
      %v1725 = vpop.f32.mrf.mxu0
      %v1726 = vadd.f32 0.0, %v1725
      %1727 = vdwg.mxu0
      %v1728 = vadd.f32 %v1638, %v1686
      %v1729 = vadd.f32 %v1639, %v1706
      %v1730 = vadd.f32 %v1640, %v1726
      %v1731 = vxor.u32 %v1728, 2147483648
      %v1732 = vmul.f32 %v1731, 1.442695
      %v1733 = vpow.pop %v1732
      %v1734 = vadd.f32 %v1733, 1.0
      %v1735 = vrcp.pop %v1734
      %v1736 = vmul.f32 %v1734, %v1735
      %v1737 = vsub.f32 1.0, %v1736
      %v1738 = vmul.f32 %v1735, %v1737
      %v1739 = vadd.f32 %v1735, %v1738
      %vm1740 = vweird.f32 %v1734
      %vm1741 = vweird.f32 %v1735
      %vm1742 = vmor %vm1740, %vm1741
      %v1743 = vsel %vm1742, %v1735, %v1739
      %v1744 = vand.u32 2147483647, %v1734
      %vm1745 = vcmp.eq.f32.partialorder %v1744, 8.507059e+37
      %v1746 = vand.u32 %v1734, 2147483648
      %v1747 = vor.u32 1.1754944e-38, %v1746
      %v1748 = vsel %vm1745, %v1747, %v1743
      %v1749 = vmul.f32 1.0, %v1748
      %v1750 = vtanh.pop %v1728
      %1751 = vrot.lane.b32.xlu0 %v1636, 96
      %v1752 = vpop.permute.xlu0 %1751
      %v1754 = vmul.f32 %v1749, %v1752
      %1756 = vrot.lane.b32.xlu0 %v1750, 64
      %v1757 = vpop.permute.xlu0 %1756
      %v1759 = vmul.f32 %v1749, %v1757
      %1761 = vrot.lane.b32.xlu0 %v1759, 32
      %v1762 = vpop.permute.xlu0 %1761
      %v1764 = vadd.f32 %v1754, %v1762
      %v1765 = vtanh.pop %v1764
      %1767 = vrot.lane.b32.xlu0 %v1765, 64
      %v1768 = vpop.permute.xlu0 %1767
      %v1770 = vmul.f32 %v1749, %v1768
      %v1771 = vld [vmem:[%s3] sm:$0xff]
      %v1772 = vld [vmem:[%s3 + $0x8] sm:$0xff]
      %v1773 = vld [vmem:[%s3 + $0x10] sm:$0xff]
      %v1774 = vld [vmem:[%s3 + $0x18] sm:$0xff]
      %v1775 = vld [vmem:[%s3 + $0x20] sm:$0xff]
      %v1776 = vld [vmem:[%s3 + $0x28] sm:$0xff]
      %v1777 = vld [vmem:[%s3 + $0x30] sm:$0xff]
      %v1778 = vld [vmem:[%s3 + $0x38] sm:$0xff]
      %1780 = vrot.lane.b32.xlu0 %v1770, 32
      %v1781 = vpop.permute.xlu0 %1780
      %v1782 = vsel %vm381, %v1781, 0
      %1784 = vmatpush.msra.mxu0 0.0
      %1785 = vmatpush.msra.mxu0 0.0
      %1786 = vmatpush.msra.mxu0 0.0
      %1787 = vmatpush.msra.mxu0 0.0
      %1788 = vmatpush.msra.mxu0 0.0
      %1789 = vmatpush.msra.mxu0 0.0
      %1790 = vmatpush.msra.mxu0 0.0
      %1791 = vmatpush.msra.mxu0 0.0
      %1792 = vmatpush.msra.mxu0 0.0
      %1793 = vmatpush.msra.mxu0 0.0
      %1794 = vmatpush.msra.mxu0 0.0
      %1795 = vmatpush.msra.mxu0 0.0
      %1796 = vmatpush.msra.mxu0 %v1777
      %1797 = vmatpush.msra.mxu0 %v1775
      %1798 = vmatpush.msra.mxu0 %v1773
      %1799 = vmatpush.msra.mxu0 %v1771
      %1800 = vmatmul.f32.gmra.mxu0 %v1782
      %v1801 = vpop.f32.mrf.mxu0
      %v1802 = vadd.f32 0.0, %v1801
      %1803 = vdwg.mxu0
      %1804 = vmatpush.msra.mxu0 0.0
      %1805 = vmatpush.msra.mxu0 0.0
      %1806 = vmatpush.msra.mxu0 0.0
      %1807 = vmatpush.msra.mxu0 0.0
      %1808 = vmatpush.msra.mxu0 0.0
      %1809 = vmatpush.msra.mxu0 0.0
      %1810 = vmatpush.msra.mxu0 0.0
      %1811 = vmatpush.msra.mxu0 0.0
      %1812 = vmatpush.msra.mxu0 0.0
      %1813 = vmatpush.msra.mxu0 0.0
      %1814 = vmatpush.msra.mxu0 0.0
      %1815 = vmatpush.msra.mxu0 0.0
      %1816 = vmatpush.msra.mxu0 %v1778
      %1817 = vmatpush.msra.mxu0 %v1776
      %1818 = vmatpush.msra.mxu0 %v1774
      %1819 = vmatpush.msra.mxu0 %v1772
      %1820 = vmatmul.f32.gmra.mxu0 %v1782
      %v1821 = vpop.f32.mrf.mxu0
      %v1822 = vadd.f32 0.0, %v1821
      %1823 = vdwg.mxu0
      %v1824 = vadd.f32 %v1729, %v1802
      %v1825 = vadd.f32 %v1730, %v1822
      %v1826 = vxor.u32 %v1824, 2147483648
      %v1827 = vmul.f32 %v1826, 1.442695
      %v1828 = vpow.pop %v1827
      %v1829 = vadd.f32 %v1828, 1.0
      %v1830 = vrcp.pop %v1829
      %v1831 = vmul.f32 %v1829, %v1830
      %v1832 = vsub.f32 1.0, %v1831
      %v1833 = vmul.f32 %v1830, %v1832
      %v1834 = vadd.f32 %v1830, %v1833
      %vm1835 = vweird.f32 %v1829
      %vm1836 = vweird.f32 %v1830
      %vm1837 = vmor %vm1835, %vm1836
      %v1838 = vsel %vm1837, %v1830, %v1834
      %v1839 = vand.u32 2147483647, %v1829
      %vm1840 = vcmp.eq.f32.partialorder %v1839, 8.507059e+37
      %v1841 = vand.u32 %v1829, 2147483648
      %v1842 = vor.u32 1.1754944e-38, %v1841
      %v1843 = vsel %vm1840, %v1842, %v1838
      %v1844 = vmul.f32 1.0, %v1843
      %v1845 = vtanh.pop %v1824
      %1846 = vrot.lane.b32.xlu0 %v1636, 64
      %v1847 = vpop.permute.xlu0 %1846
      %v1849 = vmul.f32 %v1844, %v1847
      %1851 = vrot.lane.b32.xlu0 %v1845, 64
      %v1852 = vpop.permute.xlu0 %1851
      %v1854 = vmul.f32 %v1844, %v1852
      %1856 = vrot.lane.b32.xlu0 %v1854, 32
      %v1857 = vpop.permute.xlu0 %1856
      %v1859 = vadd.f32 %v1849, %v1857
      %v1860 = vtanh.pop %v1859
      %1862 = vrot.lane.b32.xlu0 %v1860, 64
      %v1863 = vpop.permute.xlu0 %1862
      %v1865 = vmul.f32 %v1844, %v1863
      %v1866 = vxor.u32 %v1825, 2147483648
      %v1867 = vmul.f32 %v1866, 1.442695
      %v1868 = vpow.pop %v1867
      %v1869 = vadd.f32 %v1868, 1.0
      %v1870 = vrcp.pop %v1869
      %v1871 = vmul.f32 %v1869, %v1870
      %v1872 = vsub.f32 1.0, %v1871
      %v1873 = vmul.f32 %v1870, %v1872
      %v1874 = vadd.f32 %v1870, %v1873
      %vm1875 = vweird.f32 %v1869
      %vm1876 = vweird.f32 %v1870
      %vm1877 = vmor %vm1875, %vm1876
      %v1878 = vsel %vm1877, %v1870, %v1874
      %v1879 = vand.u32 2147483647, %v1869
      %vm1880 = vcmp.eq.f32.partialorder %v1879, 8.507059e+37
      %v1881 = vand.u32 %v1869, 2147483648
      %v1882 = vor.u32 1.1754944e-38, %v1881
      %v1883 = vsel %vm1880, %v1882, %v1878
      %v1884 = vmul.f32 1.0, %v1883
      %1885 = vrot.lane.b32.xlu0 %v1860, 96
      %v1886 = vpop.permute.xlu0 %1885
      %v1888 = vmul.f32 %v1884, %v1886
      %1890 = vrot.lane.b32.xlu0 %v1865, 32
      %v1891 = vpop.permute.xlu0 %1890
      %1894 = vrot.lane.b32.xlu0 %v1888, 32
      %v1895 = vpop.permute.xlu0 %1894
      %v1897 = vsel %vm381, %v1891, %v1895
      %s1898 = scalar_lea.vmem %s227, 40
      %1899 = vst.msk [vmem:[%s1898] sm:$0xff] %vm263, %v1897
      %1901 = vrot.lane.b32.xlu0 %v1865, 64
      %v1902 = vpop.permute.xlu0 %1901
      %1905 = vrot.lane.b32.xlu0 %v1764, 32
      %v1906 = vpop.permute.xlu0 %1905
      %1909 = vrot.lane.b32.xlu0 %v1859, 64
      %v1910 = vpop.permute.xlu0 %1909
      %v1912 = vsel %vm381, %v1781, %v1902
      %v1913 = vsel %vm263, %v1912, %v1906
      %v1914 = vsel %vm513, %v1913, %v1910
      %1915 = vst [vmem:[%s5] sm:$0xff] %v1914
      %v1916 = vld [vmem:[%s5] sm:$0xff]
      %s1917 = scalar_lea.vmem %s221, 144
      %v1918 = vld [vmem:[%s1917] sm:$0xff]
      %v1919 = vld [vmem:[%s1917 + $0x8] sm:$0xff]
      %v1920 = vld [vmem:[%s1917 + $0x10] sm:$0xff]
      %v1921 = vld [vmem:[%s2] sm:$0xff]
      %v1922 = vld [vmem:[%s2 + $0x8] sm:$0xff]
      %v1923 = vld [vmem:[%s2 + $0x10] sm:$0xff]
      %v1924 = vld [vmem:[%s2 + $0x18] sm:$0xff]
      %v1925 = vld [vmem:[%s2 + $0x20] sm:$0xff]
      %v1926 = vld [vmem:[%s2 + $0x28] sm:$0xff]
      %v1927 = vld [vmem:[%s2 + $0x30] sm:$0xff]
      %v1928 = vld [vmem:[%s2 + $0x38] sm:$0xff]
      %v1929 = vld [vmem:[%s2 + $0x40] sm:$0xff]
      %v1930 = vld [vmem:[%s2 + $0x48] sm:$0xff]
      %v1931 = vld [vmem:[%s2 + $0x50] sm:$0xff]
      %v1932 = vld [vmem:[%s2 + $0x58] sm:$0xff]
      %v1933 = vld [vmem:[%s2 + $0x60] sm:$0xff]
      %v1934 = vld [vmem:[%s2 + $0x68] sm:$0xff]
      %v1935 = vld [vmem:[%s2 + $0x70] sm:$0xff]
      %v1936 = vld [vmem:[%s2 + $0x78] sm:$0xff]
      %v1937 = vld [vmem:[%s2 + $0x80] sm:$0xff]
      %v1938 = vld [vmem:[%s2 + $0x88] sm:$0xff]
      %v1939 = vld [vmem:[%s2 + $0x90] sm:$0xff]
      %v1940 = vld [vmem:[%s2 + $0x98] sm:$0xff]
      %v1941 = vld [vmem:[%s2 + $0xa0] sm:$0xff]
      %v1942 = vld [vmem:[%s2 + $0xa8] sm:$0xff]
      %v1943 = vld [vmem:[%s2 + $0xb0] sm:$0xff]
      %v1944 = vld [vmem:[%s2 + $0xb8] sm:$0xff]
      %v1946 = vsel %vm263, %v1916, 0
      %1948 = vmatpush.msra.mxu0 0.0
      %1949 = vmatpush.msra.mxu0 0.0
      %1950 = vmatpush.msra.mxu0 0.0
      %1951 = vmatpush.msra.mxu0 0.0
      %1952 = vmatpush.msra.mxu0 0.0
      %1953 = vmatpush.msra.mxu0 0.0
      %1954 = vmatpush.msra.mxu0 0.0
      %1955 = vmatpush.msra.mxu0 0.0
      %1956 = vmatpush.msra.mxu0 %v1942
      %1957 = vmatpush.msra.mxu0 %v1939
      %1958 = vmatpush.msra.mxu0 %v1936
      %1959 = vmatpush.msra.mxu0 %v1933
      %1960 = vmatpush.msra.mxu0 %v1930
      %1961 = vmatpush.msra.mxu0 %v1927
      %1962 = vmatpush.msra.mxu0 %v1924
      %1963 = vmatpush.msra.mxu0 %v1921
      %1964 = vmatmul.f32.gmra.mxu0 %v1946
      %v1965 = vpop.f32.mrf.mxu0
      %v1966 = vadd.f32 0.0, %v1965
      %1967 = vdwg.mxu0
      %1968 = vmatpush.msra.mxu0 0.0
      %1969 = vmatpush.msra.mxu0 0.0
      %1970 = vmatpush.msra.mxu0 0.0
      %1971 = vmatpush.msra.mxu0 0.0
      %1972 = vmatpush.msra.mxu0 0.0
      %1973 = vmatpush.msra.mxu0 0.0
      %1974 = vmatpush.msra.mxu0 0.0
      %1975 = vmatpush.msra.mxu0 0.0
      %1976 = vmatpush.msra.mxu0 %v1943
      %1977 = vmatpush.msra.mxu0 %v1940
      %1978 = vmatpush.msra.mxu0 %v1937
      %1979 = vmatpush.msra.mxu0 %v1934
      %1980 = vmatpush.msra.mxu0 %v1931
      %1981 = vmatpush.msra.mxu0 %v1928
      %1982 = vmatpush.msra.mxu0 %v1925
      %1983 = vmatpush.msra.mxu0 %v1922
      %1984 = vmatmul.f32.gmra.mxu0 %v1946
      %v1985 = vpop.f32.mrf.mxu0
      %v1986 = vadd.f32 0.0, %v1985
      %1987 = vdwg.mxu0
      %1988 = vmatpush.msra.mxu0 0.0
      %1989 = vmatpush.msra.mxu0 0.0
      %1990 = vmatpush.msra.mxu0 0.0
      %1991 = vmatpush.msra.mxu0 0.0
      %1992 = vmatpush.msra.mxu0 0.0
      %1993 = vmatpush.msra.mxu0 0.0
      %1994 = vmatpush.msra.mxu0 0.0
      %1995 = vmatpush.msra.mxu0 0.0
      %1996 = vmatpush.msra.mxu0 %v1944
      %1997 = vmatpush.msra.mxu0 %v1941
      %1998 = vmatpush.msra.mxu0 %v1938
      %1999 = vmatpush.msra.mxu0 %v1935
      %2000 = vmatpush.msra.mxu0 %v1932
      %2001 = vmatpush.msra.mxu0 %v1929
      %2002 = vmatpush.msra.mxu0 %v1926
      %2003 = vmatpush.msra.mxu0 %v1923
      %2004 = vmatmul.f32.gmra.mxu0 %v1946
      %v2005 = vpop.f32.mrf.mxu0
      %v2006 = vadd.f32 0.0, %v2005
      %2007 = vdwg.mxu0
      %v2008 = vadd.f32 %v1918, %v1966
      %v2009 = vadd.f32 %v1919, %v1986
      %v2010 = vadd.f32 %v1920, %v2006
      %v2011 = vxor.u32 %v2008, 2147483648
      %v2012 = vmul.f32 %v2011, 1.442695
      %v2013 = vpow.pop %v2012
      %v2014 = vadd.f32 %v2013, 1.0
      %v2015 = vrcp.pop %v2014
      %v2016 = vmul.f32 %v2014, %v2015
      %v2017 = vsub.f32 1.0, %v2016
      %v2018 = vmul.f32 %v2015, %v2017
      %v2019 = vadd.f32 %v2015, %v2018
      %vm2020 = vweird.f32 %v2014
      %vm2021 = vweird.f32 %v2015
      %vm2022 = vmor %vm2020, %vm2021
      %v2023 = vsel %vm2022, %v2015, %v2019
      %v2024 = vand.u32 2147483647, %v2014
      %vm2025 = vcmp.eq.f32.partialorder %v2024, 8.507059e+37
      %v2026 = vand.u32 %v2014, 2147483648
      %v2027 = vor.u32 1.1754944e-38, %v2026
      %v2028 = vsel %vm2025, %v2027, %v2023
      %v2029 = vmul.f32 1.0, %v2028
      %v2030 = vtanh.pop %v2008
      %2031 = vrot.lane.b32.xlu0 %v1916, 96
      %v2032 = vpop.permute.xlu0 %2031
      %v2034 = vmul.f32 %v2029, %v2032
      %2036 = vrot.lane.b32.xlu0 %v2030, 64
      %v2037 = vpop.permute.xlu0 %2036
      %v2039 = vmul.f32 %v2029, %v2037
      %2041 = vrot.lane.b32.xlu0 %v2039, 32
      %v2042 = vpop.permute.xlu0 %2041
      %v2044 = vadd.f32 %v2034, %v2042
      %v2045 = vtanh.pop %v2044
      %2047 = vrot.lane.b32.xlu0 %v2045, 64
      %v2048 = vpop.permute.xlu0 %2047
      %v2050 = vmul.f32 %v2029, %v2048
      %v2051 = vld [vmem:[%s3] sm:$0xff]
      %v2052 = vld [vmem:[%s3 + $0x8] sm:$0xff]
      %v2053 = vld [vmem:[%s3 + $0x10] sm:$0xff]
      %v2054 = vld [vmem:[%s3 + $0x18] sm:$0xff]
      %v2055 = vld [vmem:[%s3 + $0x20] sm:$0xff]
      %v2056 = vld [vmem:[%s3 + $0x28] sm:$0xff]
      %v2057 = vld [vmem:[%s3 + $0x30] sm:$0xff]
      %v2058 = vld [vmem:[%s3 + $0x38] sm:$0xff]
      %2060 = vrot.lane.b32.xlu0 %v2050, 32
      %v2061 = vpop.permute.xlu0 %2060
      %v2062 = vsel %vm381, %v2061, 0
      %2064 = vmatpush.msra.mxu0 0.0
      %2065 = vmatpush.msra.mxu0 0.0
      %2066 = vmatpush.msra.mxu0 0.0
      %2067 = vmatpush.msra.mxu0 0.0
      %2068 = vmatpush.msra.mxu0 0.0
      %2069 = vmatpush.msra.mxu0 0.0
      %2070 = vmatpush.msra.mxu0 0.0
      %2071 = vmatpush.msra.mxu0 0.0
      %2072 = vmatpush.msra.mxu0 0.0
      %2073 = vmatpush.msra.mxu0 0.0
      %2074 = vmatpush.msra.mxu0 0.0
      %2075 = vmatpush.msra.mxu0 0.0
      %2076 = vmatpush.msra.mxu0 %v2057
      %2077 = vmatpush.msra.mxu0 %v2055
      %2078 = vmatpush.msra.mxu0 %v2053
      %2079 = vmatpush.msra.mxu0 %v2051
      %2080 = vmatmul.f32.gmra.mxu0 %v2062
      %v2081 = vpop.f32.mrf.mxu0
      %v2082 = vadd.f32 0.0, %v2081
      %2083 = vdwg.mxu0
      %2084 = vmatpush.msra.mxu0 0.0
      %2085 = vmatpush.msra.mxu0 0.0
      %2086 = vmatpush.msra.mxu0 0.0
      %2087 = vmatpush.msra.mxu0 0.0
      %2088 = vmatpush.msra.mxu0 0.0
      %2089 = vmatpush.msra.mxu0 0.0
      %2090 = vmatpush.msra.mxu0 0.0
      %2091 = vmatpush.msra.mxu0 0.0
      %2092 = vmatpush.msra.mxu0 0.0
      %2093 = vmatpush.msra.mxu0 0.0
      %2094 = vmatpush.msra.mxu0 0.0
      %2095 = vmatpush.msra.mxu0 0.0
      %2096 = vmatpush.msra.mxu0 %v2058
      %2097 = vmatpush.msra.mxu0 %v2056
      %2098 = vmatpush.msra.mxu0 %v2054
      %2099 = vmatpush.msra.mxu0 %v2052
      %2100 = vmatmul.f32.gmra.mxu0 %v2062
      %v2101 = vpop.f32.mrf.mxu0
      %v2102 = vadd.f32 0.0, %v2101
      %2103 = vdwg.mxu0
      %v2104 = vadd.f32 %v2009, %v2082
      %v2105 = vadd.f32 %v2010, %v2102
      %v2106 = vxor.u32 %v2104, 2147483648
      %v2107 = vmul.f32 %v2106, 1.442695
      %v2108 = vpow.pop %v2107
      %v2109 = vadd.f32 %v2108, 1.0
      %v2110 = vrcp.pop %v2109
      %v2111 = vmul.f32 %v2109, %v2110
      %v2112 = vsub.f32 1.0, %v2111
      %v2113 = vmul.f32 %v2110, %v2112
      %v2114 = vadd.f32 %v2110, %v2113
      %vm2115 = vweird.f32 %v2109
      %vm2116 = vweird.f32 %v2110
      %vm2117 = vmor %vm2115, %vm2116
      %v2118 = vsel %vm2117, %v2110, %v2114
      %v2119 = vand.u32 2147483647, %v2109
      %vm2120 = vcmp.eq.f32.partialorder %v2119, 8.507059e+37
      %v2121 = vand.u32 %v2109, 2147483648
      %v2122 = vor.u32 1.1754944e-38, %v2121
      %v2123 = vsel %vm2120, %v2122, %v2118
      %v2124 = vmul.f32 1.0, %v2123
      %v2125 = vtanh.pop %v2104
      %2126 = vrot.lane.b32.xlu0 %v1916, 64
      %v2127 = vpop.permute.xlu0 %2126
      %v2129 = vmul.f32 %v2124, %v2127
      %2131 = vrot.lane.b32.xlu0 %v2125, 64
      %v2132 = vpop.permute.xlu0 %2131
      %v2134 = vmul.f32 %v2124, %v2132
      %2136 = vrot.lane.b32.xlu0 %v2134, 32
      %v2137 = vpop.permute.xlu0 %2136
      %v2139 = vadd.f32 %v2129, %v2137
      %v2140 = vtanh.pop %v2139
      %2142 = vrot.lane.b32.xlu0 %v2140, 64
      %v2143 = vpop.permute.xlu0 %2142
      %v2145 = vmul.f32 %v2124, %v2143
      %v2146 = vxor.u32 %v2105, 2147483648
      %v2147 = vmul.f32 %v2146, 1.442695
      %v2148 = vpow.pop %v2147
      %v2149 = vadd.f32 %v2148, 1.0
      %v2150 = vrcp.pop %v2149
      %v2151 = vmul.f32 %v2149, %v2150
      %v2152 = vsub.f32 1.0, %v2151
      %v2153 = vmul.f32 %v2150, %v2152
      %v2154 = vadd.f32 %v2150, %v2153
      %vm2155 = vweird.f32 %v2149
      %vm2156 = vweird.f32 %v2150
      %vm2157 = vmor %vm2155, %vm2156
      %v2158 = vsel %vm2157, %v2150, %v2154
      %v2159 = vand.u32 2147483647, %v2149
      %vm2160 = vcmp.eq.f32.partialorder %v2159, 8.507059e+37
      %v2161 = vand.u32 %v2149, 2147483648
      %v2162 = vor.u32 1.1754944e-38, %v2161
      %v2163 = vsel %vm2160, %v2162, %v2158
      %v2164 = vmul.f32 1.0, %v2163
      %2165 = vrot.lane.b32.xlu0 %v2140, 96
      %v2166 = vpop.permute.xlu0 %2165
      %v2168 = vmul.f32 %v2164, %v2166
      %2170 = vrot.lane.b32.xlu0 %v2145, 32
      %v2171 = vpop.permute.xlu0 %2170
      %2174 = vrot.lane.b32.xlu0 %v2168, 32
      %v2175 = vpop.permute.xlu0 %2174
      %v2177 = vsel %vm381, %v2171, %v2175
      %s2178 = scalar_lea.vmem %s227, 48
      %2179 = vst.msk [vmem:[%s2178] sm:$0xff] %vm263, %v2177
      %2181 = vrot.lane.b32.xlu0 %v2145, 64
      %v2182 = vpop.permute.xlu0 %2181
      %2185 = vrot.lane.b32.xlu0 %v2044, 32
      %v2186 = vpop.permute.xlu0 %2185
      %2189 = vrot.lane.b32.xlu0 %v2139, 64
      %v2190 = vpop.permute.xlu0 %2189
      %v2192 = vsel %vm381, %v2061, %v2182
      %v2193 = vsel %vm263, %v2192, %v2186
      %v2194 = vsel %vm513, %v2193, %v2190
      %2195 = vst [vmem:[%s5] sm:$0xff] %v2194
      %v2196 = vld [vmem:[%s5] sm:$0xff]
      %s2197 = scalar_lea.vmem %s221, 168
      %v2198 = vld [vmem:[%s2197] sm:$0xff]
      %v2199 = vld [vmem:[%s2197 + $0x8] sm:$0xff]
      %v2200 = vld [vmem:[%s2197 + $0x10] sm:$0xff]
      %v2201 = vld [vmem:[%s2] sm:$0xff]
      %v2202 = vld [vmem:[%s2 + $0x8] sm:$0xff]
      %v2203 = vld [vmem:[%s2 + $0x10] sm:$0xff]
      %v2204 = vld [vmem:[%s2 + $0x18] sm:$0xff]
      %v2205 = vld [vmem:[%s2 + $0x20] sm:$0xff]
      %v2206 = vld [vmem:[%s2 + $0x28] sm:$0xff]
      %v2207 = vld [vmem:[%s2 + $0x30] sm:$0xff]
      %v2208 = vld [vmem:[%s2 + $0x38] sm:$0xff]
      %v2209 = vld [vmem:[%s2 + $0x40] sm:$0xff]
      %v2210 = vld [vmem:[%s2 + $0x48] sm:$0xff]
      %v2211 = vld [vmem:[%s2 + $0x50] sm:$0xff]
      %v2212 = vld [vmem:[%s2 + $0x58] sm:$0xff]
      %v2213 = vld [vmem:[%s2 + $0x60] sm:$0xff]
      %v2214 = vld [vmem:[%s2 + $0x68] sm:$0xff]
      %v2215 = vld [vmem:[%s2 + $0x70] sm:$0xff]
      %v2216 = vld [vmem:[%s2 + $0x78] sm:$0xff]
      %v2217 = vld [vmem:[%s2 + $0x80] sm:$0xff]
      %v2218 = vld [vmem:[%s2 + $0x88] sm:$0xff]
      %v2219 = vld [vmem:[%s2 + $0x90] sm:$0xff]
      %v2220 = vld [vmem:[%s2 + $0x98] sm:$0xff]
      %v2221 = vld [vmem:[%s2 + $0xa0] sm:$0xff]
      %v2222 = vld [vmem:[%s2 + $0xa8] sm:$0xff]
      %v2223 = vld [vmem:[%s2 + $0xb0] sm:$0xff]
      %v2224 = vld [vmem:[%s2 + $0xb8] sm:$0xff]
      %v2226 = vsel %vm263, %v2196, 0
      %2228 = vmatpush.msra.mxu0 0.0
      %2229 = vmatpush.msra.mxu0 0.0
      %2230 = vmatpush.msra.mxu0 0.0
      %2231 = vmatpush.msra.mxu0 0.0
      %2232 = vmatpush.msra.mxu0 0.0
      %2233 = vmatpush.msra.mxu0 0.0
      %2234 = vmatpush.msra.mxu0 0.0
      %2235 = vmatpush.msra.mxu0 0.0
      %2236 = vmatpush.msra.mxu0 %v2222
      %2237 = vmatpush.msra.mxu0 %v2219
      %2238 = vmatpush.msra.mxu0 %v2216
      %2239 = vmatpush.msra.mxu0 %v2213
      %2240 = vmatpush.msra.mxu0 %v2210
      %2241 = vmatpush.msra.mxu0 %v2207
      %2242 = vmatpush.msra.mxu0 %v2204
      %2243 = vmatpush.msra.mxu0 %v2201
      %2244 = vmatmul.f32.gmra.mxu0 %v2226
      %v2245 = vpop.f32.mrf.mxu0
      %v2246 = vadd.f32 0.0, %v2245
      %2247 = vdwg.mxu0
      %2248 = vmatpush.msra.mxu0 0.0
      %2249 = vmatpush.msra.mxu0 0.0
      %2250 = vmatpush.msra.mxu0 0.0
      %2251 = vmatpush.msra.mxu0 0.0
      %2252 = vmatpush.msra.mxu0 0.0
      %2253 = vmatpush.msra.mxu0 0.0
      %2254 = vmatpush.msra.mxu0 0.0
      %2255 = vmatpush.msra.mxu0 0.0
      %2256 = vmatpush.msra.mxu0 %v2223
      %2257 = vmatpush.msra.mxu0 %v2220
      %2258 = vmatpush.msra.mxu0 %v2217
      %2259 = vmatpush.msra.mxu0 %v2214
      %2260 = vmatpush.msra.mxu0 %v2211
      %2261 = vmatpush.msra.mxu0 %v2208
      %2262 = vmatpush.msra.mxu0 %v2205
      %2263 = vmatpush.msra.mxu0 %v2202
      %2264 = vmatmul.f32.gmra.mxu0 %v2226
      %v2265 = vpop.f32.mrf.mxu0
      %v2266 = vadd.f32 0.0, %v2265
      %2267 = vdwg.mxu0
      %2268 = vmatpush.msra.mxu0 0.0
      %2269 = vmatpush.msra.mxu0 0.0
      %2270 = vmatpush.msra.mxu0 0.0
      %2271 = vmatpush.msra.mxu0 0.0
      %2272 = vmatpush.msra.mxu0 0.0
      %2273 = vmatpush.msra.mxu0 0.0
      %2274 = vmatpush.msra.mxu0 0.0
      %2275 = vmatpush.msra.mxu0 0.0
      %2276 = vmatpush.msra.mxu0 %v2224
      %2277 = vmatpush.msra.mxu0 %v2221
      %2278 = vmatpush.msra.mxu0 %v2218
      %2279 = vmatpush.msra.mxu0 %v2215
      %2280 = vmatpush.msra.mxu0 %v2212
      %2281 = vmatpush.msra.mxu0 %v2209
      %2282 = vmatpush.msra.mxu0 %v2206
      %2283 = vmatpush.msra.mxu0 %v2203
      %2284 = vmatmul.f32.gmra.mxu0 %v2226
      %v2285 = vpop.f32.mrf.mxu0
      %v2286 = vadd.f32 0.0, %v2285
      %2287 = vdwg.mxu0
      %v2288 = vadd.f32 %v2198, %v2246
      %v2289 = vadd.f32 %v2199, %v2266
      %v2290 = vadd.f32 %v2200, %v2286
      %v2291 = vxor.u32 %v2288, 2147483648
      %v2292 = vmul.f32 %v2291, 1.442695
      %v2293 = vpow.pop %v2292
      %v2294 = vadd.f32 %v2293, 1.0
      %v2295 = vrcp.pop %v2294
      %v2296 = vmul.f32 %v2294, %v2295
      %v2297 = vsub.f32 1.0, %v2296
      %v2298 = vmul.f32 %v2295, %v2297
      %v2299 = vadd.f32 %v2295, %v2298
      %vm2300 = vweird.f32 %v2294
      %vm2301 = vweird.f32 %v2295
      %vm2302 = vmor %vm2300, %vm2301
      %v2303 = vsel %vm2302, %v2295, %v2299
      %v2304 = vand.u32 2147483647, %v2294
      %vm2305 = vcmp.eq.f32.partialorder %v2304, 8.507059e+37
      %v2306 = vand.u32 %v2294, 2147483648
      %v2307 = vor.u32 1.1754944e-38, %v2306
      %v2308 = vsel %vm2305, %v2307, %v2303
      %v2309 = vmul.f32 1.0, %v2308
      %v2310 = vtanh.pop %v2288
      %2311 = vrot.lane.b32.xlu0 %v2196, 96
      %v2312 = vpop.permute.xlu0 %2311
      %v2314 = vmul.f32 %v2309, %v2312
      %2316 = vrot.lane.b32.xlu0 %v2310, 64
      %v2317 = vpop.permute.xlu0 %2316
      %v2319 = vmul.f32 %v2309, %v2317
      %2321 = vrot.lane.b32.xlu0 %v2319, 32
      %v2322 = vpop.permute.xlu0 %2321
      %v2324 = vadd.f32 %v2314, %v2322
      %v2325 = vtanh.pop %v2324
      %2327 = vrot.lane.b32.xlu0 %v2325, 64
      %v2328 = vpop.permute.xlu0 %2327
      %v2330 = vmul.f32 %v2309, %v2328
      %v2331 = vld [vmem:[%s3] sm:$0xff]
      %v2332 = vld [vmem:[%s3 + $0x8] sm:$0xff]
      %v2333 = vld [vmem:[%s3 + $0x10] sm:$0xff]
      %v2334 = vld [vmem:[%s3 + $0x18] sm:$0xff]
      %v2335 = vld [vmem:[%s3 + $0x20] sm:$0xff]
      %v2336 = vld [vmem:[%s3 + $0x28] sm:$0xff]
      %v2337 = vld [vmem:[%s3 + $0x30] sm:$0xff]
      %v2338 = vld [vmem:[%s3 + $0x38] sm:$0xff]
      %2340 = vrot.lane.b32.xlu0 %v2330, 32
      %v2341 = vpop.permute.xlu0 %2340
      %v2342 = vsel %vm381, %v2341, 0
      %2344 = vmatpush.msra.mxu0 0.0
      %2345 = vmatpush.msra.mxu0 0.0
      %2346 = vmatpush.msra.mxu0 0.0
      %2347 = vmatpush.msra.mxu0 0.0
      %2348 = vmatpush.msra.mxu0 0.0
      %2349 = vmatpush.msra.mxu0 0.0
      %2350 = vmatpush.msra.mxu0 0.0
      %2351 = vmatpush.msra.mxu0 0.0
      %2352 = vmatpush.msra.mxu0 0.0
      %2353 = vmatpush.msra.mxu0 0.0
      %2354 = vmatpush.msra.mxu0 0.0
      %2355 = vmatpush.msra.mxu0 0.0
      %2356 = vmatpush.msra.mxu0 %v2337
      %2357 = vmatpush.msra.mxu0 %v2335
      %2358 = vmatpush.msra.mxu0 %v2333
      %2359 = vmatpush.msra.mxu0 %v2331
      %2360 = vmatmul.f32.gmra.mxu0 %v2342
      %v2361 = vpop.f32.mrf.mxu0
      %v2362 = vadd.f32 0.0, %v2361
      %2363 = vdwg.mxu0
      %2364 = vmatpush.msra.mxu0 0.0
      %2365 = vmatpush.msra.mxu0 0.0
      %2366 = vmatpush.msra.mxu0 0.0
      %2367 = vmatpush.msra.mxu0 0.0
      %2368 = vmatpush.msra.mxu0 0.0
      %2369 = vmatpush.msra.mxu0 0.0
      %2370 = vmatpush.msra.mxu0 0.0
      %2371 = vmatpush.msra.mxu0 0.0
      %2372 = vmatpush.msra.mxu0 0.0
      %2373 = vmatpush.msra.mxu0 0.0
      %2374 = vmatpush.msra.mxu0 0.0
      %2375 = vmatpush.msra.mxu0 0.0
      %2376 = vmatpush.msra.mxu0 %v2338
      %2377 = vmatpush.msra.mxu0 %v2336
      %2378 = vmatpush.msra.mxu0 %v2334
      %2379 = vmatpush.msra.mxu0 %v2332
      %2380 = vmatmul.f32.gmra.mxu0 %v2342
      %v2381 = vpop.f32.mrf.mxu0
      %v2382 = vadd.f32 0.0, %v2381
      %2383 = vdwg.mxu0
      %v2384 = vadd.f32 %v2289, %v2362
      %v2385 = vadd.f32 %v2290, %v2382
      %v2386 = vxor.u32 %v2384, 2147483648
      %v2387 = vmul.f32 %v2386, 1.442695
      %v2388 = vpow.pop %v2387
      %v2389 = vadd.f32 %v2388, 1.0
      %v2390 = vrcp.pop %v2389
      %v2391 = vmul.f32 %v2389, %v2390
      %v2392 = vsub.f32 1.0, %v2391
      %v2393 = vmul.f32 %v2390, %v2392
      %v2394 = vadd.f32 %v2390, %v2393
      %vm2395 = vweird.f32 %v2389
      %vm2396 = vweird.f32 %v2390
      %vm2397 = vmor %vm2395, %vm2396
      %v2398 = vsel %vm2397, %v2390, %v2394
      %v2399 = vand.u32 2147483647, %v2389
      %vm2400 = vcmp.eq.f32.partialorder %v2399, 8.507059e+37
      %v2401 = vand.u32 %v2389, 2147483648
      %v2402 = vor.u32 1.1754944e-38, %v2401
      %v2403 = vsel %vm2400, %v2402, %v2398
      %v2404 = vmul.f32 1.0, %v2403
      %v2405 = vtanh.pop %v2384
      %2406 = vrot.lane.b32.xlu0 %v2196, 64
      %v2407 = vpop.permute.xlu0 %2406
      %v2409 = vmul.f32 %v2404, %v2407
      %2411 = vrot.lane.b32.xlu0 %v2405, 64
      %v2412 = vpop.permute.xlu0 %2411
      %v2414 = vmul.f32 %v2404, %v2412
      %2416 = vrot.lane.b32.xlu0 %v2414, 32
      %v2417 = vpop.permute.xlu0 %2416
      %v2419 = vadd.f32 %v2409, %v2417
      %v2420 = vtanh.pop %v2419
      %2422 = vrot.lane.b32.xlu0 %v2420, 64
      %v2423 = vpop.permute.xlu0 %2422
      %v2425 = vmul.f32 %v2404, %v2423
      %v2426 = vxor.u32 %v2385, 2147483648
      %v2427 = vmul.f32 %v2426, 1.442695
      %v2428 = vpow.pop %v2427
      %v2429 = vadd.f32 %v2428, 1.0
      %v2430 = vrcp.pop %v2429
      %v2431 = vmul.f32 %v2429, %v2430
      %v2432 = vsub.f32 1.0, %v2431
      %v2433 = vmul.f32 %v2430, %v2432
      %v2434 = vadd.f32 %v2430, %v2433
      %vm2435 = vweird.f32 %v2429
      %vm2436 = vweird.f32 %v2430
      %vm2437 = vmor %vm2435, %vm2436
      %v2438 = vsel %vm2437, %v2430, %v2434
      %v2439 = vand.u32 2147483647, %v2429
      %vm2440 = vcmp.eq.f32.partialorder %v2439, 8.507059e+37
      %v2441 = vand.u32 %v2429, 2147483648
      %v2442 = vor.u32 1.1754944e-38, %v2441
      %v2443 = vsel %vm2440, %v2442, %v2438
      %v2444 = vmul.f32 1.0, %v2443
      %2445 = vrot.lane.b32.xlu0 %v2420, 96
      %v2446 = vpop.permute.xlu0 %2445
      %v2448 = vmul.f32 %v2444, %v2446
      %2450 = vrot.lane.b32.xlu0 %v2425, 32
      %v2451 = vpop.permute.xlu0 %2450
      %2454 = vrot.lane.b32.xlu0 %v2448, 32
      %v2455 = vpop.permute.xlu0 %2454
      %v2457 = vsel %vm381, %v2451, %v2455
      %s2458 = scalar_lea.vmem %s227, 56
      %2459 = vst.msk [vmem:[%s2458] sm:$0xff] %vm263, %v2457
      %2461 = vrot.lane.b32.xlu0 %v2425, 64
      %v2462 = vpop.permute.xlu0 %2461
      %2465 = vrot.lane.b32.xlu0 %v2324, 32
      %v2466 = vpop.permute.xlu0 %2465
      %2469 = vrot.lane.b32.xlu0 %v2419, 64
      %v2470 = vpop.permute.xlu0 %2469
      %v2472 = vsel %vm381, %v2341, %v2462
      %v2473 = vsel %vm263, %v2472, %v2466
      %v2474 = vsel %vm513, %v2473, %v2470
      %2475 = vst [vmem:[%s5] sm:$0xff] %v2474
      %s2476 = smul.u32 8, %s17
      %p2477 = scmp.lt.s32.totalorder %s2476, 15
      %s2478 = scalar_select %p2477, %s2476, 15
      %s2479 = smul.addr %s2478, 8
      %s2480 = scalar_lea.vmem %s4, %s2479
      // Predicated region
      $region41: #{sentinel_lstm2_seq.1} parent=35 // pred_check
        %p2481 = pneg %p124
      $region42: #{sentinel_lstm2_seq.1} parent=35 // pred_check_branch
        %2483 = sbr.rel (%p2481) target = $region44
      $region43: #{sentinel_lstm2_seq.1} parent=35 // pred_region
        %s2484 = smul.u32 8, %s17
      $region44: #{sentinel_lstm2_seq.1} parent=35 // pred_fallthru
        _
      // Predicated region
      $region45: #{sentinel_lstm2_seq.1} parent=35 // pred_check
        %p2485 = pneg %p145
      $region46: #{sentinel_lstm2_seq.1} parent=35 // pred_check_branch
        %2487 = sbr.rel (%p2485) target = $region48
      $region47: #{sentinel_lstm2_seq.1} parent=35 // pred_region
        _
      $region48: #{sentinel_lstm2_seq.1} parent=35 // pred_fallthru
        _
      // Predicated region
      $region49: #{sentinel_lstm2_seq.1} parent=35 // pred_check
        %p2488 = pneg %p145
      $region50: #{sentinel_lstm2_seq.1} parent=35 // pred_check_branch
        %2490 = sbr.rel (%p2488) target = $region52
      $region51: #{sentinel_lstm2_seq.1} parent=35 // pred_region
        _
      $region52: #{sentinel_lstm2_seq.1} parent=35 // pred_fallthru
        _
    $region36: #{sentinel_lstm2_seq.1} parent=5 // pred_fallthru
      _
    %p2491 = scmp.le.s32.totalorder 2, %s12
    // Predicated region
    $region53: #{sentinel_lstm2_seq.1} parent=5 // pred_check
      %p2492 = pneg %p2491
    $region54: #{sentinel_lstm2_seq.1} parent=5 // pred_check_branch
      %2494 = sbr.rel (%p2492) target = $region56
    $region55: #{sentinel_lstm2_seq.1} parent=5 // pred_region
      %s2495 = ssub.s32 %s12, 2
      // Predicated region
      $region57: #{sentinel_lstm2_seq.1} parent=55 // pred_check
        %p2496 = pneg %p130
      $region58: #{sentinel_lstm2_seq.1} parent=55 // pred_check_branch
        %2498 = sbr.rel (%p2496) target = $region60
      $region59: #{sentinel_lstm2_seq.1} parent=55 // pred_region
        %s2499 = smul.u32 8, %s18
        %p2500 = scmp.lt.s32.totalorder %s2499, 15
        %s2501 = scalar_select %p2500, %s2499, 15
        %s2502 = smul.addr %s2501, 8
        %s2503 = scalar_lea.vmem %s4, %s2502
      $region60: #{sentinel_lstm2_seq.1} parent=55 // pred_fallthru
        _
    $region56: #{sentinel_lstm2_seq.1} parent=5 // pred_fallthru
      _
  $region6: #{sentinel_lstm2_seq.1} parent=0 // loop_footer
    %s16 = sadd.s32 1, %s12
  $region7: #{sentinel_lstm2_seq.1} parent=0 // loop_footer_branch
    %11 = sbr.rel target = $region3
  $region8: #{sentinel_lstm2_seq.1} parent=0 // loop_exit
    _

</llo_original>
